<compile_context>
chip_gen: v7x
topology: tpu7x:2x2x1
jax: 0.10.0
libtpu: 0.0.40
codegen_flags: <defaults>
</compile_context>

<pallas_src>
import functools

import jax
import jax.numpy as jnp
from jax.experimental import pallas as pl
from jax.experimental.pallas import tpu as pltpu


# ----------------------------------------------------------------------------
# Shared helpers
# ----------------------------------------------------------------------------

def _im2col3x3(x_nhwc):
    """3x3 / pad=1 im2col: (N,H,W,C) -> (N,H,W,9*C), tap-major, channel-minor."""
    N, H, W, C = x_nhwc.shape
    xp = jnp.pad(x_nhwc, ((0, 0), (1, 1), (1, 1), (0, 0)))
    taps = [xp[:, ky:ky + H, kx:kx + W, :] for ky in range(3) for kx in range(3)]
    return jnp.concatenate(taps, axis=-1)


def _const_index_map(ndim):
    return lambda b: (0,) * ndim


def _default_batch_block(n):
    """Fold the whole batch into matmul M on 1-TC chips; split in two on v7x."""
    try:
        kind = jax.devices()[0].device_kind.lower()
        if ("v7" in kind or "7x" in kind) and n % 2 == 0:
            return n // 2
    except Exception:  # pragma: no cover - defensive
        pass
    return n


# ----------------------------------------------------------------------------
# Fused whole-network kernel
# ----------------------------------------------------------------------------

def _make_fused_kernel(NB, H, W, c0, block_meta, c_max, nc_pad):
    """block_meta: tuple of (c_in, c_out, stride) per depthwise-separable block.

    Ref order: patches, init_w, init_b, [dw_w, dw_b, pw_w, pw_b]*nblk,
               fc_w, fc_b, out, padded-activation scratch.
    """
    n_blocks = len(block_meta)

    def kernel(*refs):
        patches_ref = refs[0]
        init_w_ref, init_b_ref = refs[1], refs[2]
        fc_w_ref, fc_b_ref = refs[3 + 4 * n_blocks], refs[4 + 4 * n_blocks]
        o_ref = refs[5 + 4 * n_blocks]
        pad_ref = refs[6 + 4 * n_blocks]            # VMEM (NB, H+2, W+2, c_max) f32

        # ---- init conv: single K=27 bf16 MXU matmul + bias + ReLU -----------
        a = jnp.dot(patches_ref[...].astype(jnp.bfloat16), init_w_ref[...],
                    preferred_element_type=jnp.float32)      # (NB*H*W, c0)
        a = jnp.maximum(a + init_b_ref[...], 0.0)

        hh, ww = H, W
        for bi, (c_in, c_out, stride) in enumerate(block_meta):
            dw_w_ref, dw_b_ref, pw_w_ref, pw_b_ref = refs[3 + 4 * bi: 7 + 4 * bi]
            ho, wo = hh // stride, ww // stride

            # Stage activation into the zero-padded scratch (halo zeroed per
            # block because the spatial extent shrinks across blocks).
            pad_ref[:, 0:hh + 2, 0:ww + 2, 0:c_in] = jnp.zeros(
                (NB, hh + 2, ww + 2, c_in), jnp.float32)
            pad_ref[:, 1:hh + 1, 1:ww + 1, 0:c_in] = a.reshape(NB, hh, ww, c_in)

            # Depthwise 3x3 (BN folded): stride is folded into the window
            # reads via strided pl.ds, so only the kept outputs are computed.
            acc = jnp.zeros((NB, ho, wo, c_in), jnp.float32)
            for k in range(9):
                ky, kx = divmod(k, 3)
                if stride == 1:
                    win = pad_ref[:, ky:ky + ho, kx:kx + wo, 0:c_in]
                else:
                    win = pad_ref[:, pl.ds(ky, ho, stride=stride),
                                  pl.ds(kx, wo, stride=stride), 0:c_in]
                acc = acc + win * dw_w_ref[k]                 # (NB, ho, wo, c_in)
            acc = jnp.maximum(acc + dw_b_ref[...], 0.0)       # one whole-tile VPU op

            # Pointwise 1x1 conv on the MXU: bf16 inputs, f32 accumulation.
            a = jnp.dot(acc.reshape(NB * ho * wo, c_in).astype(jnp.bfloat16),
                        pw_w_ref[...], preferred_element_type=jnp.float32)
            a = jnp.maximum(a + pw_b_ref[...], 0.0)           # (NB*ho*wo, c_out)
            hh, ww = ho, wo

        # ---- head: AvgPool2d(2) (1/4 folded into fc_w) + Linear, lane-dense --
        c_last = block_meta[-1][1]
        pooled = a.reshape(NB, hh * ww, c_last).sum(axis=1)   # (NB, c_last)
        logits = jnp.dot(pooled.astype(jnp.bfloat16), fc_w_ref[...],
                         preferred_element_type=jnp.float32)  # (NB, nc_pad)
        o_ref[...] = (logits + fc_b_ref[...]).astype(o_ref.dtype).reshape(NB, 1, nc_pad)

    return kernel


# ----------------------------------------------------------------------------
# Forward pass (single pallas_call)
# ----------------------------------------------------------------------------

def mobilenet_forward(params, x_nchw, batch_block=None):
    x = jnp.transpose(x_nchw, (0, 2, 3, 1)).astype(jnp.float32)   # NCHW -> NHWC
    N, H, W, cin = x.shape
    NB = _default_batch_block(N) if batch_block is None else batch_block
    assert N % NB == 0 and NB >= 1

    # Wrapper-side im2col for the init conv (layout plumbing, tiny).
    patches = _im2col3x3(x).reshape(N * H * W, 9 * cin)            # (N*H*W, 27) f32

    c0 = params["init_w27"].shape[-1]
    num_classes = params["fc_w"].shape[-1]
    NC_PAD = 128
    assert num_classes <= NC_PAD

    # Head weights: fold AvgPool(2)'s 1/4 scale, pad classes to 128 lanes.
    fc_w = jnp.pad(params["fc_w"], ((0, 0), (0, NC_PAD - num_classes))) * 0.25
    fc_b = jnp.pad(params["fc_b"], ((0, 0), (0, NC_PAD - num_classes)))

    inputs = [patches, params["init_w27"], params["init_b"]]
    block_meta = []
    hh, ww = H, W
    for blk in params["blocks"]:
        c_in = blk["dw_w9"].shape[-1]
        c_out = blk["pw_w"].shape[-1]
        s = blk["stride"]
        block_meta.append((c_in, c_out, s))
        inputs += [blk["dw_w9"], blk["dw_b"], blk["pw_w"], blk["pw_b"]]
        hh //= s
        ww //= s
    assert hh == 2 and ww == 2 and block_meta[-1][1] == 1024, \
        "AvgPool2d(2)+Flatten+Linear(1024,nc) needs a final 2x2x1024 map"
    inputs += [fc_w, fc_b]

    c_max = max(m[0] for m in block_meta)
    kernel = _make_fused_kernel(NB, H, W, c0, tuple(block_meta), c_max, NC_PAD)

    in_specs = [pl.BlockSpec((NB * H * W, 9 * cin), lambda b: (b, 0))]
    in_specs += [pl.BlockSpec(arr.shape, _const_index_map(arr.ndim))
                 for arr in inputs[1:]]

    out = pl.pallas_call(
        kernel,
        out_shape=jax.ShapeDtypeStruct((N, 1, NC_PAD), jnp.float32),
        grid=(N // NB,),
        in_specs=in_specs,
        out_specs=pl.BlockSpec((NB, 1, NC_PAD), lambda b: (b, 0, 0)),
        scratch_shapes=[pltpu.VMEM((NB, H + 2, W + 2, c_max), jnp.float32)],
        compiler_params=pltpu.CompilerParams(
            dimension_semantics=("parallel",),
            vmem_limit_bytes=32 * 1024 * 1024),
    )(*inputs)
    return out.reshape(N, NC_PAD)[:, :num_classes]


# ----------------------------------------------------------------------------
# Pure-JAX reference (same folded params) for correctness checking
# ----------------------------------------------------------------------------

def mobilenet_reference(params, x_nchw):
    x = jnp.transpose(x_nchw, (0, 2, 3, 1)).astype(jnp.float32)
    patches = _im2col3x3(x)                                        # (N,H,W,27)
    a = jnp.einsum("nhwk,kc->nhwc", patches,
                   params["init_w27"].astype(jnp.float32), precision="highest")
    a = jnp.maximum(a + params["init_b"][0], 0.0)
    for blk in params["blocks"]:
        s = blk["stride"]
        hh, ww = a.shape[1], a.shape[2]
        apad = jnp.pad(a, ((0, 0), (1, 1), (1, 1), (0, 0)))
        dw = blk["dw_w9"].astype(jnp.float32)                      # (9, c)
        acc = None
        for k in range(9):
            ky, kx = divmod(k, 3)
            t = apad[:, ky:ky + hh, kx:kx + ww, :] * dw[k]
            acc = t if acc is None else acc + t
        acc = jnp.maximum(acc[:, ::s, ::s, :] + blk["dw_b"][0], 0.0)
        a = jnp.einsum("nhwc,cd->nhwd", acc, blk["pw_w"].astype(jnp.float32),
                       precision="highest")
        a = jnp.maximum(a + blk["pw_b"][0], 0.0)
    pooled = jnp.mean(a, axis=(1, 2))
    return (jnp.dot(pooled, params["fc_w"].astype(jnp.float32), precision="highest")
            + params["fc_b"][0])


# ----------------------------------------------------------------------------
# Parameter construction (deterministic synthetic weights; BN eval-mode folded)
# ----------------------------------------------------------------------------

def _bn_scale_bias(key, c):
    k1, k2 = jax.random.split(key)
    gamma = 1.0 + 0.1 * jax.random.normal(k1, (c,), jnp.float32)
    beta = 0.1 * jax.random.normal(k2, (c,), jnp.float32)
    running_mean = jnp.zeros((c,), jnp.float32)
    running_var = jnp.ones((c,), jnp.float32)
    scale = gamma / jnp.sqrt(running_var + 1e-5)
    bias = beta - running_mean * scale
    return scale, bias


def make_mobilenet_params(key, cfg, in_channels=32, num_classes=10):
    keys = iter(jax.random.split(key, 4 + 4 * len(cfg)))
    params = {}

    # init conv: 3 -> in_channels, 3x3 (BN scale folded), stored as (27, c0) bf16
    w = jax.random.normal(next(keys), (3, 3, 3, in_channels), jnp.float32) * (2.0 / 27.0) ** 0.5
    s, b = _bn_scale_bias(next(keys), in_channels)
    params["init_w27"] = (w * s).reshape(27, in_channels).astype(jnp.bfloat16)
    params["init_b"] = b.reshape(1, in_channels)

    blocks = []
    c_in = in_channels
    for entry in cfg:
        c_out = entry if isinstance(entry, int) else entry[0]
        stride = 1 if isinstance(entry, int) else entry[1]
        dw = jax.random.normal(next(keys), (3, 3, c_in), jnp.float32) * (2.0 / 9.0) ** 0.5
        dw_s, dw_b = _bn_scale_bias(next(keys), c_in)
        pw = jax.random.normal(next(keys), (c_in, c_out), jnp.float32) * (2.0 / c_in) ** 0.5
        pw_s, pw_b = _bn_scale_bias(next(keys), c_out)
        blocks.append({
            "stride": stride,
            "dw_w9": (dw * dw_s).reshape(9, c_in),                 # f32 (VPU path)
            "dw_b": dw_b.reshape(1, c_in),
            "pw_w": (pw * pw_s[None, :]).astype(jnp.bfloat16),     # bf16 (MXU path)
            "pw_b": pw_b.reshape(1, c_out),
        })
        c_in = c_out
    params["blocks"] = blocks

    assert c_in == 1024, "flatten after AvgPool2d(2) must yield 1024 features"
    params["fc_w"] = (jax.random.normal(next(keys), (1024, num_classes), jnp.float32)
                      / 32.0).astype(jnp.bfloat16)
    params["fc_b"] = (0.05 * jax.random.normal(next(keys), (num_classes,), jnp.float32)
                      ).reshape(1, num_classes)
    return params


# TODO(synk): training-mode BatchNorm statistic updates and the train/test
# utility hooks from the PyTorch module are host-side training plumbing and
# are not part of this inference (eval-mode, BN-folded) forward pass.

if __name__ == "__main__":
    # Small configuration consistent with the module's shape constraints:
    # 8x8 RGB input, two stride-2 blocks -> final (N, 2, 2, 1024) feature map
    # -> AvgPool2d(2) -> Flatten(1024) -> Linear(1024, num_classes).
    batch = 2
    input_size = 8
    num_classes = 10
    cfg = [64, (128, 2), (1024, 2)]

    key = jax.random.PRNGKey(0)
    k_params, k_input = jax.random.split(key)

    params = make_mobilenet_params(k_params, cfg, in_channels=32, num_classes=num_classes)
    x = jax.random.normal(k_input, (batch, 3, input_size, input_size), jnp.float32)

    fwd = jax.jit(functools.partial(mobilenet_forward, params))
    logits = jax.block_until_ready(fwd(x))
    assert logits.shape == (batch, num_classes), logits.shape

    ref = jax.block_until_ready(jax.jit(functools.partial(mobilenet_reference, params))(x))
    err = float(jnp.max(jnp.abs(logits - ref)))
    scale = float(jnp.max(jnp.abs(ref)))
    # bf16 MXU inputs with f32 accumulation vs. an f32 ("highest") reference.
    assert err <= 3e-2 * scale + 1e-2, (err, scale)

    print("KERNEL_OK")
</pallas_src>

<mosaic_0001>
module attributes {stable_mosaic.version = 11 : i64} {
  func.func @kernel(%arg0: i32, %arg1: memref<128x27xf32, #tpu.memory_space<vmem>>, %arg2: memref<27x32xbf16, #tpu.memory_space<vmem>>, %arg3: memref<1x32xf32, #tpu.memory_space<vmem>>, %arg4: memref<9x32xf32, #tpu.memory_space<vmem>>, %arg5: memref<1x32xf32, #tpu.memory_space<vmem>>, %arg6: memref<32x64xbf16, #tpu.memory_space<vmem>>, %arg7: memref<1x64xf32, #tpu.memory_space<vmem>>, %arg8: memref<9x64xf32, #tpu.memory_space<vmem>>, %arg9: memref<1x64xf32, #tpu.memory_space<vmem>>, %arg10: memref<64x128xbf16, #tpu.memory_space<vmem>>, %arg11: memref<1x128xf32, #tpu.memory_space<vmem>>, %arg12: memref<9x128xf32, #tpu.memory_space<vmem>>, %arg13: memref<1x128xf32, #tpu.memory_space<vmem>>, %arg14: memref<128x1024xbf16, #tpu.memory_space<vmem>>, %arg15: memref<1x1024xf32, #tpu.memory_space<vmem>>, %arg16: memref<1024x128xbf16, #tpu.memory_space<vmem>>, %arg17: memref<1x128xf32, #tpu.memory_space<vmem>>, %arg18: memref<2x1x128xf32, #tpu.memory_space<vmem>>, %arg19: memref<2x10x10x128xf32, #tpu.memory_space<vmem>>) attributes {dimension_semantics = [#tpu.dimension_semantics<parallel>], iteration_bounds = array<i64: 1>, scalar_prefetch = 0 : i64, scratch_operands = 1 : i64, tpu.core_type = #tpu.core_type<tc>, window_params = [{transform_indices = @transform_0, window_bounds = array<i64: 128, 27>}, {pipeline_mode = #tpu.pipeline_mode<synchronous>, transform_indices = @transform_1, window_bounds = array<i64: 27, 32>}, {pipeline_mode = #tpu.pipeline_mode<synchronous>, transform_indices = @transform_2, window_bounds = array<i64: 1, 32>}, {pipeline_mode = #tpu.pipeline_mode<synchronous>, transform_indices = @transform_3, window_bounds = array<i64: 9, 32>}, {pipeline_mode = #tpu.pipeline_mode<synchronous>, transform_indices = @transform_4, window_bounds = array<i64: 1, 32>}, {pipeline_mode = #tpu.pipeline_mode<synchronous>, transform_indices = @transform_5, window_bounds = array<i64: 32, 64>}, {pipeline_mode = #tpu.pipeline_mode<synchronous>, transform_indices = @transform_6, window_bounds = array<i64: 1, 64>}, {pipeline_mode = #tpu.pipeline_mode<synchronous>, transform_indices = @transform_7, window_bounds = array<i64: 9, 64>}, {pipeline_mode = #tpu.pipeline_mode<synchronous>, transform_indices = @transform_8, window_bounds = array<i64: 1, 64>}, {pipeline_mode = #tpu.pipeline_mode<synchronous>, transform_indices = @transform_9, window_bounds = array<i64: 64, 128>}, {pipeline_mode = #tpu.pipeline_mode<synchronous>, transform_indices = @transform_10, window_bounds = array<i64: 1, 128>}, {pipeline_mode = #tpu.pipeline_mode<synchronous>, transform_indices = @transform_11, window_bounds = array<i64: 9, 128>}, {pipeline_mode = #tpu.pipeline_mode<synchronous>, transform_indices = @transform_12, window_bounds = array<i64: 1, 128>}, {pipeline_mode = #tpu.pipeline_mode<synchronous>, transform_indices = @transform_13, window_bounds = array<i64: 128, 1024>}, {pipeline_mode = #tpu.pipeline_mode<synchronous>, transform_indices = @transform_14, window_bounds = array<i64: 1, 1024>}, {pipeline_mode = #tpu.pipeline_mode<synchronous>, transform_indices = @transform_15, window_bounds = array<i64: 1024, 128>}, {pipeline_mode = #tpu.pipeline_mode<synchronous>, transform_indices = @transform_16, window_bounds = array<i64: 1, 128>}, {transform_indices = @transform_17, window_bounds = array<i64: 2, 1, 128>}]} {
    %c0 = arith.constant 0 : index
    %c0_0 = arith.constant 0 : index
    %0 = vector.load %arg1[%c0, %c0_0] : memref<128x27xf32, #tpu.memory_space<vmem>>, vector<128x27xf32>
    %1 = arith.truncf %0 : vector<128x27xf32> to vector<128x27xbf16>
    %c0_1 = arith.constant 0 : index
    %c0_2 = arith.constant 0 : index
    %2 = vector.load %arg2[%c0_1, %c0_2] : memref<27x32xbf16, #tpu.memory_space<vmem>>, vector<27x32xbf16>
    %cst = arith.constant dense<0.000000e+00> : vector<128x32xf32>
    %3 = tpu.matmul %1, %2, %cst {dimension_numbers = #tpu.dot_dimension_numbers<[1], [0], [0], [1], [0, 0, 1, 1], [], []>} : vector<128x27xbf16>, vector<27x32xbf16>, vector<128x32xf32> -> vector<128x32xf32>
    %c0_3 = arith.constant 0 : index
    %c0_4 = arith.constant 0 : index
    %4 = vector.load %arg3[%c0_3, %c0_4] : memref<1x32xf32, #tpu.memory_space<vmem>>, vector<1x32xf32>
    %5 = vector.broadcast %4 : vector<1x32xf32> to vector<128x32xf32>
    %6 = arith.addf %3, %5 : vector<128x32xf32>
    %cst_5 = arith.constant 0.000000e+00 : f32
    %7 = vector.broadcast %cst_5 : f32 to vector<128x32xf32>
    %8 = arith.maximumf %6, %7 : vector<128x32xf32>
    %cst_6 = arith.constant 0.000000e+00 : f32
    %9 = vector.broadcast %cst_6 : f32 to vector<2x10x10x32xf32>
    %c0_7 = arith.constant 0 : index
    %c0_8 = arith.constant 0 : index
    %c0_9 = arith.constant 0 : index
    %c0_10 = arith.constant 0 : index
    %10 = vector.load %arg19[%c0_7, %c0_8, %c0_9, %c0_10] : memref<2x10x10x128xf32, #tpu.memory_space<vmem>>, vector<2x10x10x32xf32>
    tpu.vector_store %arg19[%c0_7, %c0_8, %c0_9, %c0_10], %9 {strides = array<i32>} : memref<2x10x10x128xf32, #tpu.memory_space<vmem>>, vector<2x10x10x32xf32>,
    %11 = vector.shape_cast %8 : vector<128x32xf32> to vector<2x8x8x32xf32>
    %c0_11 = arith.constant 0 : index
    %c1 = arith.constant 1 : index
    %c1_12 = arith.constant 1 : index
    %c0_13 = arith.constant 0 : index
    %12 = vector.load %arg19[%c0_11, %c1, %c1_12, %c0_13] : memref<2x10x10x128xf32, #tpu.memory_space<vmem>>, vector<2x8x8x32xf32>
    tpu.vector_store %arg19[%c0_11, %c1, %c1_12, %c0_13], %11 {strides = array<i32>} : memref<2x10x10x128xf32, #tpu.memory_space<vmem>>, vector<2x8x8x32xf32>,
    %cst_14 = arith.constant 0.000000e+00 : f32
    %13 = vector.broadcast %cst_14 : f32 to vector<2x8x8x32xf32>
    %c0_15 = arith.constant 0 : index
    %c0_16 = arith.constant 0 : index
    %c0_17 = arith.constant 0 : index
    %c0_18 = arith.constant 0 : index
    %14 = vector.load %arg19[%c0_15, %c0_16, %c0_17, %c0_18] : memref<2x10x10x128xf32, #tpu.memory_space<vmem>>, vector<2x8x8x32xf32>
    %c0_19 = arith.constant 0 : index
    %c0_20 = arith.constant 0 : index
    %15 = vector.load %arg4[%c0_19, %c0_20] : memref<9x32xf32, #tpu.memory_space<vmem>>, vector<1x32xf32>
    %16 = vector.shape_cast %15 : vector<1x32xf32> to vector<32xf32>
    %17 = vector.shape_cast %16 : vector<32xf32> to vector<1x1x1x32xf32>
    %18 = vector.broadcast %17 : vector<1x1x1x32xf32> to vector<2x8x8x32xf32>
    %19 = arith.mulf %14, %18 : vector<2x8x8x32xf32>
    %20 = arith.addf %13, %19 : vector<2x8x8x32xf32>
    %c0_21 = arith.constant 0 : index
    %c0_22 = arith.constant 0 : index
    %c1_23 = arith.constant 1 : index
    %c0_24 = arith.constant 0 : index
    %21 = vector.load %arg19[%c0_21, %c0_22, %c1_23, %c0_24] : memref<2x10x10x128xf32, #tpu.memory_space<vmem>>, vector<2x8x8x32xf32>
    %c1_25 = arith.constant 1 : index
    %c0_26 = arith.constant 0 : index
    %22 = vector.load %arg4[%c1_25, %c0_26] : memref<9x32xf32, #tpu.memory_space<vmem>>, vector<1x32xf32>
    %23 = vector.shape_cast %22 : vector<1x32xf32> to vector<32xf32>
    %24 = vector.shape_cast %23 : vector<32xf32> to vector<1x1x1x32xf32>
    %25 = vector.broadcast %24 : vector<1x1x1x32xf32> to vector<2x8x8x32xf32>
    %26 = arith.mulf %21, %25 : vector<2x8x8x32xf32>
    %27 = arith.addf %20, %26 : vector<2x8x8x32xf32>
    %c0_27 = arith.constant 0 : index
    %c0_28 = arith.constant 0 : index
    %c2 = arith.constant 2 : index
    %c0_29 = arith.constant 0 : index
    %28 = vector.load %arg19[%c0_27, %c0_28, %c2, %c0_29] : memref<2x10x10x128xf32, #tpu.memory_space<vmem>>, vector<2x8x8x32xf32>
    %c2_30 = arith.constant 2 : index
    %c0_31 = arith.constant 0 : index
    %29 = vector.load %arg4[%c2_30, %c0_31] : memref<9x32xf32, #tpu.memory_space<vmem>>, vector<1x32xf32>
    %30 = vector.shape_cast %29 : vector<1x32xf32> to vector<32xf32>
    %31 = vector.shape_cast %30 : vector<32xf32> to vector<1x1x1x32xf32>
    %32 = vector.broadcast %31 : vector<1x1x1x32xf32> to vector<2x8x8x32xf32>
    %33 = arith.mulf %28, %32 : vector<2x8x8x32xf32>
    %34 = arith.addf %27, %33 : vector<2x8x8x32xf32>
    %c0_32 = arith.constant 0 : index
    %c1_33 = arith.constant 1 : index
    %c0_34 = arith.constant 0 : index
    %c0_35 = arith.constant 0 : index
    %35 = vector.load %arg19[%c0_32, %c1_33, %c0_34, %c0_35] : memref<2x10x10x128xf32, #tpu.memory_space<vmem>>, vector<2x8x8x32xf32>
    %c3 = arith.constant 3 : index
    %c0_36 = arith.constant 0 : index
    %36 = vector.load %arg4[%c3, %c0_36] : memref<9x32xf32, #tpu.memory_space<vmem>>, vector<1x32xf32>
    %37 = vector.shape_cast %36 : vector<1x32xf32> to vector<32xf32>
    %38 = vector.shape_cast %37 : vector<32xf32> to vector<1x1x1x32xf32>
    %39 = vector.broadcast %38 : vector<1x1x1x32xf32> to vector<2x8x8x32xf32>
    %40 = arith.mulf %35, %39 : vector<2x8x8x32xf32>
    %41 = arith.addf %34, %40 : vector<2x8x8x32xf32>
    %c0_37 = arith.constant 0 : index
    %c1_38 = arith.constant 1 : index
    %c1_39 = arith.constant 1 : index
    %c0_40 = arith.constant 0 : index
    %42 = vector.load %arg19[%c0_37, %c1_38, %c1_39, %c0_40] : memref<2x10x10x128xf32, #tpu.memory_space<vmem>>, vector<2x8x8x32xf32>
    %c4 = arith.constant 4 : index
    %c0_41 = arith.constant 0 : index
    %43 = vector.load %arg4[%c4, %c0_41] : memref<9x32xf32, #tpu.memory_space<vmem>>, vector<1x32xf32>
    %44 = vector.shape_cast %43 : vector<1x32xf32> to vector<32xf32>
    %45 = vector.shape_cast %44 : vector<32xf32> to vector<1x1x1x32xf32>
    %46 = vector.broadcast %45 : vector<1x1x1x32xf32> to vector<2x8x8x32xf32>
    %47 = arith.mulf %42, %46 : vector<2x8x8x32xf32>
    %48 = arith.addf %41, %47 : vector<2x8x8x32xf32>
    %c0_42 = arith.constant 0 : index
    %c1_43 = arith.constant 1 : index
    %c2_44 = arith.constant 2 : index
    %c0_45 = arith.constant 0 : index
    %49 = vector.load %arg19[%c0_42, %c1_43, %c2_44, %c0_45] : memref<2x10x10x128xf32, #tpu.memory_space<vmem>>, vector<2x8x8x32xf32>
    %c5 = arith.constant 5 : index
    %c0_46 = arith.constant 0 : index
    %50 = vector.load %arg4[%c5, %c0_46] : memref<9x32xf32, #tpu.memory_space<vmem>>, vector<1x32xf32>
    %51 = vector.shape_cast %50 : vector<1x32xf32> to vector<32xf32>
    %52 = vector.shape_cast %51 : vector<32xf32> to vector<1x1x1x32xf32>
    %53 = vector.broadcast %52 : vector<1x1x1x32xf32> to vector<2x8x8x32xf32>
    %54 = arith.mulf %49, %53 : vector<2x8x8x32xf32>
    %55 = arith.addf %48, %54 : vector<2x8x8x32xf32>
    %c0_47 = arith.constant 0 : index
    %c2_48 = arith.constant 2 : index
    %c0_49 = arith.constant 0 : index
    %c0_50 = arith.constant 0 : index
    %56 = vector.load %arg19[%c0_47, %c2_48, %c0_49, %c0_50] : memref<2x10x10x128xf32, #tpu.memory_space<vmem>>, vector<2x8x8x32xf32>
    %c6 = arith.constant 6 : index
    %c0_51 = arith.constant 0 : index
    %57 = vector.load %arg4[%c6, %c0_51] : memref<9x32xf32, #tpu.memory_space<vmem>>, vector<1x32xf32>
    %58 = vector.shape_cast %57 : vector<1x32xf32> to vector<32xf32>
    %59 = vector.shape_cast %58 : vector<32xf32> to vector<1x1x1x32xf32>
    %60 = vector.broadcast %59 : vector<1x1x1x32xf32> to vector<2x8x8x32xf32>
    %61 = arith.mulf %56, %60 : vector<2x8x8x32xf32>
    %62 = arith.addf %55, %61 : vector<2x8x8x32xf32>
    %c0_52 = arith.constant 0 : index
    %c2_53 = arith.constant 2 : index
    %c1_54 = arith.constant 1 : index
    %c0_55 = arith.constant 0 : index
    %63 = vector.load %arg19[%c0_52, %c2_53, %c1_54, %c0_55] : memref<2x10x10x128xf32, #tpu.memory_space<vmem>>, vector<2x8x8x32xf32>
    %c7 = arith.constant 7 : index
    %c0_56 = arith.constant 0 : index
    %64 = vector.load %arg4[%c7, %c0_56] : memref<9x32xf32, #tpu.memory_space<vmem>>, vector<1x32xf32>
    %65 = vector.shape_cast %64 : vector<1x32xf32> to vector<32xf32>
    %66 = vector.shape_cast %65 : vector<32xf32> to vector<1x1x1x32xf32>
    %67 = vector.broadcast %66 : vector<1x1x1x32xf32> to vector<2x8x8x32xf32>
    %68 = arith.mulf %63, %67 : vector<2x8x8x32xf32>
    %69 = arith.addf %62, %68 : vector<2x8x8x32xf32>
    %c0_57 = arith.constant 0 : index
    %c2_58 = arith.constant 2 : index
    %c2_59 = arith.constant 2 : index
    %c0_60 = arith.constant 0 : index
    %70 = vector.load %arg19[%c0_57, %c2_58, %c2_59, %c0_60] : memref<2x10x10x128xf32, #tpu.memory_space<vmem>>, vector<2x8x8x32xf32>
    %c8 = arith.constant 8 : index
    %c0_61 = arith.constant 0 : index
    %71 = vector.load %arg4[%c8, %c0_61] : memref<9x32xf32, #tpu.memory_space<vmem>>, vector<1x32xf32>
    %72 = vector.shape_cast %71 : vector<1x32xf32> to vector<32xf32>
    %73 = vector.shape_cast %72 : vector<32xf32> to vector<1x1x1x32xf32>
    %74 = vector.broadcast %73 : vector<1x1x1x32xf32> to vector<2x8x8x32xf32>
    %75 = arith.mulf %70, %74 : vector<2x8x8x32xf32>
    %76 = arith.addf %69, %75 : vector<2x8x8x32xf32>
    %c0_62 = arith.constant 0 : index
    %c0_63 = arith.constant 0 : index
    %77 = vector.load %arg5[%c0_62, %c0_63] : memref<1x32xf32, #tpu.memory_space<vmem>>, vector<1x32xf32>
    %78 = vector.shape_cast %77 : vector<1x32xf32> to vector<1x1x1x32xf32>
    %79 = vector.broadcast %78 : vector<1x1x1x32xf32> to vector<2x8x8x32xf32>
    %80 = arith.addf %76, %79 : vector<2x8x8x32xf32>
    %cst_64 = arith.constant 0.000000e+00 : f32
    %81 = vector.broadcast %cst_64 : f32 to vector<2x8x8x32xf32>
    %82 = arith.maximumf %80, %81 : vector<2x8x8x32xf32>
    %83 = vector.shape_cast %82 : vector<2x8x8x32xf32> to vector<128x32xf32>
    %84 = arith.truncf %83 : vector<128x32xf32> to vector<128x32xbf16>
    %c0_65 = arith.constant 0 : index
    %c0_66 = arith.constant 0 : index
    %85 = vector.load %arg6[%c0_65, %c0_66] : memref<32x64xbf16, #tpu.memory_space<vmem>>, vector<32x64xbf16>
    %cst_67 = arith.constant dense<0.000000e+00> : vector<128x64xf32>
    %86 = tpu.matmul %84, %85, %cst_67 {dimension_numbers = #tpu.dot_dimension_numbers<[1], [0], [0], [1], [0, 0, 1, 1], [], []>} : vector<128x32xbf16>, vector<32x64xbf16>, vector<128x64xf32> -> vector<128x64xf32>
    %c0_68 = arith.constant 0 : index
    %c0_69 = arith.constant 0 : index
    %87 = vector.load %arg7[%c0_68, %c0_69] : memref<1x64xf32, #tpu.memory_space<vmem>>, vector<1x64xf32>
    %88 = vector.broadcast %87 : vector<1x64xf32> to vector<128x64xf32>
    %89 = arith.addf %86, %88 : vector<128x64xf32>
    %cst_70 = arith.constant 0.000000e+00 : f32
    %90 = vector.broadcast %cst_70 : f32 to vector<128x64xf32>
    %91 = arith.maximumf %89, %90 : vector<128x64xf32>
    %cst_71 = arith.constant 0.000000e+00 : f32
    %92 = vector.broadcast %cst_71 : f32 to vector<2x10x10x64xf32>
    %c0_72 = arith.constant 0 : index
    %c0_73 = arith.constant 0 : index
    %c0_74 = arith.constant 0 : index
    %c0_75 = arith.constant 0 : index
    %93 = vector.load %arg19[%c0_72, %c0_73, %c0_74, %c0_75] : memref<2x10x10x128xf32, #tpu.memory_space<vmem>>, vector<2x10x10x64xf32>
    tpu.vector_store %arg19[%c0_72, %c0_73, %c0_74, %c0_75], %92 {strides = array<i32>} : memref<2x10x10x128xf32, #tpu.memory_space<vmem>>, vector<2x10x10x64xf32>,
    %94 = vector.shape_cast %91 : vector<128x64xf32> to vector<2x8x8x64xf32>
    %c0_76 = arith.constant 0 : index
    %c1_77 = arith.constant 1 : index
    %c1_78 = arith.constant 1 : index
    %c0_79 = arith.constant 0 : index
    %95 = vector.load %arg19[%c0_76, %c1_77, %c1_78, %c0_79] : memref<2x10x10x128xf32, #tpu.memory_space<vmem>>, vector<2x8x8x64xf32>
    tpu.vector_store %arg19[%c0_76, %c1_77, %c1_78, %c0_79], %94 {strides = array<i32>} : memref<2x10x10x128xf32, #tpu.memory_space<vmem>>, vector<2x8x8x64xf32>,
    %cst_80 = arith.constant 0.000000e+00 : f32
    %96 = vector.broadcast %cst_80 : f32 to vector<2x4x4x64xf32>
    %c0_81 = arith.constant 0 : index
    %c0_82 = arith.constant 0 : index
    %c0_83 = arith.constant 0 : index
    %c0_84 = arith.constant 0 : index
    %97 = tpu.strided_load %arg19[%c0_81, %c0_82, %c0_83, %c0_84] {strides = array<i32: 1, 2, 2, 1>} : memref<2x10x10x128xf32, #tpu.memory_space<vmem>>, vector<2x4x4x64xf32>
    %c0_85 = arith.constant 0 : index
    %c0_86 = arith.constant 0 : index
    %98 = vector.load %arg8[%c0_85, %c0_86] : memref<9x64xf32, #tpu.memory_space<vmem>>, vector<1x64xf32>
    %99 = vector.shape_cast %98 : vector<1x64xf32> to vector<64xf32>
    %100 = vector.shape_cast %99 : vector<64xf32> to vector<1x1x1x64xf32>
    %101 = vector.broadcast %100 : vector<1x1x1x64xf32> to vector<2x4x4x64xf32>
    %102 = arith.mulf %97, %101 : vector<2x4x4x64xf32>
    %103 = arith.addf %96, %102 : vector<2x4x4x64xf32>
    %c0_87 = arith.constant 0 : index
    %c0_88 = arith.constant 0 : index
    %c1_89 = arith.constant 1 : index
    %c0_90 = arith.constant 0 : index
    %104 = tpu.strided_load %arg19[%c0_87, %c0_88, %c1_89, %c0_90] {strides = array<i32: 1, 2, 2, 1>} : memref<2x10x10x128xf32, #tpu.memory_space<vmem>>, vector<2x4x4x64xf32>
    %c1_91 = arith.constant 1 : index
    %c0_92 = arith.constant 0 : index
    %105 = vector.load %arg8[%c1_91, %c0_92] : memref<9x64xf32, #tpu.memory_space<vmem>>, vector<1x64xf32>
    %106 = vector.shape_cast %105 : vector<1x64xf32> to vector<64xf32>
    %107 = vector.shape_cast %106 : vector<64xf32> to vector<1x1x1x64xf32>
    %108 = vector.broadcast %107 : vector<1x1x1x64xf32> to vector<2x4x4x64xf32>
    %109 = arith.mulf %104, %108 : vector<2x4x4x64xf32>
    %110 = arith.addf %103, %109 : vector<2x4x4x64xf32>
    %c0_93 = arith.constant 0 : index
    %c0_94 = arith.constant 0 : index
    %c2_95 = arith.constant 2 : index
    %c0_96 = arith.constant 0 : index
    %111 = tpu.strided_load %arg19[%c0_93, %c0_94, %c2_95, %c0_96] {strides = array<i32: 1, 2, 2, 1>} : memref<2x10x10x128xf32, #tpu.memory_space<vmem>>, vector<2x4x4x64xf32>
    %c2_97 = arith.constant 2 : index
    %c0_98 = arith.constant 0 : index
    %112 = vector.load %arg8[%c2_97, %c0_98] : memref<9x64xf32, #tpu.memory_space<vmem>>, vector<1x64xf32>
    %113 = vector.shape_cast %112 : vector<1x64xf32> to vector<64xf32>
    %114 = vector.shape_cast %113 : vector<64xf32> to vector<1x1x1x64xf32>
    %115 = vector.broadcast %114 : vector<1x1x1x64xf32> to vector<2x4x4x64xf32>
    %116 = arith.mulf %111, %115 : vector<2x4x4x64xf32>
    %117 = arith.addf %110, %116 : vector<2x4x4x64xf32>
    %c0_99 = arith.constant 0 : index
    %c1_100 = arith.constant 1 : index
    %c0_101 = arith.constant 0 : index
    %c0_102 = arith.constant 0 : index
    %118 = tpu.strided_load %arg19[%c0_99, %c1_100, %c0_101, %c0_102] {strides = array<i32: 1, 2, 2, 1>} : memref<2x10x10x128xf32, #tpu.memory_space<vmem>>, vector<2x4x4x64xf32>
    %c3_103 = arith.constant 3 : index
    %c0_104 = arith.constant 0 : index
    %119 = vector.load %arg8[%c3_103, %c0_104] : memref<9x64xf32, #tpu.memory_space<vmem>>, vector<1x64xf32>
    %120 = vector.shape_cast %119 : vector<1x64xf32> to vector<64xf32>
    %121 = vector.shape_cast %120 : vector<64xf32> to vector<1x1x1x64xf32>
    %122 = vector.broadcast %121 : vector<1x1x1x64xf32> to vector<2x4x4x64xf32>
    %123 = arith.mulf %118, %122 : vector<2x4x4x64xf32>
    %124 = arith.addf %117, %123 : vector<2x4x4x64xf32>
    %c0_105 = arith.constant 0 : index
    %c1_106 = arith.constant 1 : index
    %c1_107 = arith.constant 1 : index
    %c0_108 = arith.constant 0 : index
    %125 = tpu.strided_load %arg19[%c0_105, %c1_106, %c1_107, %c0_108] {strides = array<i32: 1, 2, 2, 1>} : memref<2x10x10x128xf32, #tpu.memory_space<vmem>>, vector<2x4x4x64xf32>
    %c4_109 = arith.constant 4 : index
    %c0_110 = arith.constant 0 : index
    %126 = vector.load %arg8[%c4_109, %c0_110] : memref<9x64xf32, #tpu.memory_space<vmem>>, vector<1x64xf32>
    %127 = vector.shape_cast %126 : vector<1x64xf32> to vector<64xf32>
    %128 = vector.shape_cast %127 : vector<64xf32> to vector<1x1x1x64xf32>
    %129 = vector.broadcast %128 : vector<1x1x1x64xf32> to vector<2x4x4x64xf32>
    %130 = arith.mulf %125, %129 : vector<2x4x4x64xf32>
    %131 = arith.addf %124, %130 : vector<2x4x4x64xf32>
    %c0_111 = arith.constant 0 : index
    %c1_112 = arith.constant 1 : index
    %c2_113 = arith.constant 2 : index
    %c0_114 = arith.constant 0 : index
    %132 = tpu.strided_load %arg19[%c0_111, %c1_112, %c2_113, %c0_114] {strides = array<i32: 1, 2, 2, 1>} : memref<2x10x10x128xf32, #tpu.memory_space<vmem>>, vector<2x4x4x64xf32>
    %c5_115 = arith.constant 5 : index
    %c0_116 = arith.constant 0 : index
    %133 = vector.load %arg8[%c5_115, %c0_116] : memref<9x64xf32, #tpu.memory_space<vmem>>, vector<1x64xf32>
    %134 = vector.shape_cast %133 : vector<1x64xf32> to vector<64xf32>
    %135 = vector.shape_cast %134 : vector<64xf32> to vector<1x1x1x64xf32>
    %136 = vector.broadcast %135 : vector<1x1x1x64xf32> to vector<2x4x4x64xf32>
    %137 = arith.mulf %132, %136 : vector<2x4x4x64xf32>
    %138 = arith.addf %131, %137 : vector<2x4x4x64xf32>
    %c0_117 = arith.constant 0 : index
    %c2_118 = arith.constant 2 : index
    %c0_119 = arith.constant 0 : index
    %c0_120 = arith.constant 0 : index
    %139 = tpu.strided_load %arg19[%c0_117, %c2_118, %c0_119, %c0_120] {strides = array<i32: 1, 2, 2, 1>} : memref<2x10x10x128xf32, #tpu.memory_space<vmem>>, vector<2x4x4x64xf32>
    %c6_121 = arith.constant 6 : index
    %c0_122 = arith.constant 0 : index
    %140 = vector.load %arg8[%c6_121, %c0_122] : memref<9x64xf32, #tpu.memory_space<vmem>>, vector<1x64xf32>
    %141 = vector.shape_cast %140 : vector<1x64xf32> to vector<64xf32>
    %142 = vector.shape_cast %141 : vector<64xf32> to vector<1x1x1x64xf32>
    %143 = vector.broadcast %142 : vector<1x1x1x64xf32> to vector<2x4x4x64xf32>
    %144 = arith.mulf %139, %143 : vector<2x4x4x64xf32>
    %145 = arith.addf %138, %144 : vector<2x4x4x64xf32>
    %c0_123 = arith.constant 0 : index
    %c2_124 = arith.constant 2 : index
    %c1_125 = arith.constant 1 : index
    %c0_126 = arith.constant 0 : index
    %146 = tpu.strided_load %arg19[%c0_123, %c2_124, %c1_125, %c0_126] {strides = array<i32: 1, 2, 2, 1>} : memref<2x10x10x128xf32, #tpu.memory_space<vmem>>, vector<2x4x4x64xf32>
    %c7_127 = arith.constant 7 : index
    %c0_128 = arith.constant 0 : index
    %147 = vector.load %arg8[%c7_127, %c0_128] : memref<9x64xf32, #tpu.memory_space<vmem>>, vector<1x64xf32>
    %148 = vector.shape_cast %147 : vector<1x64xf32> to vector<64xf32>
    %149 = vector.shape_cast %148 : vector<64xf32> to vector<1x1x1x64xf32>
    %150 = vector.broadcast %149 : vector<1x1x1x64xf32> to vector<2x4x4x64xf32>
    %151 = arith.mulf %146, %150 : vector<2x4x4x64xf32>
    %152 = arith.addf %145, %151 : vector<2x4x4x64xf32>
    %c0_129 = arith.constant 0 : index
    %c2_130 = arith.constant 2 : index
    %c2_131 = arith.constant 2 : index
    %c0_132 = arith.constant 0 : index
    %153 = tpu.strided_load %arg19[%c0_129, %c2_130, %c2_131, %c0_132] {strides = array<i32: 1, 2, 2, 1>} : memref<2x10x10x128xf32, #tpu.memory_space<vmem>>, vector<2x4x4x64xf32>
    %c8_133 = arith.constant 8 : index
    %c0_134 = arith.constant 0 : index
    %154 = vector.load %arg8[%c8_133, %c0_134] : memref<9x64xf32, #tpu.memory_space<vmem>>, vector<1x64xf32>
    %155 = vector.shape_cast %154 : vector<1x64xf32> to vector<64xf32>
    %156 = vector.shape_cast %155 : vector<64xf32> to vector<1x1x1x64xf32>
    %157 = vector.broadcast %156 : vector<1x1x1x64xf32> to vector<2x4x4x64xf32>
    %158 = arith.mulf %153, %157 : vector<2x4x4x64xf32>
    %159 = arith.addf %152, %158 : vector<2x4x4x64xf32>
    %c0_135 = arith.constant 0 : index
    %c0_136 = arith.constant 0 : index
    %160 = vector.load %arg9[%c0_135, %c0_136] : memref<1x64xf32, #tpu.memory_space<vmem>>, vector<1x64xf32>
    %161 = vector.shape_cast %160 : vector<1x64xf32> to vector<1x1x1x64xf32>
    %162 = vector.broadcast %161 : vector<1x1x1x64xf32> to vector<2x4x4x64xf32>
    %163 = arith.addf %159, %162 : vector<2x4x4x64xf32>
    %cst_137 = arith.constant 0.000000e+00 : f32
    %164 = vector.broadcast %cst_137 : f32 to vector<2x4x4x64xf32>
    %165 = arith.maximumf %163, %164 : vector<2x4x4x64xf32>
    %166 = vector.shape_cast %165 : vector<2x4x4x64xf32> to vector<32x64xf32>
    %167 = arith.truncf %166 : vector<32x64xf32> to vector<32x64xbf16>
    %c0_138 = arith.constant 0 : index
    %c0_139 = arith.constant 0 : index
    %168 = vector.load %arg10[%c0_138, %c0_139] : memref<64x128xbf16, #tpu.memory_space<vmem>>, vector<64x128xbf16>
    %cst_140 = arith.constant dense<0.000000e+00> : vector<32x128xf32>
    %169 = tpu.matmul %167, %168, %cst_140 {dimension_numbers = #tpu.dot_dimension_numbers<[1], [0], [0], [1], [0, 0, 1, 1], [], []>} : vector<32x64xbf16>, vector<64x128xbf16>, vector<32x128xf32> -> vector<32x128xf32>
    %c0_141 = arith.constant 0 : index
    %c0_142 = arith.constant 0 : index
    %170 = vector.load %arg11[%c0_141, %c0_142] : memref<1x128xf32, #tpu.memory_space<vmem>>, vector<1x128xf32>
    %171 = vector.broadcast %170 : vector<1x128xf32> to vector<32x128xf32>
    %172 = arith.addf %169, %171 : vector<32x128xf32>
    %cst_143 = arith.constant 0.000000e+00 : f32
    %173 = vector.broadcast %cst_143 : f32 to vector<32x128xf32>
    %174 = arith.maximumf %172, %173 : vector<32x128xf32>
    %cst_144 = arith.constant 0.000000e+00 : f32
    %175 = vector.broadcast %cst_144 : f32 to vector<2x6x6x128xf32>
    %c0_145 = arith.constant 0 : index
    %c0_146 = arith.constant 0 : index
    %c0_147 = arith.constant 0 : index
    %c0_148 = arith.constant 0 : index
    %176 = vector.load %arg19[%c0_145, %c0_146, %c0_147, %c0_148] : memref<2x10x10x128xf32, #tpu.memory_space<vmem>>, vector<2x6x6x128xf32>
    tpu.vector_store %arg19[%c0_145, %c0_146, %c0_147, %c0_148], %175 {strides = array<i32>} : memref<2x10x10x128xf32, #tpu.memory_space<vmem>>, vector<2x6x6x128xf32>,
    %177 = vector.shape_cast %174 : vector<32x128xf32> to vector<2x4x4x128xf32>
    %c0_149 = arith.constant 0 : index
    %c1_150 = arith.constant 1 : index
    %c1_151 = arith.constant 1 : index
    %c0_152 = arith.constant 0 : index
    %178 = vector.load %arg19[%c0_149, %c1_150, %c1_151, %c0_152] : memref<2x10x10x128xf32, #tpu.memory_space<vmem>>, vector<2x4x4x128xf32>
    tpu.vector_store %arg19[%c0_149, %c1_150, %c1_151, %c0_152], %177 {strides = array<i32>} : memref<2x10x10x128xf32, #tpu.memory_space<vmem>>, vector<2x4x4x128xf32>,
    %cst_153 = arith.constant 0.000000e+00 : f32
    %179 = vector.broadcast %cst_153 : f32 to vector<2x2x2x128xf32>
    %c0_154 = arith.constant 0 : index
    %c0_155 = arith.constant 0 : index
    %c0_156 = arith.constant 0 : index
    %c0_157 = arith.constant 0 : index
    %180 = tpu.strided_load %arg19[%c0_154, %c0_155, %c0_156, %c0_157] {strides = array<i32: 1, 2, 2, 1>} : memref<2x10x10x128xf32, #tpu.memory_space<vmem>>, vector<2x2x2x128xf32>
    %c0_158 = arith.constant 0 : index
    %c0_159 = arith.constant 0 : index
    %181 = vector.load %arg12[%c0_158, %c0_159] : memref<9x128xf32, #tpu.memory_space<vmem>>, vector<1x128xf32>
    %182 = vector.shape_cast %181 : vector<1x128xf32> to vector<128xf32>
    %183 = vector.shape_cast %182 : vector<128xf32> to vector<1x1x1x128xf32>
    %184 = vector.broadcast %183 : vector<1x1x1x128xf32> to vector<2x2x2x128xf32>
    %185 = arith.mulf %180, %184 : vector<2x2x2x128xf32>
    %186 = arith.addf %179, %185 : vector<2x2x2x128xf32>
    %c0_160 = arith.constant 0 : index
    %c0_161 = arith.constant 0 : index
    %c1_162 = arith.constant 1 : index
    %c0_163 = arith.constant 0 : index
    %187 = tpu.strided_load %arg19[%c0_160, %c0_161, %c1_162, %c0_163] {strides = array<i32: 1, 2, 2, 1>} : memref<2x10x10x128xf32, #tpu.memory_space<vmem>>, vector<2x2x2x128xf32>
    %c1_164 = arith.constant 1 : index
    %c0_165 = arith.constant 0 : index
    %188 = vector.load %arg12[%c1_164, %c0_165] : memref<9x128xf32, #tpu.memory_space<vmem>>, vector<1x128xf32>
    %189 = vector.shape_cast %188 : vector<1x128xf32> to vector<128xf32>
    %190 = vector.shape_cast %189 : vector<128xf32> to vector<1x1x1x128xf32>
    %191 = vector.broadcast %190 : vector<1x1x1x128xf32> to vector<2x2x2x128xf32>
    %192 = arith.mulf %187, %191 : vector<2x2x2x128xf32>
    %193 = arith.addf %186, %192 : vector<2x2x2x128xf32>
    %c0_166 = arith.constant 0 : index
    %c0_167 = arith.constant 0 : index
    %c2_168 = arith.constant 2 : index
    %c0_169 = arith.constant 0 : index
    %194 = tpu.strided_load %arg19[%c0_166, %c0_167, %c2_168, %c0_169] {strides = array<i32: 1, 2, 2, 1>} : memref<2x10x10x128xf32, #tpu.memory_space<vmem>>, vector<2x2x2x128xf32>
    %c2_170 = arith.constant 2 : index
    %c0_171 = arith.constant 0 : index
    %195 = vector.load %arg12[%c2_170, %c0_171] : memref<9x128xf32, #tpu.memory_space<vmem>>, vector<1x128xf32>
    %196 = vector.shape_cast %195 : vector<1x128xf32> to vector<128xf32>
    %197 = vector.shape_cast %196 : vector<128xf32> to vector<1x1x1x128xf32>
    %198 = vector.broadcast %197 : vector<1x1x1x128xf32> to vector<2x2x2x128xf32>
    %199 = arith.mulf %194, %198 : vector<2x2x2x128xf32>
    %200 = arith.addf %193, %199 : vector<2x2x2x128xf32>
    %c0_172 = arith.constant 0 : index
    %c1_173 = arith.constant 1 : index
    %c0_174 = arith.constant 0 : index
    %c0_175 = arith.constant 0 : index
    %201 = tpu.strided_load %arg19[%c0_172, %c1_173, %c0_174, %c0_175] {strides = array<i32: 1, 2, 2, 1>} : memref<2x10x10x128xf32, #tpu.memory_space<vmem>>, vector<2x2x2x128xf32>
    %c3_176 = arith.constant 3 : index
    %c0_177 = arith.constant 0 : index
    %202 = vector.load %arg12[%c3_176, %c0_177] : memref<9x128xf32, #tpu.memory_space<vmem>>, vector<1x128xf32>
    %203 = vector.shape_cast %202 : vector<1x128xf32> to vector<128xf32>
    %204 = vector.shape_cast %203 : vector<128xf32> to vector<1x1x1x128xf32>
    %205 = vector.broadcast %204 : vector<1x1x1x128xf32> to vector<2x2x2x128xf32>
    %206 = arith.mulf %201, %205 : vector<2x2x2x128xf32>
    %207 = arith.addf %200, %206 : vector<2x2x2x128xf32>
    %c0_178 = arith.constant 0 : index
    %c1_179 = arith.constant 1 : index
    %c1_180 = arith.constant 1 : index
    %c0_181 = arith.constant 0 : index
    %208 = tpu.strided_load %arg19[%c0_178, %c1_179, %c1_180, %c0_181] {strides = array<i32: 1, 2, 2, 1>} : memref<2x10x10x128xf32, #tpu.memory_space<vmem>>, vector<2x2x2x128xf32>
    %c4_182 = arith.constant 4 : index
    %c0_183 = arith.constant 0 : index
    %209 = vector.load %arg12[%c4_182, %c0_183] : memref<9x128xf32, #tpu.memory_space<vmem>>, vector<1x128xf32>
    %210 = vector.shape_cast %209 : vector<1x128xf32> to vector<128xf32>
    %211 = vector.shape_cast %210 : vector<128xf32> to vector<1x1x1x128xf32>
    %212 = vector.broadcast %211 : vector<1x1x1x128xf32> to vector<2x2x2x128xf32>
    %213 = arith.mulf %208, %212 : vector<2x2x2x128xf32>
    %214 = arith.addf %207, %213 : vector<2x2x2x128xf32>
    %c0_184 = arith.constant 0 : index
    %c1_185 = arith.constant 1 : index
    %c2_186 = arith.constant 2 : index
    %c0_187 = arith.constant 0 : index
    %215 = tpu.strided_load %arg19[%c0_184, %c1_185, %c2_186, %c0_187] {strides = array<i32: 1, 2, 2, 1>} : memref<2x10x10x128xf32, #tpu.memory_space<vmem>>, vector<2x2x2x128xf32>
    %c5_188 = arith.constant 5 : index
    %c0_189 = arith.constant 0 : index
    %216 = vector.load %arg12[%c5_188, %c0_189] : memref<9x128xf32, #tpu.memory_space<vmem>>, vector<1x128xf32>
    %217 = vector.shape_cast %216 : vector<1x128xf32> to vector<128xf32>
    %218 = vector.shape_cast %217 : vector<128xf32> to vector<1x1x1x128xf32>
    %219 = vector.broadcast %218 : vector<1x1x1x128xf32> to vector<2x2x2x128xf32>
    %220 = arith.mulf %215, %219 : vector<2x2x2x128xf32>
    %221 = arith.addf %214, %220 : vector<2x2x2x128xf32>
    %c0_190 = arith.constant 0 : index
    %c2_191 = arith.constant 2 : index
    %c0_192 = arith.constant 0 : index
    %c0_193 = arith.constant 0 : index
    %222 = tpu.strided_load %arg19[%c0_190, %c2_191, %c0_192, %c0_193] {strides = array<i32: 1, 2, 2, 1>} : memref<2x10x10x128xf32, #tpu.memory_space<vmem>>, vector<2x2x2x128xf32>
    %c6_194 = arith.constant 6 : index
    %c0_195 = arith.constant 0 : index
    %223 = vector.load %arg12[%c6_194, %c0_195] : memref<9x128xf32, #tpu.memory_space<vmem>>, vector<1x128xf32>
    %224 = vector.shape_cast %223 : vector<1x128xf32> to vector<128xf32>
    %225 = vector.shape_cast %224 : vector<128xf32> to vector<1x1x1x128xf32>
    %226 = vector.broadcast %225 : vector<1x1x1x128xf32> to vector<2x2x2x128xf32>
    %227 = arith.mulf %222, %226 : vector<2x2x2x128xf32>
    %228 = arith.addf %221, %227 : vector<2x2x2x128xf32>
    %c0_196 = arith.constant 0 : index
    %c2_197 = arith.constant 2 : index
    %c1_198 = arith.constant 1 : index
    %c0_199 = arith.constant 0 : index
    %229 = tpu.strided_load %arg19[%c0_196, %c2_197, %c1_198, %c0_199] {strides = array<i32: 1, 2, 2, 1>} : memref<2x10x10x128xf32, #tpu.memory_space<vmem>>, vector<2x2x2x128xf32>
    %c7_200 = arith.constant 7 : index
    %c0_201 = arith.constant 0 : index
    %230 = vector.load %arg12[%c7_200, %c0_201] : memref<9x128xf32, #tpu.memory_space<vmem>>, vector<1x128xf32>
    %231 = vector.shape_cast %230 : vector<1x128xf32> to vector<128xf32>
    %232 = vector.shape_cast %231 : vector<128xf32> to vector<1x1x1x128xf32>
    %233 = vector.broadcast %232 : vector<1x1x1x128xf32> to vector<2x2x2x128xf32>
    %234 = arith.mulf %229, %233 : vector<2x2x2x128xf32>
    %235 = arith.addf %228, %234 : vector<2x2x2x128xf32>
    %c0_202 = arith.constant 0 : index
    %c2_203 = arith.constant 2 : index
    %c2_204 = arith.constant 2 : index
    %c0_205 = arith.constant 0 : index
    %236 = tpu.strided_load %arg19[%c0_202, %c2_203, %c2_204, %c0_205] {strides = array<i32: 1, 2, 2, 1>} : memref<2x10x10x128xf32, #tpu.memory_space<vmem>>, vector<2x2x2x128xf32>
    %c8_206 = arith.constant 8 : index
    %c0_207 = arith.constant 0 : index
    %237 = vector.load %arg12[%c8_206, %c0_207] : memref<9x128xf32, #tpu.memory_space<vmem>>, vector<1x128xf32>
    %238 = vector.shape_cast %237 : vector<1x128xf32> to vector<128xf32>
    %239 = vector.shape_cast %238 : vector<128xf32> to vector<1x1x1x128xf32>
    %240 = vector.broadcast %239 : vector<1x1x1x128xf32> to vector<2x2x2x128xf32>
    %241 = arith.mulf %236, %240 : vector<2x2x2x128xf32>
    %242 = arith.addf %235, %241 : vector<2x2x2x128xf32>
    %c0_208 = arith.constant 0 : index
    %c0_209 = arith.constant 0 : index
    %243 = vector.load %arg13[%c0_208, %c0_209] : memref<1x128xf32, #tpu.memory_space<vmem>>, vector<1x128xf32>
    %244 = vector.shape_cast %243 : vector<1x128xf32> to vector<1x1x1x128xf32>
    %245 = vector.broadcast %244 : vector<1x1x1x128xf32> to vector<2x2x2x128xf32>
    %246 = arith.addf %242, %245 : vector<2x2x2x128xf32>
    %cst_210 = arith.constant 0.000000e+00 : f32
    %247 = vector.broadcast %cst_210 : f32 to vector<2x2x2x128xf32>
    %248 = arith.maximumf %246, %247 : vector<2x2x2x128xf32>
    %249 = vector.shape_cast %248 : vector<2x2x2x128xf32> to vector<8x128xf32>
    %250 = arith.truncf %249 : vector<8x128xf32> to vector<8x128xbf16>
    %c0_211 = arith.constant 0 : index
    %c0_212 = arith.constant 0 : index
    %251 = vector.load %arg14[%c0_211, %c0_212] : memref<128x1024xbf16, #tpu.memory_space<vmem>>, vector<128x1024xbf16>
    %cst_213 = arith.constant dense<0.000000e+00> : vector<8x1024xf32>
    %252 = tpu.matmul %250, %251, %cst_213 {dimension_numbers = #tpu.dot_dimension_numbers<[1], [0], [0], [1], [0, 0, 1, 1], [], []>} : vector<8x128xbf16>, vector<128x1024xbf16>, vector<8x1024xf32> -> vector<8x1024xf32>
    %c0_214 = arith.constant 0 : index
    %c0_215 = arith.constant 0 : index
    %253 = vector.load %arg15[%c0_214, %c0_215] : memref<1x1024xf32, #tpu.memory_space<vmem>>, vector<1x1024xf32>
    %254 = vector.broadcast %253 : vector<1x1024xf32> to vector<8x1024xf32>
    %255 = arith.addf %252, %254 : vector<8x1024xf32>
    %cst_216 = arith.constant 0.000000e+00 : f32
    %256 = vector.broadcast %cst_216 : f32 to vector<8x1024xf32>
    %257 = arith.maximumf %255, %256 : vector<8x1024xf32>
    %258 = vector.shape_cast %257 : vector<8x1024xf32> to vector<2x4x1024xf32>
    %cst_217 = arith.constant dense<0.000000e+00> : vector<2x1024xf32>
    %259 = vector.multi_reduction <add>, %258, %cst_217 [1] : vector<2x4x1024xf32> to vector<2x1024xf32>
    %260 = arith.truncf %259 : vector<2x1024xf32> to vector<2x1024xbf16>
    %c0_218 = arith.constant 0 : index
    %c0_219 = arith.constant 0 : index
    %261 = vector.load %arg16[%c0_218, %c0_219] : memref<1024x128xbf16, #tpu.memory_space<vmem>>, vector<1024x128xbf16>
    %cst_220 = arith.constant dense<0.000000e+00> : vector<2x128xf32>
    %262 = tpu.matmul %260, %261, %cst_220 {dimension_numbers = #tpu.dot_dimension_numbers<[1], [0], [0], [1], [0, 0, 1, 1], [], []>} : vector<2x1024xbf16>, vector<1024x128xbf16>, vector<2x128xf32> -> vector<2x128xf32>
    %c0_221 = arith.constant 0 : index
    %c0_222 = arith.constant 0 : index
    %263 = vector.load %arg17[%c0_221, %c0_222] : memref<1x128xf32, #tpu.memory_space<vmem>>, vector<1x128xf32>
    %264 = vector.broadcast %263 : vector<1x128xf32> to vector<2x128xf32>
    %265 = arith.addf %262, %264 : vector<2x128xf32>
    %266 = vector.shape_cast %265 : vector<2x128xf32> to vector<2x1x128xf32>
    %c0_223 = arith.constant 0 : index
    %c0_224 = arith.constant 0 : index
    %c0_225 = arith.constant 0 : index
    %267 = vector.load %arg18[%c0_223, %c0_224, %c0_225] : memref<2x1x128xf32, #tpu.memory_space<vmem>>, vector<2x1x128xf32>
    tpu.vector_store %arg18[%c0_223, %c0_224, %c0_225], %266 {strides = array<i32>} : memref<2x1x128xf32, #tpu.memory_space<vmem>>, vector<2x1x128xf32>,
    return
  }
  func.func @transform_0(%arg0: i32) -> (i32, i32) {
    %c0_i32 = arith.constant 0 : i32
    %c0_i32_0 = arith.constant 0 : i32
    return %arg0, %c0_i32 : i32, i32
  }
  func.func @transform_1(%arg0: i32) -> (i32, i32) {
    %c0_i32 = arith.constant 0 : i32
    %c0_i32_0 = arith.constant 0 : i32
    %c0_i32_1 = arith.constant 0 : i32
    return %c0_i32, %c0_i32_0 : i32, i32
  }
  func.func @transform_2(%arg0: i32) -> (i32, i32) {
    %c0_i32 = arith.constant 0 : i32
    %c0_i32_0 = arith.constant 0 : i32
    %c0_i32_1 = arith.constant 0 : i32
    return %c0_i32, %c0_i32_0 : i32, i32
  }
  func.func @transform_3(%arg0: i32) -> (i32, i32) {
    %c0_i32 = arith.constant 0 : i32
    %c0_i32_0 = arith.constant 0 : i32
    %c0_i32_1 = arith.constant 0 : i32
    return %c0_i32, %c0_i32_0 : i32, i32
  }
  func.func @transform_4(%arg0: i32) -> (i32, i32) {
    %c0_i32 = arith.constant 0 : i32
    %c0_i32_0 = arith.constant 0 : i32
    %c0_i32_1 = arith.constant 0 : i32
    return %c0_i32, %c0_i32_0 : i32, i32
  }
  func.func @transform_5(%arg0: i32) -> (i32, i32) {
    %c0_i32 = arith.constant 0 : i32
    %c0_i32_0 = arith.constant 0 : i32
    %c0_i32_1 = arith.constant 0 : i32
    return %c0_i32, %c0_i32_0 : i32, i32
  }
  func.func @transform_6(%arg0: i32) -> (i32, i32) {
    %c0_i32 = arith.constant 0 : i32
    %c0_i32_0 = arith.constant 0 : i32
    %c0_i32_1 = arith.constant 0 : i32
    return %c0_i32, %c0_i32_0 : i32, i32
  }
  func.func @transform_7(%arg0: i32) -> (i32, i32) {
    %c0_i32 = arith.constant 0 : i32
    %c0_i32_0 = arith.constant 0 : i32
    %c0_i32_1 = arith.constant 0 : i32
    return %c0_i32, %c0_i32_0 : i32, i32
  }
  func.func @transform_8(%arg0: i32) -> (i32, i32) {
    %c0_i32 = arith.constant 0 : i32
    %c0_i32_0 = arith.constant 0 : i32
    %c0_i32_1 = arith.constant 0 : i32
    return %c0_i32, %c0_i32_0 : i32, i32
  }
  func.func @transform_9(%arg0: i32) -> (i32, i32) {
    %c0_i32 = arith.constant 0 : i32
    %c0_i32_0 = arith.constant 0 : i32
    %c0_i32_1 = arith.constant 0 : i32
    return %c0_i32, %c0_i32_0 : i32, i32
  }
  func.func @transform_10(%arg0: i32) -> (i32, i32) {
    %c0_i32 = arith.constant 0 : i32
    %c0_i32_0 = arith.constant 0 : i32
    %c0_i32_1 = arith.constant 0 : i32
    return %c0_i32, %c0_i32_0 : i32, i32
  }
  func.func @transform_11(%arg0: i32) -> (i32, i32) {
    %c0_i32 = arith.constant 0 : i32
    %c0_i32_0 = arith.constant 0 : i32
    %c0_i32_1 = arith.constant 0 : i32
    return %c0_i32, %c0_i32_0 : i32, i32
  }
  func.func @transform_12(%arg0: i32) -> (i32, i32) {
    %c0_i32 = arith.constant 0 : i32
    %c0_i32_0 = arith.constant 0 : i32
    %c0_i32_1 = arith.constant 0 : i32
    return %c0_i32, %c0_i32_0 : i32, i32
  }
  func.func @transform_13(%arg0: i32) -> (i32, i32) {
    %c0_i32 = arith.constant 0 : i32
    %c0_i32_0 = arith.constant 0 : i32
    %c0_i32_1 = arith.constant 0 : i32
    return %c0_i32, %c0_i32_0 : i32, i32
  }
  func.func @transform_14(%arg0: i32) -> (i32, i32) {
    %c0_i32 = arith.constant 0 : i32
    %c0_i32_0 = arith.constant 0 : i32
    %c0_i32_1 = arith.constant 0 : i32
    return %c0_i32, %c0_i32_0 : i32, i32
  }
  func.func @transform_15(%arg0: i32) -> (i32, i32) {
    %c0_i32 = arith.constant 0 : i32
    %c0_i32_0 = arith.constant 0 : i32
    %c0_i32_1 = arith.constant 0 : i32
    return %c0_i32, %c0_i32_0 : i32, i32
  }
  func.func @transform_16(%arg0: i32) -> (i32, i32) {
    %c0_i32 = arith.constant 0 : i32
    %c0_i32_0 = arith.constant 0 : i32
    %c0_i32_1 = arith.constant 0 : i32
    return %c0_i32, %c0_i32_0 : i32, i32
  }
  func.func @transform_17(%arg0: i32) -> (i32, i32, i32) {
    %c0_i32 = arith.constant 0 : i32
    %c0_i32_0 = arith.constant 0 : i32
    %c0_i32_1 = arith.constant 0 : i32
    return %arg0, %c0_i32, %c0_i32_0 : i32, i32, i32
  }
}

</mosaic_0001>

<llo_original>
// kernel: mobilenet_forward.1
$region0: #{mobilenet_forward.1}
  #allocation0 [shape = 'u32[]', space=smem, size = 0x4, offset = 0x4, fixed_abs, tag = 'smem constant byte address 0x4 - core index']
  #allocation1 [shape = 'u32[144,128]{1,0:T(1,128)}', space=vmem, size = 0x12000, scoped, tag = 'internal scratch']
  #allocation2 [shape = 'f32[2,10,10,128]{3,2,1,0:T(8,128)}', space=vmem, size = 0x28000, scoped, tag = 'scratch operand']
  %s0 = inlined_call_operand.vmem [shape: f32[128,27], index: 0, kind: input, shape index: {}]
  %s1 = inlined_call_operand.vmem [shape: bf16[27,32], index: 1, kind: input, shape index: {}]
  %s2 = inlined_call_operand.vmem [shape: f32[1,32], index: 2, kind: input, shape index: {}]
  %s3 = inlined_call_operand.vmem [shape: f32[9,32], index: 3, kind: input, shape index: {}]
  %s4 = inlined_call_operand.vmem [shape: f32[1,32], index: 4, kind: input, shape index: {}]
  %s5 = inlined_call_operand.vmem [shape: bf16[32,64], index: 5, kind: input, shape index: {}]
  %s6 = inlined_call_operand.vmem [shape: f32[1,64], index: 6, kind: input, shape index: {}]
  %s7 = inlined_call_operand.vmem [shape: f32[9,64], index: 7, kind: input, shape index: {}]
  %s8 = inlined_call_operand.vmem [shape: f32[1,64], index: 8, kind: input, shape index: {}]
  %s9 = inlined_call_operand.vmem [shape: bf16[64,128], index: 9, kind: input, shape index: {}]
  %s10 = inlined_call_operand.vmem [shape: f32[1,128], index: 10, kind: input, shape index: {}]
  %s11 = inlined_call_operand.vmem [shape: f32[9,128], index: 11, kind: input, shape index: {}]
  %s12 = inlined_call_operand.vmem [shape: f32[1,128], index: 12, kind: input, shape index: {}]
  %s13 = inlined_call_operand.vmem [shape: bf16[128,1024], index: 13, kind: input, shape index: {}]
  %s14 = inlined_call_operand.vmem [shape: f32[1,1024], index: 14, kind: input, shape index: {}]
  %s15 = inlined_call_operand.vmem [shape: bf16[1024,128], index: 15, kind: input, shape index: {}]
  %s16 = inlined_call_operand.vmem [shape: f32[1,128], index: 16, kind: input, shape index: {}]
  %s17 = inlined_call_operand.hbm [shape: f32[2,1,128], index: 17, kind: output, shape index: {}]
  %s18 = sld [smem:[#allocation0]]
  $region78: #{mobilenet_forward.1} parent=0
    _
  %s20 = ssub.s32 1, %s18
  %s21 = scalar_select 0, %s20, %s18
  $region1: #{mobilenet_forward.1} parent=0
    #allocation3 [shape = 'u8[1024]{0}', space=vmem, size = 0x400, scoped, tag = 'output window, operand 0, single buffered']
    #allocation4 [shape = 's32[1]{0}', space=sflag, size = 0x4, scoped, tag = 'scoped memory for mobilenet_forward.1']
    %22 = vsyncpa [#allocation4], 0
    // Predicated region
    $region2: #{mobilenet_forward.1} parent=1 // pred_check
      _
    $region3: #{mobilenet_forward.1} parent=1 // pred_check_branch
      %24 = sbr.rel (0) target = $region5
    $region4: #{mobilenet_forward.1} parent=1 // pred_region
      _
    $region5: #{mobilenet_forward.1} parent=1 // pred_fallthru
      _
    // Predicated region
    $region6: #{mobilenet_forward.1} parent=1 // pred_check
      _
    $region7: #{mobilenet_forward.1} parent=1 // pred_check_branch
      %26 = sbr.rel (0) target = $region9
    $region8: #{mobilenet_forward.1} parent=1 // pred_region
      _
    $region9: #{mobilenet_forward.1} parent=1 // pred_fallthru
      _
    // Predicated region
    $region10: #{mobilenet_forward.1} parent=1 // pred_check
      _
    $region11: #{mobilenet_forward.1} parent=1 // pred_check_branch
      %28 = sbr.rel (0) target = $region13
    $region12: #{mobilenet_forward.1} parent=1 // pred_region
      _
    $region13: #{mobilenet_forward.1} parent=1 // pred_fallthru
      _
    // Predicated region
    $region14: #{mobilenet_forward.1} parent=1 // pred_check
      _
    $region15: #{mobilenet_forward.1} parent=1 // pred_check_branch
      %30 = sbr.rel (0) target = $region17
    $region16: #{mobilenet_forward.1} parent=1 // pred_region
      _
    $region17: #{mobilenet_forward.1} parent=1 // pred_fallthru
      _
    // Predicated region
    $region18: #{mobilenet_forward.1} parent=1 // pred_check
      _
    $region19: #{mobilenet_forward.1} parent=1 // pred_check_branch
      %32 = sbr.rel (0) target = $region21
    $region20: #{mobilenet_forward.1} parent=1 // pred_region
      _
    $region21: #{mobilenet_forward.1} parent=1 // pred_fallthru
      _
    // Predicated region
    $region22: #{mobilenet_forward.1} parent=1 // pred_check
      _
    $region23: #{mobilenet_forward.1} parent=1 // pred_check_branch
      %34 = sbr.rel (0) target = $region25
    $region24: #{mobilenet_forward.1} parent=1 // pred_region
      _
    $region25: #{mobilenet_forward.1} parent=1 // pred_fallthru
      _
    // Predicated region
    $region26: #{mobilenet_forward.1} parent=1 // pred_check
      _
    $region27: #{mobilenet_forward.1} parent=1 // pred_check_branch
      %36 = sbr.rel (0) target = $region29
    $region28: #{mobilenet_forward.1} parent=1 // pred_region
      _
    $region29: #{mobilenet_forward.1} parent=1 // pred_fallthru
      _
    // Predicated region
    $region30: #{mobilenet_forward.1} parent=1 // pred_check
      _
    $region31: #{mobilenet_forward.1} parent=1 // pred_check_branch
      %38 = sbr.rel (0) target = $region33
    $region32: #{mobilenet_forward.1} parent=1 // pred_region
      _
    $region33: #{mobilenet_forward.1} parent=1 // pred_fallthru
      _
    // Predicated region
    $region34: #{mobilenet_forward.1} parent=1 // pred_check
      _
    $region35: #{mobilenet_forward.1} parent=1 // pred_check_branch
      %40 = sbr.rel (0) target = $region37
    $region36: #{mobilenet_forward.1} parent=1 // pred_region
      _
    $region37: #{mobilenet_forward.1} parent=1 // pred_fallthru
      _
    // Predicated region
    $region38: #{mobilenet_forward.1} parent=1 // pred_check
      _
    $region39: #{mobilenet_forward.1} parent=1 // pred_check_branch
      %42 = sbr.rel (0) target = $region41
    $region40: #{mobilenet_forward.1} parent=1 // pred_region
      _
    $region41: #{mobilenet_forward.1} parent=1 // pred_fallthru
      _
    // Predicated region
    $region42: #{mobilenet_forward.1} parent=1 // pred_check
      _
    $region43: #{mobilenet_forward.1} parent=1 // pred_check_branch
      %44 = sbr.rel (0) target = $region45
    $region44: #{mobilenet_forward.1} parent=1 // pred_region
      _
    $region45: #{mobilenet_forward.1} parent=1 // pred_fallthru
      _
    // Predicated region
    $region46: #{mobilenet_forward.1} parent=1 // pred_check
      _
    $region47: #{mobilenet_forward.1} parent=1 // pred_check_branch
      %46 = sbr.rel (0) target = $region49
    $region48: #{mobilenet_forward.1} parent=1 // pred_region
      _
    $region49: #{mobilenet_forward.1} parent=1 // pred_fallthru
      _
    // Predicated region
    $region50: #{mobilenet_forward.1} parent=1 // pred_check
      _
    $region51: #{mobilenet_forward.1} parent=1 // pred_check_branch
      %48 = sbr.rel (0) target = $region53
    $region52: #{mobilenet_forward.1} parent=1 // pred_region
      _
    $region53: #{mobilenet_forward.1} parent=1 // pred_fallthru
      _
    // Predicated region
    $region54: #{mobilenet_forward.1} parent=1 // pred_check
      _
    $region55: #{mobilenet_forward.1} parent=1 // pred_check_branch
      %50 = sbr.rel (0) target = $region57
    $region56: #{mobilenet_forward.1} parent=1 // pred_region
      _
    $region57: #{mobilenet_forward.1} parent=1 // pred_fallthru
      _
    // Predicated region
    $region58: #{mobilenet_forward.1} parent=1 // pred_check
      _
    $region59: #{mobilenet_forward.1} parent=1 // pred_check_branch
      %52 = sbr.rel (0) target = $region61
    $region60: #{mobilenet_forward.1} parent=1 // pred_region
      _
    $region61: #{mobilenet_forward.1} parent=1 // pred_fallthru
      _
    // Predicated region
    $region62: #{mobilenet_forward.1} parent=1 // pred_check
      _
    $region63: #{mobilenet_forward.1} parent=1 // pred_check_branch
      %54 = sbr.rel (0) target = $region65
    $region64: #{mobilenet_forward.1} parent=1 // pred_region
      _
    $region65: #{mobilenet_forward.1} parent=1 // pred_fallthru
      _
    // Predicated region
    $region66: #{mobilenet_forward.1} parent=1 // pred_check
      _
    $region67: #{mobilenet_forward.1} parent=1 // pred_check_branch
      %56 = sbr.rel (0) target = $region69
    $region68: #{mobilenet_forward.1} parent=1 // pred_region
      _
    $region69: #{mobilenet_forward.1} parent=1 // pred_fallthru
      _
    %v58 = vld [vmem:[%s0] sm:$0xff]
    %v59 = vld [vmem:[%s0 + $0x8] sm:$0xff]
    %v60 = vld [vmem:[%s0 + $0x10] sm:$0xff]
    %v61 = vld [vmem:[%s0 + $0x18] sm:$0xff]
    %v62 = vld [vmem:[%s0 + $0x20] sm:$0xff]
    %v63 = vld [vmem:[%s0 + $0x28] sm:$0xff]
    %v64 = vld [vmem:[%s0 + $0x30] sm:$0xff]
    %v65 = vld [vmem:[%s0 + $0x38] sm:$0xff]
    %v66 = vld [vmem:[%s0 + $0x40] sm:$0xff]
    %v67 = vld [vmem:[%s0 + $0x48] sm:$0xff]
    %v68 = vld [vmem:[%s0 + $0x50] sm:$0xff]
    %v69 = vld [vmem:[%s0 + $0x58] sm:$0xff]
    %v70 = vld [vmem:[%s0 + $0x60] sm:$0xff]
    %v71 = vld [vmem:[%s0 + $0x68] sm:$0xff]
    %v72 = vld [vmem:[%s0 + $0x70] sm:$0xff]
    %v73 = vld [vmem:[%s0 + $0x78] sm:$0xff]
    %v74 = vpack.c.bf16 %v59, %v58
    %v75 = vpack.c.bf16 %v61, %v60
    %v76 = vpack.c.bf16 %v63, %v62
    %v77 = vpack.c.bf16 %v65, %v64
    %v78 = vpack.c.bf16 %v67, %v66
    %v79 = vpack.c.bf16 %v69, %v68
    %v80 = vpack.c.bf16 %v71, %v70
    %v81 = vpack.c.bf16 %v73, %v72
    %v82 = vld [vmem:[%s1] sm:$0xf]
    %v83 = vld [vmem:[%s1 + $0x4] sm:$0xf]
    %v84 = vld [vmem:[%s1 + $0x8] sm:$0xf]
    %v85 = vld [vmem:[%s1 + $0xc] sm:$0x3]
    %v86 = vld [vmem:[%s2] sm:$0x1]
    %v88 = vlaneseq
    %v89 = vshrl.u32 %v88, 7
    %v90 = vsub.s32 0, %v89
    %v91 = vrot.slane %v86, %v90
    %v97 = vunpack.c.l.b16 %v82
    %v98 = vunpack.c.l.b16 %v83
    %v99 = vunpack.c.l.b16 %v84
    %v100 = vunpack.c.l.b16 %v85
    %v101 = vpack.c.b16 %v98, %v97
    %v102 = vpack.c.b16 %v100, %v99
    %vm104 = vcmask 220160
    %v106 = vsel %vm104, %v74, 0
    %v109 = vsel %vm104, %v75, 0
    %v112 = vsel %vm104, %v76, 0
    %v115 = vsel %vm104, %v77, 0
    %v118 = vsel %vm104, %v78, 0
    %v121 = vsel %vm104, %v79, 0
    %v124 = vsel %vm104, %v80, 0
    %v127 = vsel %vm104, %v81, 0
    %vm129 = vcmask 1044480
    %vm130 = vcmask 1045504
    %v131 = vsel %vm129, 4294967295, 65535
    %v132 = vsel %vm130, %v131, 0
    %v134 = vand.u32 %v102, %v132
    %136 = vmatprep.subr.bf16.mxu0 0
    %137 = vmatpush1.bf16.msra.mxu0 %v101
    %138 = vmatprep.subr.bf16.mxu0 0
    %139 = vmatpush1.bf16.msra.mxu0 %v134
    %140 = vmatprep.subr.bf16.mxu0 0
    %141 = vmatpush1.bf16.msra.mxu0 0
    %142 = vmatprep.subr.bf16.mxu0 0
    %143 = vmatpush1.bf16.msra.mxu0 0
    %144 = vmatprep.subr.bf16.mxu0 0
    %145 = vmatpush1.bf16.msra.mxu0 0
    %146 = vmatprep.subr.bf16.mxu0 0
    %147 = vmatpush1.bf16.msra.mxu0 0
    %148 = vmatprep.subr.bf16.mxu0 0
    %149 = vmatpush1.bf16.msra.mxu0 0
    %150 = vmatprep.subr.bf16.mxu0 0
    %151 = vmatpush1.bf16.msra.mxu0 0
    %152 = vmatprep.subr.bf16.mxu0 0
    %153 = vmatpush1.bf16.msra.mxu0 0
    %154 = vmatprep.subr.bf16.mxu0 0
    %155 = vmatpush1.bf16.msra.mxu0 0
    %156 = vmatprep.subr.bf16.mxu0 0
    %157 = vmatpush1.bf16.msra.mxu0 0
    %158 = vmatprep.subr.bf16.mxu0 0
    %159 = vmatpush1.bf16.msra.mxu0 0
    %160 = vmatprep.subr.bf16.mxu0 0
    %161 = vmatpush1.bf16.msra.mxu0 0
    %162 = vmatprep.subr.bf16.mxu0 0
    %163 = vmatpush1.bf16.msra.mxu0 0
    %164 = vmatprep.subr.bf16.mxu0 0
    %165 = vmatpush1.bf16.msra.mxu0 0
    %166 = vmatprep.subr.bf16.mxu0 0
    %167 = vmatpush1.bf16.msra.mxu0 0
    %168 = vmatprep.mubr.bf16.mxu0 0
    %169 = vmatmul.mubr.bf16.gmra.mrb[0].mxu0 %v106
    %v170 = vpop.f32.mrb[0].mxu0
    %v171 = vadd.f32 %v91, %v170
    %v172 = vpop.f32.mrb[0].mxu0
    %v173 = vpop.f32.mrb[0].mxu0
    %v174 = vadd.f32 %v91, %v173
    %v175 = vpop.f32.mrb[0].mxu0
    %176 = vmatprep.mubr.bf16.mxu0 0
    %177 = vmatmul.mubr.bf16.gmra.mrb[0].mxu0 %v109
    %v178 = vpop.f32.mrb[0].mxu0
    %v179 = vadd.f32 %v91, %v178
    %v180 = vpop.f32.mrb[0].mxu0
    %v181 = vpop.f32.mrb[0].mxu0
    %v182 = vadd.f32 %v91, %v181
    %v183 = vpop.f32.mrb[0].mxu0
    %184 = vmatprep.mubr.bf16.mxu0 0
    %185 = vmatmul.mubr.bf16.gmra.mrb[0].mxu0 %v112
    %v186 = vpop.f32.mrb[0].mxu0
    %v187 = vadd.f32 %v91, %v186
    %v188 = vpop.f32.mrb[0].mxu0
    %v189 = vpop.f32.mrb[0].mxu0
    %v190 = vadd.f32 %v91, %v189
    %v191 = vpop.f32.mrb[0].mxu0
    %192 = vmatprep.mubr.bf16.mxu0 0
    %193 = vmatmul.mubr.bf16.gmra.mrb[0].mxu0 %v115
    %v194 = vpop.f32.mrb[0].mxu0
    %v195 = vadd.f32 %v91, %v194
    %v196 = vpop.f32.mrb[0].mxu0
    %v197 = vpop.f32.mrb[0].mxu0
    %v198 = vadd.f32 %v91, %v197
    %v199 = vpop.f32.mrb[0].mxu0
    %200 = vmatprep.mubr.bf16.mxu0 0
    %201 = vmatmul.mubr.bf16.gmra.mrb[0].mxu0 %v118
    %v202 = vpop.f32.mrb[0].mxu0
    %v203 = vadd.f32 %v91, %v202
    %v204 = vpop.f32.mrb[0].mxu0
    %v205 = vpop.f32.mrb[0].mxu0
    %v206 = vadd.f32 %v91, %v205
    %v207 = vpop.f32.mrb[0].mxu0
    %208 = vmatprep.mubr.bf16.mxu0 0
    %209 = vmatmul.mubr.bf16.gmra.mrb[0].mxu0 %v121
    %v210 = vpop.f32.mrb[0].mxu0
    %v211 = vadd.f32 %v91, %v210
    %v212 = vpop.f32.mrb[0].mxu0
    %v213 = vpop.f32.mrb[0].mxu0
    %v214 = vadd.f32 %v91, %v213
    %v215 = vpop.f32.mrb[0].mxu0
    %216 = vmatprep.mubr.bf16.mxu0 0
    %217 = vmatmul.mubr.bf16.gmra.mrb[0].mxu0 %v124
    %v218 = vpop.f32.mrb[0].mxu0
    %v219 = vadd.f32 %v91, %v218
    %v220 = vpop.f32.mrb[0].mxu0
    %v221 = vpop.f32.mrb[0].mxu0
    %v222 = vadd.f32 %v91, %v221
    %v223 = vpop.f32.mrb[0].mxu0
    %224 = vmatprep.mubr.bf16.mxu0 0
    %225 = vmatmul.mubr.bf16.gmra.mrb[0].mxu0 %v127
    %v226 = vpop.f32.mrb[0].mxu0
    %v227 = vadd.f32 %v91, %v226
    %v228 = vpop.f32.mrb[0].mxu0
    %v229 = vpop.f32.mrb[0].mxu0
    %v230 = vadd.f32 %v91, %v229
    %v231 = vpop.f32.mrb[0].mxu0
    %232 = vdwg.mxu0
    %v233 = vmax.f32 %v171, 0.0
    %v234 = vmax.f32 %v174, 0.0
    %v235 = vmax.f32 %v179, 0.0
    %v236 = vmax.f32 %v182, 0.0
    %v237 = vmax.f32 %v187, 0.0
    %v238 = vmax.f32 %v190, 0.0
    %v239 = vmax.f32 %v195, 0.0
    %v240 = vmax.f32 %v198, 0.0
    %v241 = vmax.f32 %v203, 0.0
    %v242 = vmax.f32 %v206, 0.0
    %v243 = vmax.f32 %v211, 0.0
    %v244 = vmax.f32 %v214, 0.0
    %v245 = vmax.f32 %v219, 0.0
    %v246 = vmax.f32 %v222, 0.0
    %v247 = vmax.f32 %v227, 0.0
    %v248 = vmax.f32 %v230, 0.0
    %vm249 = vcmask 261120
    %250 = vst.msk [vmem:[#allocation2] sm:$0xff] %vm249, 0.0
    %vm251 = vcmask 254976
    %252 = vst.msk [vmem:[#allocation2 + $0x8] sm:$0x3] %vm251, 0.0
    %253 = vst.msk [vmem:[#allocation2 + $0x10] sm:$0xff] %vm249, 0.0
    %254 = vst.msk [vmem:[#allocation2 + $0x18] sm:$0x3] %vm251, 0.0
    %255 = vst.msk [vmem:[#allocation2 + $0x20] sm:$0xff] %vm249, 0.0
    %256 = vst.msk [vmem:[#allocation2 + $0x28] sm:$0x3] %vm251, 0.0
    %257 = vst.msk [vmem:[#allocation2 + $0x30] sm:$0xff] %vm249, 0.0
    %258 = vst.msk [vmem:[#allocation2 + $0x38] sm:$0x3] %vm251, 0.0
    %259 = vst.msk [vmem:[#allocation2 + $0x40] sm:$0xff] %vm249, 0.0
    %260 = vst.msk [vmem:[#allocation2 + $0x48] sm:$0x3] %vm251, 0.0
    %261 = vst.msk [vmem:[#allocation2 + $0x50] sm:$0xff] %vm249, 0.0
    %262 = vst.msk [vmem:[#allocation2 + $0x58] sm:$0x3] %vm251, 0.0
    %263 = vst.msk [vmem:[#allocation2 + $0x60] sm:$0xff] %vm249, 0.0
    %264 = vst.msk [vmem:[#allocation2 + $0x68] sm:$0x3] %vm251, 0.0
    %265 = vst.msk [vmem:[#allocation2 + $0x70] sm:$0xff] %vm249, 0.0
    %266 = vst.msk [vmem:[#allocation2 + $0x78] sm:$0x3] %vm251, 0.0
    %267 = vst.msk [vmem:[#allocation2 + $0x80] sm:$0xff] %vm249, 0.0
    %268 = vst.msk [vmem:[#allocation2 + $0x88] sm:$0x3] %vm251, 0.0
    %269 = vst.msk [vmem:[#allocation2 + $0x90] sm:$0xff] %vm249, 0.0
    %270 = vst.msk [vmem:[#allocation2 + $0x98] sm:$0x3] %vm251, 0.0
    %271 = vst.msk [vmem:[#allocation2 + $0xa0] sm:$0xff] %vm249, 0.0
    %272 = vst.msk [vmem:[#allocation2 + $0xa8] sm:$0x3] %vm251, 0.0
    %273 = vst.msk [vmem:[#allocation2 + $0xb0] sm:$0xff] %vm249, 0.0
    %274 = vst.msk [vmem:[#allocation2 + $0xb8] sm:$0x3] %vm251, 0.0
    %275 = vst.msk [vmem:[#allocation2 + $0xc0] sm:$0xff] %vm249, 0.0
    %276 = vst.msk [vmem:[#allocation2 + $0xc8] sm:$0x3] %vm251, 0.0
    %277 = vst.msk [vmem:[#allocation2 + $0xd0] sm:$0xff] %vm249, 0.0
    %278 = vst.msk [vmem:[#allocation2 + $0xd8] sm:$0x3] %vm251, 0.0
    %279 = vst.msk [vmem:[#allocation2 + $0xe0] sm:$0xff] %vm249, 0.0
    %280 = vst.msk [vmem:[#allocation2 + $0xe8] sm:$0x3] %vm251, 0.0
    %281 = vst.msk [vmem:[#allocation2 + $0xf0] sm:$0xff] %vm249, 0.0
    %282 = vst.msk [vmem:[#allocation2 + $0xf8] sm:$0x3] %vm251, 0.0
    %283 = vst.msk [vmem:[#allocation2 + $0x100] sm:$0xff] %vm249, 0.0
    %284 = vst.msk [vmem:[#allocation2 + $0x108] sm:$0x3] %vm251, 0.0
    %285 = vst.msk [vmem:[#allocation2 + $0x110] sm:$0xff] %vm249, 0.0
    %286 = vst.msk [vmem:[#allocation2 + $0x118] sm:$0x3] %vm251, 0.0
    %287 = vst.msk [vmem:[#allocation2 + $0x120] sm:$0xff] %vm249, 0.0
    %288 = vst.msk [vmem:[#allocation2 + $0x128] sm:$0x3] %vm251, 0.0
    %289 = vst.msk [vmem:[#allocation2 + $0x130] sm:$0xff] %vm249, 0.0
    %290 = vst.msk [vmem:[#allocation2 + $0x138] sm:$0x3] %vm251, 0.0
    %s291 = scalar_lea.vmem [#allocation2], 16
    %292 = vst.msk [vmem:[%s291 + $0x1] sm:$0xff] %vm249, %v233
    %293 = vst.msk [vmem:[%s291 + $0x11] sm:$0xff] %vm249, %v234
    %294 = vst.msk [vmem:[%s291 + $0x21] sm:$0xff] %vm249, %v235
    %295 = vst.msk [vmem:[%s291 + $0x31] sm:$0xff] %vm249, %v236
    %296 = vst.msk [vmem:[%s291 + $0x41] sm:$0xff] %vm249, %v237
    %297 = vst.msk [vmem:[%s291 + $0x51] sm:$0xff] %vm249, %v238
    %298 = vst.msk [vmem:[%s291 + $0x61] sm:$0xff] %vm249, %v239
    %299 = vst.msk [vmem:[%s291 + $0x71] sm:$0xff] %vm249, %v240
    %300 = vst.msk [vmem:[%s291 + $0xa1] sm:$0xff] %vm249, %v241
    %301 = vst.msk [vmem:[%s291 + $0xb1] sm:$0xff] %vm249, %v242
    %302 = vst.msk [vmem:[%s291 + $0xc1] sm:$0xff] %vm249, %v243
    %303 = vst.msk [vmem:[%s291 + $0xd1] sm:$0xff] %vm249, %v244
    %304 = vst.msk [vmem:[%s291 + $0xe1] sm:$0xff] %vm249, %v245
    %305 = vst.msk [vmem:[%s291 + $0xf1] sm:$0xff] %vm249, %v246
    %306 = vst.msk [vmem:[%s291 + $0x101] sm:$0xff] %vm249, %v247
    %307 = vst.msk [vmem:[%s291 + $0x111] sm:$0xff] %vm249, %v248
    %v308 = vld [vmem:[#allocation2] sm:$0xff]
    %v309 = vld [vmem:[#allocation2 + $0x10] sm:$0xff]
    %v310 = vld [vmem:[#allocation2 + $0x20] sm:$0xff]
    %v311 = vld [vmem:[#allocation2 + $0x30] sm:$0xff]
    %v312 = vld [vmem:[#allocation2 + $0x40] sm:$0xff]
    %v313 = vld [vmem:[#allocation2 + $0x50] sm:$0xff]
    %v314 = vld [vmem:[#allocation2 + $0x60] sm:$0xff]
    %v315 = vld [vmem:[#allocation2 + $0x70] sm:$0xff]
    %v316 = vld [vmem:[#allocation2 + $0xa0] sm:$0xff]
    %v317 = vld [vmem:[#allocation2 + $0xb0] sm:$0xff]
    %v318 = vld [vmem:[#allocation2 + $0xc0] sm:$0xff]
    %v319 = vld [vmem:[#allocation2 + $0xd0] sm:$0xff]
    %v320 = vld [vmem:[#allocation2 + $0xe0] sm:$0xff]
    %v321 = vld [vmem:[#allocation2 + $0xf0] sm:$0xff]
    %v322 = vld [vmem:[#allocation2 + $0x100] sm:$0xff]
    %v323 = vld [vmem:[#allocation2 + $0x110] sm:$0xff]
    %v324 = vld [vmem:[%s3] sm:$0x1]
    %v325 = vlaneseq
    %v326 = vshrl.u32 %v325, 7
    %v327 = vsub.s32 0, %v326
    %v328 = vrot.slane %v324, %v327
    %v329 = vmul.f32 %v308, %v328
    %v330 = vmul.f32 %v309, %v328
    %v331 = vmul.f32 %v310, %v328
    %v332 = vmul.f32 %v311, %v328
    %v333 = vmul.f32 %v312, %v328
    %v334 = vmul.f32 %v313, %v328
    %v335 = vmul.f32 %v314, %v328
    %v336 = vmul.f32 %v315, %v328
    %v337 = vmul.f32 %v316, %v328
    %v338 = vmul.f32 %v317, %v328
    %v339 = vmul.f32 %v318, %v328
    %v340 = vmul.f32 %v319, %v328
    %v341 = vmul.f32 %v320, %v328
    %v342 = vmul.f32 %v321, %v328
    %v343 = vmul.f32 %v322, %v328
    %v344 = vmul.f32 %v323, %v328
    %v345 = vadd.f32 %v329, 0.0
    %v346 = vadd.f32 %v330, 0.0
    %v347 = vadd.f32 %v331, 0.0
    %v348 = vadd.f32 %v332, 0.0
    %v349 = vadd.f32 %v333, 0.0
    %v350 = vadd.f32 %v334, 0.0
    %v351 = vadd.f32 %v335, 0.0
    %v352 = vadd.f32 %v336, 0.0
    %v353 = vadd.f32 %v337, 0.0
    %v354 = vadd.f32 %v338, 0.0
    %v355 = vadd.f32 %v339, 0.0
    %v356 = vadd.f32 %v340, 0.0
    %v357 = vadd.f32 %v341, 0.0
    %v358 = vadd.f32 %v342, 0.0
    %v359 = vadd.f32 %v343, 0.0
    %v360 = vadd.f32 %v344, 0.0
    %v361 = vld [vmem:[#allocation2 + $0x1] sm:$0xff]
    %v362 = vld [vmem:[#allocation2 + $0x11] sm:$0xff]
    %v363 = vld [vmem:[#allocation2 + $0x21] sm:$0xff]
    %v364 = vld [vmem:[#allocation2 + $0x31] sm:$0xff]
    %v365 = vld [vmem:[#allocation2 + $0x41] sm:$0xff]
    %v366 = vld [vmem:[#allocation2 + $0x51] sm:$0xff]
    %v367 = vld [vmem:[#allocation2 + $0x61] sm:$0xff]
    %v368 = vld [vmem:[#allocation2 + $0x71] sm:$0xff]
    %v369 = vld [vmem:[#allocation2 + $0xa1] sm:$0xff]
    %v370 = vld [vmem:[#allocation2 + $0xb1] sm:$0xff]
    %v371 = vld [vmem:[#allocation2 + $0xc1] sm:$0xff]
    %v372 = vld [vmem:[#allocation2 + $0xd1] sm:$0xff]
    %v373 = vld [vmem:[#allocation2 + $0xe1] sm:$0xff]
    %v374 = vld [vmem:[#allocation2 + $0xf1] sm:$0xff]
    %v375 = vld [vmem:[#allocation2 + $0x101] sm:$0xff]
    %v376 = vld [vmem:[#allocation2 + $0x111] sm:$0xff]
    %v377 = vld [vmem:[%s3 + $0x1] sm:$0x1]
    %v378 = vlaneseq
    %v379 = vshrl.u32 %v378, 7
    %v380 = vsub.s32 0, %v379
    %v381 = vrot.slane %v377, %v380
    %v382 = vmul.f32 %v361, %v381
    %v383 = vmul.f32 %v362, %v381
    %v384 = vmul.f32 %v363, %v381
    %v385 = vmul.f32 %v364, %v381
    %v386 = vmul.f32 %v365, %v381
    %v387 = vmul.f32 %v366, %v381
    %v388 = vmul.f32 %v367, %v381
    %v389 = vmul.f32 %v368, %v381
    %v390 = vmul.f32 %v369, %v381
    %v391 = vmul.f32 %v370, %v381
    %v392 = vmul.f32 %v371, %v381
    %v393 = vmul.f32 %v372, %v381
    %v394 = vmul.f32 %v373, %v381
    %v395 = vmul.f32 %v374, %v381
    %v396 = vmul.f32 %v375, %v381
    %v397 = vmul.f32 %v376, %v381
    %v398 = vadd.f32 %v345, %v382
    %v399 = vadd.f32 %v346, %v383
    %v400 = vadd.f32 %v347, %v384
    %v401 = vadd.f32 %v348, %v385
    %v402 = vadd.f32 %v349, %v386
    %v403 = vadd.f32 %v350, %v387
    %v404 = vadd.f32 %v351, %v388
    %v405 = vadd.f32 %v352, %v389
    %v406 = vadd.f32 %v353, %v390
    %v407 = vadd.f32 %v354, %v391
    %v408 = vadd.f32 %v355, %v392
    %v409 = vadd.f32 %v356, %v393
    %v410 = vadd.f32 %v357, %v394
    %v411 = vadd.f32 %v358, %v395
    %v412 = vadd.f32 %v359, %v396
    %v413 = vadd.f32 %v360, %v397
    %v414 = vld [vmem:[#allocation2 + $0x2] sm:$0xff]
    %v415 = vld [vmem:[#allocation2 + $0x12] sm:$0xff]
    %v416 = vld [vmem:[#allocation2 + $0x22] sm:$0xff]
    %v417 = vld [vmem:[#allocation2 + $0x32] sm:$0xff]
    %v418 = vld [vmem:[#allocation2 + $0x42] sm:$0xff]
    %v419 = vld [vmem:[#allocation2 + $0x52] sm:$0xff]
    %v420 = vld [vmem:[#allocation2 + $0x62] sm:$0xff]
    %v421 = vld [vmem:[#allocation2 + $0x72] sm:$0xff]
    %v422 = vld [vmem:[#allocation2 + $0xa2] sm:$0xff]
    %v423 = vld [vmem:[#allocation2 + $0xb2] sm:$0xff]
    %v424 = vld [vmem:[#allocation2 + $0xc2] sm:$0xff]
    %v425 = vld [vmem:[#allocation2 + $0xd2] sm:$0xff]
    %v426 = vld [vmem:[#allocation2 + $0xe2] sm:$0xff]
    %v427 = vld [vmem:[#allocation2 + $0xf2] sm:$0xff]
    %v428 = vld [vmem:[#allocation2 + $0x102] sm:$0xff]
    %v429 = vld [vmem:[#allocation2 + $0x112] sm:$0xff]
    %v430 = vld [vmem:[%s3 + $0x2] sm:$0x1]
    %v431 = vlaneseq
    %v432 = vshrl.u32 %v431, 7
    %v433 = vsub.s32 0, %v432
    %v434 = vrot.slane %v430, %v433
    %v435 = vmul.f32 %v414, %v434
    %v436 = vmul.f32 %v415, %v434
    %v437 = vmul.f32 %v416, %v434
    %v438 = vmul.f32 %v417, %v434
    %v439 = vmul.f32 %v418, %v434
    %v440 = vmul.f32 %v419, %v434
    %v441 = vmul.f32 %v420, %v434
    %v442 = vmul.f32 %v421, %v434
    %v443 = vmul.f32 %v422, %v434
    %v444 = vmul.f32 %v423, %v434
    %v445 = vmul.f32 %v424, %v434
    %v446 = vmul.f32 %v425, %v434
    %v447 = vmul.f32 %v426, %v434
    %v448 = vmul.f32 %v427, %v434
    %v449 = vmul.f32 %v428, %v434
    %v450 = vmul.f32 %v429, %v434
    %v451 = vadd.f32 %v398, %v435
    %v452 = vadd.f32 %v399, %v436
    %v453 = vadd.f32 %v400, %v437
    %v454 = vadd.f32 %v401, %v438
    %v455 = vadd.f32 %v402, %v439
    %v456 = vadd.f32 %v403, %v440
    %v457 = vadd.f32 %v404, %v441
    %v458 = vadd.f32 %v405, %v442
    %v459 = vadd.f32 %v406, %v443
    %v460 = vadd.f32 %v407, %v444
    %v461 = vadd.f32 %v408, %v445
    %v462 = vadd.f32 %v409, %v446
    %v463 = vadd.f32 %v410, %v447
    %v464 = vadd.f32 %v411, %v448
    %v465 = vadd.f32 %v412, %v449
    %v466 = vadd.f32 %v413, %v450
    %v467 = vld [vmem:[%s291] sm:$0xff]
    %v468 = vld [vmem:[%s291 + $0x10] sm:$0xff]
    %v469 = vld [vmem:[%s291 + $0x20] sm:$0xff]
    %v470 = vld [vmem:[%s291 + $0x30] sm:$0xff]
    %v471 = vld [vmem:[%s291 + $0x40] sm:$0xff]
    %v472 = vld [vmem:[%s291 + $0x50] sm:$0xff]
    %v473 = vld [vmem:[%s291 + $0x60] sm:$0xff]
    %v474 = vld [vmem:[%s291 + $0x70] sm:$0xff]
    %v475 = vld [vmem:[%s291 + $0xa0] sm:$0xff]
    %v476 = vld [vmem:[%s291 + $0xb0] sm:$0xff]
    %v477 = vld [vmem:[%s291 + $0xc0] sm:$0xff]
    %v478 = vld [vmem:[%s291 + $0xd0] sm:$0xff]
    %v479 = vld [vmem:[%s291 + $0xe0] sm:$0xff]
    %v480 = vld [vmem:[%s291 + $0xf0] sm:$0xff]
    %v481 = vld [vmem:[%s291 + $0x100] sm:$0xff]
    %v482 = vld [vmem:[%s291 + $0x110] sm:$0xff]
    %v483 = vld [vmem:[%s3 + $0x3] sm:$0x1]
    %v484 = vlaneseq
    %v485 = vshrl.u32 %v484, 7
    %v486 = vsub.s32 0, %v485
    %v487 = vrot.slane %v483, %v486
    %v488 = vmul.f32 %v467, %v487
    %v489 = vmul.f32 %v468, %v487
    %v490 = vmul.f32 %v469, %v487
    %v491 = vmul.f32 %v470, %v487
    %v492 = vmul.f32 %v471, %v487
    %v493 = vmul.f32 %v472, %v487
    %v494 = vmul.f32 %v473, %v487
    %v495 = vmul.f32 %v474, %v487
    %v496 = vmul.f32 %v475, %v487
    %v497 = vmul.f32 %v476, %v487
    %v498 = vmul.f32 %v477, %v487
    %v499 = vmul.f32 %v478, %v487
    %v500 = vmul.f32 %v479, %v487
    %v501 = vmul.f32 %v480, %v487
    %v502 = vmul.f32 %v481, %v487
    %v503 = vmul.f32 %v482, %v487
    %v504 = vadd.f32 %v451, %v488
    %v505 = vadd.f32 %v452, %v489
    %v506 = vadd.f32 %v453, %v490
    %v507 = vadd.f32 %v454, %v491
    %v508 = vadd.f32 %v455, %v492
    %v509 = vadd.f32 %v456, %v493
    %v510 = vadd.f32 %v457, %v494
    %v511 = vadd.f32 %v458, %v495
    %v512 = vadd.f32 %v459, %v496
    %v513 = vadd.f32 %v460, %v497
    %v514 = vadd.f32 %v461, %v498
    %v515 = vadd.f32 %v462, %v499
    %v516 = vadd.f32 %v463, %v500
    %v517 = vadd.f32 %v464, %v501
    %v518 = vadd.f32 %v465, %v502
    %v519 = vadd.f32 %v466, %v503
    %v520 = vld [vmem:[%s291 + $0x1] sm:$0xff]
    %v521 = vld [vmem:[%s291 + $0x11] sm:$0xff]
    %v522 = vld [vmem:[%s291 + $0x21] sm:$0xff]
    %v523 = vld [vmem:[%s291 + $0x31] sm:$0xff]
    %v524 = vld [vmem:[%s291 + $0x41] sm:$0xff]
    %v525 = vld [vmem:[%s291 + $0x51] sm:$0xff]
    %v526 = vld [vmem:[%s291 + $0x61] sm:$0xff]
    %v527 = vld [vmem:[%s291 + $0x71] sm:$0xff]
    %v528 = vld [vmem:[%s291 + $0xa1] sm:$0xff]
    %v529 = vld [vmem:[%s291 + $0xb1] sm:$0xff]
    %v530 = vld [vmem:[%s291 + $0xc1] sm:$0xff]
    %v531 = vld [vmem:[%s291 + $0xd1] sm:$0xff]
    %v532 = vld [vmem:[%s291 + $0xe1] sm:$0xff]
    %v533 = vld [vmem:[%s291 + $0xf1] sm:$0xff]
    %v534 = vld [vmem:[%s291 + $0x101] sm:$0xff]
    %v535 = vld [vmem:[%s291 + $0x111] sm:$0xff]
    %v536 = vld [vmem:[%s3 + $0x4] sm:$0x1]
    %v537 = vlaneseq
    %v538 = vshrl.u32 %v537, 7
    %v539 = vsub.s32 0, %v538
    %v540 = vrot.slane %v536, %v539
    %v541 = vmul.f32 %v520, %v540
    %v542 = vmul.f32 %v521, %v540
    %v543 = vmul.f32 %v522, %v540
    %v544 = vmul.f32 %v523, %v540
    %v545 = vmul.f32 %v524, %v540
    %v546 = vmul.f32 %v525, %v540
    %v547 = vmul.f32 %v526, %v540
    %v548 = vmul.f32 %v527, %v540
    %v549 = vmul.f32 %v528, %v540
    %v550 = vmul.f32 %v529, %v540
    %v551 = vmul.f32 %v530, %v540
    %v552 = vmul.f32 %v531, %v540
    %v553 = vmul.f32 %v532, %v540
    %v554 = vmul.f32 %v533, %v540
    %v555 = vmul.f32 %v534, %v540
    %v556 = vmul.f32 %v535, %v540
    %v557 = vadd.f32 %v504, %v541
    %v558 = vadd.f32 %v505, %v542
    %v559 = vadd.f32 %v506, %v543
    %v560 = vadd.f32 %v507, %v544
    %v561 = vadd.f32 %v508, %v545
    %v562 = vadd.f32 %v509, %v546
    %v563 = vadd.f32 %v510, %v547
    %v564 = vadd.f32 %v511, %v548
    %v565 = vadd.f32 %v512, %v549
    %v566 = vadd.f32 %v513, %v550
    %v567 = vadd.f32 %v514, %v551
    %v568 = vadd.f32 %v515, %v552
    %v569 = vadd.f32 %v516, %v553
    %v570 = vadd.f32 %v517, %v554
    %v571 = vadd.f32 %v518, %v555
    %v572 = vadd.f32 %v519, %v556
    %v573 = vld [vmem:[%s291 + $0x2] sm:$0xff]
    %v574 = vld [vmem:[%s291 + $0x12] sm:$0xff]
    %v575 = vld [vmem:[%s291 + $0x22] sm:$0xff]
    %v576 = vld [vmem:[%s291 + $0x32] sm:$0xff]
    %v577 = vld [vmem:[%s291 + $0x42] sm:$0xff]
    %v578 = vld [vmem:[%s291 + $0x52] sm:$0xff]
    %v579 = vld [vmem:[%s291 + $0x62] sm:$0xff]
    %v580 = vld [vmem:[%s291 + $0x72] sm:$0xff]
    %v581 = vld [vmem:[%s291 + $0xa2] sm:$0xff]
    %v582 = vld [vmem:[%s291 + $0xb2] sm:$0xff]
    %v583 = vld [vmem:[%s291 + $0xc2] sm:$0xff]
    %v584 = vld [vmem:[%s291 + $0xd2] sm:$0xff]
    %v585 = vld [vmem:[%s291 + $0xe2] sm:$0xff]
    %v586 = vld [vmem:[%s291 + $0xf2] sm:$0xff]
    %v587 = vld [vmem:[%s291 + $0x102] sm:$0xff]
    %v588 = vld [vmem:[%s291 + $0x112] sm:$0xff]
    %v589 = vld [vmem:[%s3 + $0x5] sm:$0x1]
    %v590 = vlaneseq
    %v591 = vshrl.u32 %v590, 7
    %v592 = vsub.s32 0, %v591
    %v593 = vrot.slane %v589, %v592
    %v594 = vmul.f32 %v573, %v593
    %v595 = vmul.f32 %v574, %v593
    %v596 = vmul.f32 %v575, %v593
    %v597 = vmul.f32 %v576, %v593
    %v598 = vmul.f32 %v577, %v593
    %v599 = vmul.f32 %v578, %v593
    %v600 = vmul.f32 %v579, %v593
    %v601 = vmul.f32 %v580, %v593
    %v602 = vmul.f32 %v581, %v593
    %v603 = vmul.f32 %v582, %v593
    %v604 = vmul.f32 %v583, %v593
    %v605 = vmul.f32 %v584, %v593
    %v606 = vmul.f32 %v585, %v593
    %v607 = vmul.f32 %v586, %v593
    %v608 = vmul.f32 %v587, %v593
    %v609 = vmul.f32 %v588, %v593
    %v610 = vadd.f32 %v557, %v594
    %v611 = vadd.f32 %v558, %v595
    %v612 = vadd.f32 %v559, %v596
    %v613 = vadd.f32 %v560, %v597
    %v614 = vadd.f32 %v561, %v598
    %v615 = vadd.f32 %v562, %v599
    %v616 = vadd.f32 %v563, %v600
    %v617 = vadd.f32 %v564, %v601
    %v618 = vadd.f32 %v565, %v602
    %v619 = vadd.f32 %v566, %v603
    %v620 = vadd.f32 %v567, %v604
    %v621 = vadd.f32 %v568, %v605
    %v622 = vadd.f32 %v569, %v606
    %v623 = vadd.f32 %v570, %v607
    %v624 = vadd.f32 %v571, %v608
    %v625 = vadd.f32 %v572, %v609
    %s626 = scalar_lea.vmem [#allocation2], 32
    %v627 = vld [vmem:[%s626] sm:$0xff]
    %v628 = vld [vmem:[%s626 + $0x10] sm:$0xff]
    %v629 = vld [vmem:[%s626 + $0x20] sm:$0xff]
    %v630 = vld [vmem:[%s626 + $0x30] sm:$0xff]
    %v631 = vld [vmem:[%s626 + $0x40] sm:$0xff]
    %v632 = vld [vmem:[%s626 + $0x50] sm:$0xff]
    %v633 = vld [vmem:[%s626 + $0x60] sm:$0xff]
    %v634 = vld [vmem:[%s626 + $0x70] sm:$0xff]
    %v635 = vld [vmem:[%s626 + $0xa0] sm:$0xff]
    %v636 = vld [vmem:[%s626 + $0xb0] sm:$0xff]
    %v637 = vld [vmem:[%s626 + $0xc0] sm:$0xff]
    %v638 = vld [vmem:[%s626 + $0xd0] sm:$0xff]
    %v639 = vld [vmem:[%s626 + $0xe0] sm:$0xff]
    %v640 = vld [vmem:[%s626 + $0xf0] sm:$0xff]
    %v641 = vld [vmem:[%s626 + $0x100] sm:$0xff]
    %v642 = vld [vmem:[%s626 + $0x110] sm:$0xff]
    %v643 = vld [vmem:[%s3 + $0x6] sm:$0x1]
    %v644 = vlaneseq
    %v645 = vshrl.u32 %v644, 7
    %v646 = vsub.s32 0, %v645
    %v647 = vrot.slane %v643, %v646
    %v648 = vmul.f32 %v627, %v647
    %v649 = vmul.f32 %v628, %v647
    %v650 = vmul.f32 %v629, %v647
    %v651 = vmul.f32 %v630, %v647
    %v652 = vmul.f32 %v631, %v647
    %v653 = vmul.f32 %v632, %v647
    %v654 = vmul.f32 %v633, %v647
    %v655 = vmul.f32 %v634, %v647
    %v656 = vmul.f32 %v635, %v647
    %v657 = vmul.f32 %v636, %v647
    %v658 = vmul.f32 %v637, %v647
    %v659 = vmul.f32 %v638, %v647
    %v660 = vmul.f32 %v639, %v647
    %v661 = vmul.f32 %v640, %v647
    %v662 = vmul.f32 %v641, %v647
    %v663 = vmul.f32 %v642, %v647
    %v664 = vadd.f32 %v610, %v648
    %v665 = vadd.f32 %v611, %v649
    %v666 = vadd.f32 %v612, %v650
    %v667 = vadd.f32 %v613, %v651
    %v668 = vadd.f32 %v614, %v652
    %v669 = vadd.f32 %v615, %v653
    %v670 = vadd.f32 %v616, %v654
    %v671 = vadd.f32 %v617, %v655
    %v672 = vadd.f32 %v618, %v656
    %v673 = vadd.f32 %v619, %v657
    %v674 = vadd.f32 %v620, %v658
    %v675 = vadd.f32 %v621, %v659
    %v676 = vadd.f32 %v622, %v660
    %v677 = vadd.f32 %v623, %v661
    %v678 = vadd.f32 %v624, %v662
    %v679 = vadd.f32 %v625, %v663
    %v680 = vld [vmem:[%s626 + $0x1] sm:$0xff]
    %v681 = vld [vmem:[%s626 + $0x11] sm:$0xff]
    %v682 = vld [vmem:[%s626 + $0x21] sm:$0xff]
    %v683 = vld [vmem:[%s626 + $0x31] sm:$0xff]
    %v684 = vld [vmem:[%s626 + $0x41] sm:$0xff]
    %v685 = vld [vmem:[%s626 + $0x51] sm:$0xff]
    %v686 = vld [vmem:[%s626 + $0x61] sm:$0xff]
    %v687 = vld [vmem:[%s626 + $0x71] sm:$0xff]
    %v688 = vld [vmem:[%s626 + $0xa1] sm:$0xff]
    %v689 = vld [vmem:[%s626 + $0xb1] sm:$0xff]
    %v690 = vld [vmem:[%s626 + $0xc1] sm:$0xff]
    %v691 = vld [vmem:[%s626 + $0xd1] sm:$0xff]
    %v692 = vld [vmem:[%s626 + $0xe1] sm:$0xff]
    %v693 = vld [vmem:[%s626 + $0xf1] sm:$0xff]
    %v694 = vld [vmem:[%s626 + $0x101] sm:$0xff]
    %v695 = vld [vmem:[%s626 + $0x111] sm:$0xff]
    %v696 = vld [vmem:[%s3 + $0x7] sm:$0x1]
    %v697 = vlaneseq
    %v698 = vshrl.u32 %v697, 7
    %v699 = vsub.s32 0, %v698
    %v700 = vrot.slane %v696, %v699
    %v701 = vmul.f32 %v680, %v700
    %v702 = vmul.f32 %v681, %v700
    %v703 = vmul.f32 %v682, %v700
    %v704 = vmul.f32 %v683, %v700
    %v705 = vmul.f32 %v684, %v700
    %v706 = vmul.f32 %v685, %v700
    %v707 = vmul.f32 %v686, %v700
    %v708 = vmul.f32 %v687, %v700
    %v709 = vmul.f32 %v688, %v700
    %v710 = vmul.f32 %v689, %v700
    %v711 = vmul.f32 %v690, %v700
    %v712 = vmul.f32 %v691, %v700
    %v713 = vmul.f32 %v692, %v700
    %v714 = vmul.f32 %v693, %v700
    %v715 = vmul.f32 %v694, %v700
    %v716 = vmul.f32 %v695, %v700
    %v717 = vadd.f32 %v664, %v701
    %v718 = vadd.f32 %v665, %v702
    %v719 = vadd.f32 %v666, %v703
    %v720 = vadd.f32 %v667, %v704
    %v721 = vadd.f32 %v668, %v705
    %v722 = vadd.f32 %v669, %v706
    %v723 = vadd.f32 %v670, %v707
    %v724 = vadd.f32 %v671, %v708
    %v725 = vadd.f32 %v672, %v709
    %v726 = vadd.f32 %v673, %v710
    %v727 = vadd.f32 %v674, %v711
    %v728 = vadd.f32 %v675, %v712
    %v729 = vadd.f32 %v676, %v713
    %v730 = vadd.f32 %v677, %v714
    %v731 = vadd.f32 %v678, %v715
    %v732 = vadd.f32 %v679, %v716
    %v733 = vld [vmem:[%s626 + $0x2] sm:$0xff]
    %v734 = vld [vmem:[%s626 + $0x12] sm:$0xff]
    %v735 = vld [vmem:[%s626 + $0x22] sm:$0xff]
    %v736 = vld [vmem:[%s626 + $0x32] sm:$0xff]
    %v737 = vld [vmem:[%s626 + $0x42] sm:$0xff]
    %v738 = vld [vmem:[%s626 + $0x52] sm:$0xff]
    %v739 = vld [vmem:[%s626 + $0x62] sm:$0xff]
    %v740 = vld [vmem:[%s626 + $0x72] sm:$0xff]
    %v741 = vld [vmem:[%s626 + $0xa2] sm:$0xff]
    %v742 = vld [vmem:[%s626 + $0xb2] sm:$0xff]
    %v743 = vld [vmem:[%s626 + $0xc2] sm:$0xff]
    %v744 = vld [vmem:[%s626 + $0xd2] sm:$0xff]
    %v745 = vld [vmem:[%s626 + $0xe2] sm:$0xff]
    %v746 = vld [vmem:[%s626 + $0xf2] sm:$0xff]
    %v747 = vld [vmem:[%s626 + $0x102] sm:$0xff]
    %v748 = vld [vmem:[%s626 + $0x112] sm:$0xff]
    %v749 = vld [vmem:[%s3 + $0x8] sm:$0x1]
    %v750 = vlaneseq
    %v751 = vshrl.u32 %v750, 7
    %v752 = vsub.s32 0, %v751
    %v753 = vrot.slane %v749, %v752
    %v754 = vmul.f32 %v733, %v753
    %v755 = vmul.f32 %v734, %v753
    %v756 = vmul.f32 %v735, %v753
    %v757 = vmul.f32 %v736, %v753
    %v758 = vmul.f32 %v737, %v753
    %v759 = vmul.f32 %v738, %v753
    %v760 = vmul.f32 %v739, %v753
    %v761 = vmul.f32 %v740, %v753
    %v762 = vmul.f32 %v741, %v753
    %v763 = vmul.f32 %v742, %v753
    %v764 = vmul.f32 %v743, %v753
    %v765 = vmul.f32 %v744, %v753
    %v766 = vmul.f32 %v745, %v753
    %v767 = vmul.f32 %v746, %v753
    %v768 = vmul.f32 %v747, %v753
    %v769 = vmul.f32 %v748, %v753
    %v770 = vadd.f32 %v717, %v754
    %v771 = vadd.f32 %v718, %v755
    %v772 = vadd.f32 %v719, %v756
    %v773 = vadd.f32 %v720, %v757
    %v774 = vadd.f32 %v721, %v758
    %v775 = vadd.f32 %v722, %v759
    %v776 = vadd.f32 %v723, %v760
    %v777 = vadd.f32 %v724, %v761
    %v778 = vadd.f32 %v725, %v762
    %v779 = vadd.f32 %v726, %v763
    %v780 = vadd.f32 %v727, %v764
    %v781 = vadd.f32 %v728, %v765
    %v782 = vadd.f32 %v729, %v766
    %v783 = vadd.f32 %v730, %v767
    %v784 = vadd.f32 %v731, %v768
    %v785 = vadd.f32 %v732, %v769
    %v786 = vld [vmem:[%s4] sm:$0x1]
    %v788 = vlaneseq
    %v789 = vshrl.u32 %v788, 7
    %v790 = vsub.s32 0, %v789
    %v791 = vrot.slane %v786, %v790
    %v793 = vadd.f32 %v770, %v791
    %v794 = vadd.f32 %v771, %v791
    %v795 = vadd.f32 %v772, %v791
    %v796 = vadd.f32 %v773, %v791
    %v797 = vadd.f32 %v774, %v791
    %v798 = vadd.f32 %v775, %v791
    %v799 = vadd.f32 %v776, %v791
    %v800 = vadd.f32 %v777, %v791
    %v801 = vadd.f32 %v778, %v791
    %v802 = vadd.f32 %v779, %v791
    %v803 = vadd.f32 %v780, %v791
    %v804 = vadd.f32 %v781, %v791
    %v805 = vadd.f32 %v782, %v791
    %v806 = vadd.f32 %v783, %v791
    %v807 = vadd.f32 %v784, %v791
    %v808 = vadd.f32 %v785, %v791
    %v809 = vmax.f32 %v793, 0.0
    %v810 = vmax.f32 %v794, 0.0
    %v811 = vmax.f32 %v795, 0.0
    %v812 = vmax.f32 %v796, 0.0
    %v813 = vmax.f32 %v797, 0.0
    %v814 = vmax.f32 %v798, 0.0
    %v815 = vmax.f32 %v799, 0.0
    %v816 = vmax.f32 %v800, 0.0
    %v817 = vmax.f32 %v801, 0.0
    %v818 = vmax.f32 %v802, 0.0
    %v819 = vmax.f32 %v803, 0.0
    %v820 = vmax.f32 %v804, 0.0
    %v821 = vmax.f32 %v805, 0.0
    %v822 = vmax.f32 %v806, 0.0
    %v823 = vmax.f32 %v807, 0.0
    %v824 = vmax.f32 %v808, 0.0
    %v825 = vpack.c.bf16 %v810, %v809
    %v826 = vpack.c.bf16 %v812, %v811
    %v827 = vpack.c.bf16 %v814, %v813
    %v828 = vpack.c.bf16 %v816, %v815
    %v829 = vpack.c.bf16 %v818, %v817
    %v830 = vpack.c.bf16 %v820, %v819
    %v831 = vpack.c.bf16 %v822, %v821
    %v832 = vpack.c.bf16 %v824, %v823
    %v833 = vld [vmem:[%s5] sm:$0xf]
    %v834 = vld [vmem:[%s5 + $0x4] sm:$0xf]
    %v835 = vld [vmem:[%s5 + $0x8] sm:$0xf]
    %v836 = vld [vmem:[%s5 + $0xc] sm:$0xf]
    %v837 = vld [vmem:[%s6] sm:$0x1]
    %v839 = vlaneseq
    %v840 = vshrl.u32 %v839, 7
    %v841 = vsub.s32 0, %v840
    %v842 = vrot.slane %v837, %v841
    %v848 = vunpack.c.l.b16 %v833
    %v849 = vunpack.c.l.b16 %v834
    %v850 = vunpack.c.l.b16 %v835
    %v851 = vunpack.c.l.b16 %v836
    %v852 = vpack.c.b16 %v849, %v848
    %v853 = vpack.c.b16 %v851, %v850
    %v857 = vsel %vm249, %v825, 0
    %v860 = vsel %vm249, %v826, 0
    %v863 = vsel %vm249, %v827, 0
    %v866 = vsel %vm249, %v828, 0
    %v869 = vsel %vm249, %v829, 0
    %v872 = vsel %vm249, %v830, 0
    %v875 = vsel %vm249, %v831, 0
    %v878 = vsel %vm249, %v832, 0
    %880 = vmatprep.subr.bf16.mxu0 0
    %881 = vmatpush1.bf16.msra.mxu0 %v852
    %882 = vmatprep.subr.bf16.mxu0 0
    %883 = vmatpush1.bf16.msra.mxu0 %v853
    %884 = vmatprep.subr.bf16.mxu0 0
    %885 = vmatpush1.bf16.msra.mxu0 0
    %886 = vmatprep.subr.bf16.mxu0 0
    %887 = vmatpush1.bf16.msra.mxu0 0
    %888 = vmatprep.subr.bf16.mxu0 0
    %889 = vmatpush1.bf16.msra.mxu0 0
    %890 = vmatprep.subr.bf16.mxu0 0
    %891 = vmatpush1.bf16.msra.mxu0 0
    %892 = vmatprep.subr.bf16.mxu0 0
    %893 = vmatpush1.bf16.msra.mxu0 0
    %894 = vmatprep.subr.bf16.mxu0 0
    %895 = vmatpush1.bf16.msra.mxu0 0
    %896 = vmatprep.subr.bf16.mxu0 0
    %897 = vmatpush1.bf16.msra.mxu0 0
    %898 = vmatprep.subr.bf16.mxu0 0
    %899 = vmatpush1.bf16.msra.mxu0 0
    %900 = vmatprep.subr.bf16.mxu0 0
    %901 = vmatpush1.bf16.msra.mxu0 0
    %902 = vmatprep.subr.bf16.mxu0 0
    %903 = vmatpush1.bf16.msra.mxu0 0
    %904 = vmatprep.subr.bf16.mxu0 0
    %905 = vmatpush1.bf16.msra.mxu0 0
    %906 = vmatprep.subr.bf16.mxu0 0
    %907 = vmatpush1.bf16.msra.mxu0 0
    %908 = vmatprep.subr.bf16.mxu0 0
    %909 = vmatpush1.bf16.msra.mxu0 0
    %910 = vmatprep.subr.bf16.mxu0 0
    %911 = vmatpush1.bf16.msra.mxu0 0
    %912 = vmatprep.mubr.bf16.mxu0 0
    %913 = vmatmul.mubr.bf16.gmra.mrb[0].mxu0 %v857
    %v914 = vpop.f32.mrb[0].mxu0
    %v915 = vadd.f32 %v842, %v914
    %v916 = vpop.f32.mrb[0].mxu0
    %v917 = vpop.f32.mrb[0].mxu0
    %v918 = vadd.f32 %v842, %v917
    %v919 = vpop.f32.mrb[0].mxu0
    %920 = vmatprep.mubr.bf16.mxu0 0
    %921 = vmatmul.mubr.bf16.gmra.mrb[0].mxu0 %v860
    %v922 = vpop.f32.mrb[0].mxu0
    %v923 = vadd.f32 %v842, %v922
    %v924 = vpop.f32.mrb[0].mxu0
    %v925 = vpop.f32.mrb[0].mxu0
    %v926 = vadd.f32 %v842, %v925
    %v927 = vpop.f32.mrb[0].mxu0
    %928 = vmatprep.mubr.bf16.mxu0 0
    %929 = vmatmul.mubr.bf16.gmra.mrb[0].mxu0 %v863
    %v930 = vpop.f32.mrb[0].mxu0
    %v931 = vadd.f32 %v842, %v930
    %v932 = vpop.f32.mrb[0].mxu0
    %v933 = vpop.f32.mrb[0].mxu0
    %v934 = vadd.f32 %v842, %v933
    %v935 = vpop.f32.mrb[0].mxu0
    %936 = vmatprep.mubr.bf16.mxu0 0
    %937 = vmatmul.mubr.bf16.gmra.mrb[0].mxu0 %v866
    %v938 = vpop.f32.mrb[0].mxu0
    %v939 = vadd.f32 %v842, %v938
    %v940 = vpop.f32.mrb[0].mxu0
    %v941 = vpop.f32.mrb[0].mxu0
    %v942 = vadd.f32 %v842, %v941
    %v943 = vpop.f32.mrb[0].mxu0
    %944 = vmatprep.mubr.bf16.mxu0 0
    %945 = vmatmul.mubr.bf16.gmra.mrb[0].mxu0 %v869
    %v946 = vpop.f32.mrb[0].mxu0
    %v947 = vadd.f32 %v842, %v946
    %v948 = vpop.f32.mrb[0].mxu0
    %v949 = vpop.f32.mrb[0].mxu0
    %v950 = vadd.f32 %v842, %v949
    %v951 = vpop.f32.mrb[0].mxu0
    %952 = vmatprep.mubr.bf16.mxu0 0
    %953 = vmatmul.mubr.bf16.gmra.mrb[0].mxu0 %v872
    %v954 = vpop.f32.mrb[0].mxu0
    %v955 = vadd.f32 %v842, %v954
    %v956 = vpop.f32.mrb[0].mxu0
    %v957 = vpop.f32.mrb[0].mxu0
    %v958 = vadd.f32 %v842, %v957
    %v959 = vpop.f32.mrb[0].mxu0
    %960 = vmatprep.mubr.bf16.mxu0 0
    %961 = vmatmul.mubr.bf16.gmra.mrb[0].mxu0 %v875
    %v962 = vpop.f32.mrb[0].mxu0
    %v963 = vadd.f32 %v842, %v962
    %v964 = vpop.f32.mrb[0].mxu0
    %v965 = vpop.f32.mrb[0].mxu0
    %v966 = vadd.f32 %v842, %v965
    %v967 = vpop.f32.mrb[0].mxu0
    %968 = vmatprep.mubr.bf16.mxu0 0
    %969 = vmatmul.mubr.bf16.gmra.mrb[0].mxu0 %v878
    %v970 = vpop.f32.mrb[0].mxu0
    %v971 = vadd.f32 %v842, %v970
    %v972 = vpop.f32.mrb[0].mxu0
    %v973 = vpop.f32.mrb[0].mxu0
    %v974 = vadd.f32 %v842, %v973
    %v975 = vpop.f32.mrb[0].mxu0
    %976 = vdwg.mxu0
    %v977 = vmax.f32 %v915, 0.0
    %v978 = vmax.f32 %v918, 0.0
    %v979 = vmax.f32 %v923, 0.0
    %v980 = vmax.f32 %v926, 0.0
    %v981 = vmax.f32 %v931, 0.0
    %v982 = vmax.f32 %v934, 0.0
    %v983 = vmax.f32 %v939, 0.0
    %v984 = vmax.f32 %v942, 0.0
    %v985 = vmax.f32 %v947, 0.0
    %v986 = vmax.f32 %v950, 0.0
    %v987 = vmax.f32 %v955, 0.0
    %v988 = vmax.f32 %v958, 0.0
    %v989 = vmax.f32 %v963, 0.0
    %v990 = vmax.f32 %v966, 0.0
    %v991 = vmax.f32 %v971, 0.0
    %v992 = vmax.f32 %v974, 0.0
    %vm993 = vcmask 523264
    %994 = vst.msk [vmem:[#allocation2] sm:$0xff] %vm993, 0.0
    %vm995 = vcmask 517120
    %996 = vst.msk [vmem:[#allocation2 + $0x8] sm:$0x3] %vm995, 0.0
    %997 = vst.msk [vmem:[#allocation2 + $0x10] sm:$0xff] %vm993, 0.0
    %998 = vst.msk [vmem:[#allocation2 + $0x18] sm:$0x3] %vm995, 0.0
    %999 = vst.msk [vmem:[#allocation2 + $0x20] sm:$0xff] %vm993, 0.0
    %1000 = vst.msk [vmem:[#allocation2 + $0x28] sm:$0x3] %vm995, 0.0
    %1001 = vst.msk [vmem:[#allocation2 + $0x30] sm:$0xff] %vm993, 0.0
    %1002 = vst.msk [vmem:[#allocation2 + $0x38] sm:$0x3] %vm995, 0.0
    %1003 = vst.msk [vmem:[#allocation2 + $0x40] sm:$0xff] %vm993, 0.0
    %1004 = vst.msk [vmem:[#allocation2 + $0x48] sm:$0x3] %vm995, 0.0
    %1005 = vst.msk [vmem:[#allocation2 + $0x50] sm:$0xff] %vm993, 0.0
    %1006 = vst.msk [vmem:[#allocation2 + $0x58] sm:$0x3] %vm995, 0.0
    %1007 = vst.msk [vmem:[#allocation2 + $0x60] sm:$0xff] %vm993, 0.0
    %1008 = vst.msk [vmem:[#allocation2 + $0x68] sm:$0x3] %vm995, 0.0
    %1009 = vst.msk [vmem:[#allocation2 + $0x70] sm:$0xff] %vm993, 0.0
    %1010 = vst.msk [vmem:[#allocation2 + $0x78] sm:$0x3] %vm995, 0.0
    %1011 = vst.msk [vmem:[#allocation2 + $0x80] sm:$0xff] %vm993, 0.0
    %1012 = vst.msk [vmem:[#allocation2 + $0x88] sm:$0x3] %vm995, 0.0
    %1013 = vst.msk [vmem:[#allocation2 + $0x90] sm:$0xff] %vm993, 0.0
    %1014 = vst.msk [vmem:[#allocation2 + $0x98] sm:$0x3] %vm995, 0.0
    %1015 = vst.msk [vmem:[#allocation2 + $0xa0] sm:$0xff] %vm993, 0.0
    %1016 = vst.msk [vmem:[#allocation2 + $0xa8] sm:$0x3] %vm995, 0.0
    %1017 = vst.msk [vmem:[#allocation2 + $0xb0] sm:$0xff] %vm993, 0.0
    %1018 = vst.msk [vmem:[#allocation2 + $0xb8] sm:$0x3] %vm995, 0.0
    %1019 = vst.msk [vmem:[#allocation2 + $0xc0] sm:$0xff] %vm993, 0.0
    %1020 = vst.msk [vmem:[#allocation2 + $0xc8] sm:$0x3] %vm995, 0.0
    %1021 = vst.msk [vmem:[#allocation2 + $0xd0] sm:$0xff] %vm993, 0.0
    %1022 = vst.msk [vmem:[#allocation2 + $0xd8] sm:$0x3] %vm995, 0.0
    %1023 = vst.msk [vmem:[#allocation2 + $0xe0] sm:$0xff] %vm993, 0.0
    %1024 = vst.msk [vmem:[#allocation2 + $0xe8] sm:$0x3] %vm995, 0.0
    %1025 = vst.msk [vmem:[#allocation2 + $0xf0] sm:$0xff] %vm993, 0.0
    %1026 = vst.msk [vmem:[#allocation2 + $0xf8] sm:$0x3] %vm995, 0.0
    %1027 = vst.msk [vmem:[#allocation2 + $0x100] sm:$0xff] %vm993, 0.0
    %1028 = vst.msk [vmem:[#allocation2 + $0x108] sm:$0x3] %vm995, 0.0
    %1029 = vst.msk [vmem:[#allocation2 + $0x110] sm:$0xff] %vm993, 0.0
    %1030 = vst.msk [vmem:[#allocation2 + $0x118] sm:$0x3] %vm995, 0.0
    %1031 = vst.msk [vmem:[#allocation2 + $0x120] sm:$0xff] %vm993, 0.0
    %1032 = vst.msk [vmem:[#allocation2 + $0x128] sm:$0x3] %vm995, 0.0
    %1033 = vst.msk [vmem:[#allocation2 + $0x130] sm:$0xff] %vm993, 0.0
    %1034 = vst.msk [vmem:[#allocation2 + $0x138] sm:$0x3] %vm995, 0.0
    %1035 = vst.msk [vmem:[%s291 + $0x1] sm:$0xff] %vm993, %v977
    %1036 = vst.msk [vmem:[%s291 + $0x11] sm:$0xff] %vm993, %v978
    %1037 = vst.msk [vmem:[%s291 + $0x21] sm:$0xff] %vm993, %v979
    %1038 = vst.msk [vmem:[%s291 + $0x31] sm:$0xff] %vm993, %v980
    %1039 = vst.msk [vmem:[%s291 + $0x41] sm:$0xff] %vm993, %v981
    %1040 = vst.msk [vmem:[%s291 + $0x51] sm:$0xff] %vm993, %v982
    %1041 = vst.msk [vmem:[%s291 + $0x61] sm:$0xff] %vm993, %v983
    %1042 = vst.msk [vmem:[%s291 + $0x71] sm:$0xff] %vm993, %v984
    %1043 = vst.msk [vmem:[%s291 + $0xa1] sm:$0xff] %vm993, %v985
    %1044 = vst.msk [vmem:[%s291 + $0xb1] sm:$0xff] %vm993, %v986
    %1045 = vst.msk [vmem:[%s291 + $0xc1] sm:$0xff] %vm993, %v987
    %1046 = vst.msk [vmem:[%s291 + $0xd1] sm:$0xff] %vm993, %v988
    %1047 = vst.msk [vmem:[%s291 + $0xe1] sm:$0xff] %vm993, %v989
    %1048 = vst.msk [vmem:[%s291 + $0xf1] sm:$0xff] %vm993, %v990
    %1049 = vst.msk [vmem:[%s291 + $0x101] sm:$0xff] %vm993, %v991
    %1050 = vst.msk [vmem:[%s291 + $0x111] sm:$0xff] %vm993, %v992
    %v1051 = vld [vmem:[#allocation2] ss:$2 sm:$0xf]
    %s1052 = scalar_lea.vmem [#allocation2], 32
    %v1053 = vld [vmem:[%s1052] ss:$2 sm:$0xf]
    %s1054 = scalar_lea.vmem [#allocation2], 64
    %v1055 = vld [vmem:[%s1054] ss:$2 sm:$0xf]
    %s1056 = scalar_lea.vmem [#allocation2], 96
    %v1057 = vld [vmem:[%s1056] ss:$2 sm:$0xf]
    %s1058 = scalar_lea.vmem [#allocation2], 160
    %v1059 = vld [vmem:[%s1058] ss:$2 sm:$0xf]
    %s1060 = scalar_lea.vmem [#allocation2], 192
    %v1061 = vld [vmem:[%s1060] ss:$2 sm:$0xf]
    %s1062 = scalar_lea.vmem [#allocation2], 224
    %v1063 = vld [vmem:[%s1062] ss:$2 sm:$0xf]
    %s1064 = scalar_lea.vmem [#allocation2], 256
    %v1065 = vld [vmem:[%s1064] ss:$2 sm:$0xf]
    %v1066 = vld [vmem:[%s7] sm:$0x1]
    %v1067 = vlaneseq
    %v1068 = vshrl.u32 %v1067, 7
    %v1069 = vsub.s32 0, %v1068
    %v1070 = vrot.slane %v1066, %v1069
    %v1071 = vmul.f32 %v1051, %v1070
    %v1072 = vmul.f32 %v1053, %v1070
    %v1073 = vmul.f32 %v1055, %v1070
    %v1074 = vmul.f32 %v1057, %v1070
    %v1075 = vmul.f32 %v1059, %v1070
    %v1076 = vmul.f32 %v1061, %v1070
    %v1077 = vmul.f32 %v1063, %v1070
    %v1078 = vmul.f32 %v1065, %v1070
    %v1079 = vadd.f32 %v1071, 0.0
    %v1080 = vadd.f32 %v1072, 0.0
    %v1081 = vadd.f32 %v1073, 0.0
    %v1082 = vadd.f32 %v1074, 0.0
    %v1083 = vadd.f32 %v1075, 0.0
    %v1084 = vadd.f32 %v1076, 0.0
    %v1085 = vadd.f32 %v1077, 0.0
    %v1086 = vadd.f32 %v1078, 0.0
    %s1087 = scalar_lea.vmem [#allocation2], 1
    %v1088 = vld [vmem:[%s1087] ss:$2 sm:$0xf]
    %s1089 = scalar_lea.vmem [#allocation2], 33
    %v1090 = vld [vmem:[%s1089] ss:$2 sm:$0xf]
    %s1091 = scalar_lea.vmem [#allocation2], 65
    %v1092 = vld [vmem:[%s1091] ss:$2 sm:$0xf]
    %s1093 = scalar_lea.vmem [#allocation2], 97
    %v1094 = vld [vmem:[%s1093] ss:$2 sm:$0xf]
    %s1095 = scalar_lea.vmem [#allocation2], 161
    %v1096 = vld [vmem:[%s1095] ss:$2 sm:$0xf]
    %s1097 = scalar_lea.vmem [#allocation2], 193
    %v1098 = vld [vmem:[%s1097] ss:$2 sm:$0xf]
    %s1099 = scalar_lea.vmem [#allocation2], 225
    %v1100 = vld [vmem:[%s1099] ss:$2 sm:$0xf]
    %s1101 = scalar_lea.vmem [#allocation2], 257
    %v1102 = vld [vmem:[%s1101] ss:$2 sm:$0xf]
    %v1103 = vld [vmem:[%s7 + $0x1] sm:$0x1]
    %v1104 = vlaneseq
    %v1105 = vshrl.u32 %v1104, 7
    %v1106 = vsub.s32 0, %v1105
    %v1107 = vrot.slane %v1103, %v1106
    %v1108 = vmul.f32 %v1088, %v1107
    %v1109 = vmul.f32 %v1090, %v1107
    %v1110 = vmul.f32 %v1092, %v1107
    %v1111 = vmul.f32 %v1094, %v1107
    %v1112 = vmul.f32 %v1096, %v1107
    %v1113 = vmul.f32 %v1098, %v1107
    %v1114 = vmul.f32 %v1100, %v1107
    %v1115 = vmul.f32 %v1102, %v1107
    %v1116 = vadd.f32 %v1079, %v1108
    %v1117 = vadd.f32 %v1080, %v1109
    %v1118 = vadd.f32 %v1081, %v1110
    %v1119 = vadd.f32 %v1082, %v1111
    %v1120 = vadd.f32 %v1083, %v1112
    %v1121 = vadd.f32 %v1084, %v1113
    %v1122 = vadd.f32 %v1085, %v1114
    %v1123 = vadd.f32 %v1086, %v1115
    %s1124 = scalar_lea.vmem [#allocation2], 2
    %v1125 = vld [vmem:[%s1124] ss:$2 sm:$0xf]
    %s1126 = scalar_lea.vmem [#allocation2], 34
    %v1127 = vld [vmem:[%s1126] ss:$2 sm:$0xf]
    %s1128 = scalar_lea.vmem [#allocation2], 66
    %v1129 = vld [vmem:[%s1128] ss:$2 sm:$0xf]
    %s1130 = scalar_lea.vmem [#allocation2], 98
    %v1131 = vld [vmem:[%s1130] ss:$2 sm:$0xf]
    %s1132 = scalar_lea.vmem [#allocation2], 162
    %v1133 = vld [vmem:[%s1132] ss:$2 sm:$0xf]
    %s1134 = scalar_lea.vmem [#allocation2], 194
    %v1135 = vld [vmem:[%s1134] ss:$2 sm:$0xf]
    %s1136 = scalar_lea.vmem [#allocation2], 226
    %v1137 = vld [vmem:[%s1136] ss:$2 sm:$0xf]
    %s1138 = scalar_lea.vmem [#allocation2], 258
    %v1139 = vld [vmem:[%s1138] ss:$2 sm:$0xf]
    %v1140 = vld [vmem:[%s7 + $0x2] sm:$0x1]
    %v1141 = vlaneseq
    %v1142 = vshrl.u32 %v1141, 7
    %v1143 = vsub.s32 0, %v1142
    %v1144 = vrot.slane %v1140, %v1143
    %v1145 = vmul.f32 %v1125, %v1144
    %v1146 = vmul.f32 %v1127, %v1144
    %v1147 = vmul.f32 %v1129, %v1144
    %v1148 = vmul.f32 %v1131, %v1144
    %v1149 = vmul.f32 %v1133, %v1144
    %v1150 = vmul.f32 %v1135, %v1144
    %v1151 = vmul.f32 %v1137, %v1144
    %v1152 = vmul.f32 %v1139, %v1144
    %v1153 = vadd.f32 %v1116, %v1145
    %v1154 = vadd.f32 %v1117, %v1146
    %v1155 = vadd.f32 %v1118, %v1147
    %v1156 = vadd.f32 %v1119, %v1148
    %v1157 = vadd.f32 %v1120, %v1149
    %v1158 = vadd.f32 %v1121, %v1150
    %v1159 = vadd.f32 %v1122, %v1151
    %v1160 = vadd.f32 %v1123, %v1152
    %v1161 = vld [vmem:[%s291] ss:$2 sm:$0xf]
    %s1162 = scalar_lea.vmem %s291, 32 [#allocation2]
    %v1163 = vld [vmem:[%s1162] ss:$2 sm:$0xf]
    %s1164 = scalar_lea.vmem %s291, 64 [#allocation2]
    %v1165 = vld [vmem:[%s1164] ss:$2 sm:$0xf]
    %s1166 = scalar_lea.vmem %s291, 96 [#allocation2]
    %v1167 = vld [vmem:[%s1166] ss:$2 sm:$0xf]
    %s1168 = scalar_lea.vmem %s291, 160 [#allocation2]
    %v1169 = vld [vmem:[%s1168] ss:$2 sm:$0xf]
    %s1170 = scalar_lea.vmem %s291, 192 [#allocation2]
    %v1171 = vld [vmem:[%s1170] ss:$2 sm:$0xf]
    %s1172 = scalar_lea.vmem %s291, 224 [#allocation2]
    %v1173 = vld [vmem:[%s1172] ss:$2 sm:$0xf]
    %s1174 = scalar_lea.vmem %s291, 256 [#allocation2]
    %v1175 = vld [vmem:[%s1174] ss:$2 sm:$0xf]
    %v1176 = vld [vmem:[%s7 + $0x3] sm:$0x1]
    %v1177 = vlaneseq
    %v1178 = vshrl.u32 %v1177, 7
    %v1179 = vsub.s32 0, %v1178
    %v1180 = vrot.slane %v1176, %v1179
    %v1181 = vmul.f32 %v1161, %v1180
    %v1182 = vmul.f32 %v1163, %v1180
    %v1183 = vmul.f32 %v1165, %v1180
    %v1184 = vmul.f32 %v1167, %v1180
    %v1185 = vmul.f32 %v1169, %v1180
    %v1186 = vmul.f32 %v1171, %v1180
    %v1187 = vmul.f32 %v1173, %v1180
    %v1188 = vmul.f32 %v1175, %v1180
    %v1189 = vadd.f32 %v1153, %v1181
    %v1190 = vadd.f32 %v1154, %v1182
    %v1191 = vadd.f32 %v1155, %v1183
    %v1192 = vadd.f32 %v1156, %v1184
    %v1193 = vadd.f32 %v1157, %v1185
    %v1194 = vadd.f32 %v1158, %v1186
    %v1195 = vadd.f32 %v1159, %v1187
    %v1196 = vadd.f32 %v1160, %v1188
    %s1197 = scalar_lea.vmem %s291, 1 [#allocation2]
    %v1198 = vld [vmem:[%s1197] ss:$2 sm:$0xf]
    %s1199 = scalar_lea.vmem %s291, 33 [#allocation2]
    %v1200 = vld [vmem:[%s1199] ss:$2 sm:$0xf]
    %s1201 = scalar_lea.vmem %s291, 65 [#allocation2]
    %v1202 = vld [vmem:[%s1201] ss:$2 sm:$0xf]
    %s1203 = scalar_lea.vmem %s291, 97 [#allocation2]
    %v1204 = vld [vmem:[%s1203] ss:$2 sm:$0xf]
    %s1205 = scalar_lea.vmem %s291, 161 [#allocation2]
    %v1206 = vld [vmem:[%s1205] ss:$2 sm:$0xf]
    %s1207 = scalar_lea.vmem %s291, 193 [#allocation2]
    %v1208 = vld [vmem:[%s1207] ss:$2 sm:$0xf]
    %s1209 = scalar_lea.vmem %s291, 225 [#allocation2]
    %v1210 = vld [vmem:[%s1209] ss:$2 sm:$0xf]
    %s1211 = scalar_lea.vmem %s291, 257 [#allocation2]
    %v1212 = vld [vmem:[%s1211] ss:$2 sm:$0xf]
    %v1213 = vld [vmem:[%s7 + $0x4] sm:$0x1]
    %v1214 = vlaneseq
    %v1215 = vshrl.u32 %v1214, 7
    %v1216 = vsub.s32 0, %v1215
    %v1217 = vrot.slane %v1213, %v1216
    %v1218 = vmul.f32 %v1198, %v1217
    %v1219 = vmul.f32 %v1200, %v1217
    %v1220 = vmul.f32 %v1202, %v1217
    %v1221 = vmul.f32 %v1204, %v1217
    %v1222 = vmul.f32 %v1206, %v1217
    %v1223 = vmul.f32 %v1208, %v1217
    %v1224 = vmul.f32 %v1210, %v1217
    %v1225 = vmul.f32 %v1212, %v1217
    %v1226 = vadd.f32 %v1189, %v1218
    %v1227 = vadd.f32 %v1190, %v1219
    %v1228 = vadd.f32 %v1191, %v1220
    %v1229 = vadd.f32 %v1192, %v1221
    %v1230 = vadd.f32 %v1193, %v1222
    %v1231 = vadd.f32 %v1194, %v1223
    %v1232 = vadd.f32 %v1195, %v1224
    %v1233 = vadd.f32 %v1196, %v1225
    %s1234 = scalar_lea.vmem %s291, 2 [#allocation2]
    %v1235 = vld [vmem:[%s1234] ss:$2 sm:$0xf]
    %s1236 = scalar_lea.vmem %s291, 34 [#allocation2]
    %v1237 = vld [vmem:[%s1236] ss:$2 sm:$0xf]
    %s1238 = scalar_lea.vmem %s291, 66 [#allocation2]
    %v1239 = vld [vmem:[%s1238] ss:$2 sm:$0xf]
    %s1240 = scalar_lea.vmem %s291, 98 [#allocation2]
    %v1241 = vld [vmem:[%s1240] ss:$2 sm:$0xf]
    %s1242 = scalar_lea.vmem %s291, 162 [#allocation2]
    %v1243 = vld [vmem:[%s1242] ss:$2 sm:$0xf]
    %s1244 = scalar_lea.vmem %s291, 194 [#allocation2]
    %v1245 = vld [vmem:[%s1244] ss:$2 sm:$0xf]
    %s1246 = scalar_lea.vmem %s291, 226 [#allocation2]
    %v1247 = vld [vmem:[%s1246] ss:$2 sm:$0xf]
    %s1248 = scalar_lea.vmem %s291, 258 [#allocation2]
    %v1249 = vld [vmem:[%s1248] ss:$2 sm:$0xf]
    %v1250 = vld [vmem:[%s7 + $0x5] sm:$0x1]
    %v1251 = vlaneseq
    %v1252 = vshrl.u32 %v1251, 7
    %v1253 = vsub.s32 0, %v1252
    %v1254 = vrot.slane %v1250, %v1253
    %v1255 = vmul.f32 %v1235, %v1254
    %v1256 = vmul.f32 %v1237, %v1254
    %v1257 = vmul.f32 %v1239, %v1254
    %v1258 = vmul.f32 %v1241, %v1254
    %v1259 = vmul.f32 %v1243, %v1254
    %v1260 = vmul.f32 %v1245, %v1254
    %v1261 = vmul.f32 %v1247, %v1254
    %v1262 = vmul.f32 %v1249, %v1254
    %v1263 = vadd.f32 %v1226, %v1255
    %v1264 = vadd.f32 %v1227, %v1256
    %v1265 = vadd.f32 %v1228, %v1257
    %v1266 = vadd.f32 %v1229, %v1258
    %v1267 = vadd.f32 %v1230, %v1259
    %v1268 = vadd.f32 %v1231, %v1260
    %v1269 = vadd.f32 %v1232, %v1261
    %v1270 = vadd.f32 %v1233, %v1262
    %v1271 = vld [vmem:[%s626] ss:$2 sm:$0xf]
    %s1272 = scalar_lea.vmem %s626, 32 [#allocation2]
    %v1273 = vld [vmem:[%s1272] ss:$2 sm:$0xf]
    %s1274 = scalar_lea.vmem %s626, 64 [#allocation2]
    %v1275 = vld [vmem:[%s1274] ss:$2 sm:$0xf]
    %s1276 = scalar_lea.vmem %s626, 96 [#allocation2]
    %v1277 = vld [vmem:[%s1276] ss:$2 sm:$0xf]
    %s1278 = scalar_lea.vmem %s626, 160 [#allocation2]
    %v1279 = vld [vmem:[%s1278] ss:$2 sm:$0xf]
    %s1280 = scalar_lea.vmem %s626, 192 [#allocation2]
    %v1281 = vld [vmem:[%s1280] ss:$2 sm:$0xf]
    %s1282 = scalar_lea.vmem %s626, 224 [#allocation2]
    %v1283 = vld [vmem:[%s1282] ss:$2 sm:$0xf]
    %s1284 = scalar_lea.vmem %s626, 256 [#allocation2]
    %v1285 = vld [vmem:[%s1284] ss:$2 sm:$0xf]
    %v1286 = vld [vmem:[%s7 + $0x6] sm:$0x1]
    %v1287 = vlaneseq
    %v1288 = vshrl.u32 %v1287, 7
    %v1289 = vsub.s32 0, %v1288
    %v1290 = vrot.slane %v1286, %v1289
    %v1291 = vmul.f32 %v1271, %v1290
    %v1292 = vmul.f32 %v1273, %v1290
    %v1293 = vmul.f32 %v1275, %v1290
    %v1294 = vmul.f32 %v1277, %v1290
    %v1295 = vmul.f32 %v1279, %v1290
    %v1296 = vmul.f32 %v1281, %v1290
    %v1297 = vmul.f32 %v1283, %v1290
    %v1298 = vmul.f32 %v1285, %v1290
    %v1299 = vadd.f32 %v1263, %v1291
    %v1300 = vadd.f32 %v1264, %v1292
    %v1301 = vadd.f32 %v1265, %v1293
    %v1302 = vadd.f32 %v1266, %v1294
    %v1303 = vadd.f32 %v1267, %v1295
    %v1304 = vadd.f32 %v1268, %v1296
    %v1305 = vadd.f32 %v1269, %v1297
    %v1306 = vadd.f32 %v1270, %v1298
    %s1307 = scalar_lea.vmem %s626, 1 [#allocation2]
    %v1308 = vld [vmem:[%s1307] ss:$2 sm:$0xf]
    %s1309 = scalar_lea.vmem %s626, 33 [#allocation2]
    %v1310 = vld [vmem:[%s1309] ss:$2 sm:$0xf]
    %s1311 = scalar_lea.vmem %s626, 65 [#allocation2]
    %v1312 = vld [vmem:[%s1311] ss:$2 sm:$0xf]
    %s1313 = scalar_lea.vmem %s626, 97 [#allocation2]
    %v1314 = vld [vmem:[%s1313] ss:$2 sm:$0xf]
    %s1315 = scalar_lea.vmem %s626, 161 [#allocation2]
    %v1316 = vld [vmem:[%s1315] ss:$2 sm:$0xf]
    %s1317 = scalar_lea.vmem %s626, 193 [#allocation2]
    %v1318 = vld [vmem:[%s1317] ss:$2 sm:$0xf]
    %s1319 = scalar_lea.vmem %s626, 225 [#allocation2]
    %v1320 = vld [vmem:[%s1319] ss:$2 sm:$0xf]
    %s1321 = scalar_lea.vmem %s626, 257 [#allocation2]
    %v1322 = vld [vmem:[%s1321] ss:$2 sm:$0xf]
    %v1323 = vld [vmem:[%s7 + $0x7] sm:$0x1]
    %v1324 = vlaneseq
    %v1325 = vshrl.u32 %v1324, 7
    %v1326 = vsub.s32 0, %v1325
    %v1327 = vrot.slane %v1323, %v1326
    %v1328 = vmul.f32 %v1308, %v1327
    %v1329 = vmul.f32 %v1310, %v1327
    %v1330 = vmul.f32 %v1312, %v1327
    %v1331 = vmul.f32 %v1314, %v1327
    %v1332 = vmul.f32 %v1316, %v1327
    %v1333 = vmul.f32 %v1318, %v1327
    %v1334 = vmul.f32 %v1320, %v1327
    %v1335 = vmul.f32 %v1322, %v1327
    %v1336 = vadd.f32 %v1299, %v1328
    %v1337 = vadd.f32 %v1300, %v1329
    %v1338 = vadd.f32 %v1301, %v1330
    %v1339 = vadd.f32 %v1302, %v1331
    %v1340 = vadd.f32 %v1303, %v1332
    %v1341 = vadd.f32 %v1304, %v1333
    %v1342 = vadd.f32 %v1305, %v1334
    %v1343 = vadd.f32 %v1306, %v1335
    %s1344 = scalar_lea.vmem %s626, 2 [#allocation2]
    %v1345 = vld [vmem:[%s1344] ss:$2 sm:$0xf]
    %s1346 = scalar_lea.vmem %s626, 34 [#allocation2]
    %v1347 = vld [vmem:[%s1346] ss:$2 sm:$0xf]
    %s1348 = scalar_lea.vmem %s626, 66 [#allocation2]
    %v1349 = vld [vmem:[%s1348] ss:$2 sm:$0xf]
    %s1350 = scalar_lea.vmem %s626, 98 [#allocation2]
    %v1351 = vld [vmem:[%s1350] ss:$2 sm:$0xf]
    %s1352 = scalar_lea.vmem %s626, 162 [#allocation2]
    %v1353 = vld [vmem:[%s1352] ss:$2 sm:$0xf]
    %s1354 = scalar_lea.vmem %s626, 194 [#allocation2]
    %v1355 = vld [vmem:[%s1354] ss:$2 sm:$0xf]
    %s1356 = scalar_lea.vmem %s626, 226 [#allocation2]
    %v1357 = vld [vmem:[%s1356] ss:$2 sm:$0xf]
    %s1358 = scalar_lea.vmem %s626, 258 [#allocation2]
    %v1359 = vld [vmem:[%s1358] ss:$2 sm:$0xf]
    %v1360 = vld [vmem:[%s7 + $0x8] sm:$0x1]
    %v1361 = vlaneseq
    %v1362 = vshrl.u32 %v1361, 7
    %v1363 = vsub.s32 0, %v1362
    %v1364 = vrot.slane %v1360, %v1363
    %v1365 = vmul.f32 %v1345, %v1364
    %v1366 = vmul.f32 %v1347, %v1364
    %v1367 = vmul.f32 %v1349, %v1364
    %v1368 = vmul.f32 %v1351, %v1364
    %v1369 = vmul.f32 %v1353, %v1364
    %v1370 = vmul.f32 %v1355, %v1364
    %v1371 = vmul.f32 %v1357, %v1364
    %v1372 = vmul.f32 %v1359, %v1364
    %v1373 = vadd.f32 %v1336, %v1365
    %v1374 = vadd.f32 %v1337, %v1366
    %v1375 = vadd.f32 %v1338, %v1367
    %v1376 = vadd.f32 %v1339, %v1368
    %v1377 = vadd.f32 %v1340, %v1369
    %v1378 = vadd.f32 %v1341, %v1370
    %v1379 = vadd.f32 %v1342, %v1371
    %v1380 = vadd.f32 %v1343, %v1372
    %v1381 = vld [vmem:[%s8] sm:$0x1]
    %v1383 = vlaneseq
    %v1384 = vshrl.u32 %v1383, 7
    %v1385 = vsub.s32 0, %v1384
    %v1386 = vrot.slane %v1381, %v1385
    %v1388 = vadd.f32 %v1373, %v1386
    %v1389 = vadd.f32 %v1374, %v1386
    %v1390 = vadd.f32 %v1375, %v1386
    %v1391 = vadd.f32 %v1376, %v1386
    %v1392 = vadd.f32 %v1377, %v1386
    %v1393 = vadd.f32 %v1378, %v1386
    %v1394 = vadd.f32 %v1379, %v1386
    %v1395 = vadd.f32 %v1380, %v1386
    %v1396 = vmax.f32 %v1388, 0.0
    %v1397 = vmax.f32 %v1389, 0.0
    %v1398 = vmax.f32 %v1390, 0.0
    %v1399 = vmax.f32 %v1391, 0.0
    %v1400 = vmax.f32 %v1392, 0.0
    %v1401 = vmax.f32 %v1393, 0.0
    %v1402 = vmax.f32 %v1394, 0.0
    %v1403 = vmax.f32 %v1395, 0.0
    %v1412 = vcombine.low %v1396, %v1397
    %v1413 = vcombine.low %v1398, %v1399
    %v1414 = vcombine.low %v1400, %v1401
    %v1415 = vcombine.low %v1402, %v1403
    %v1420 = vpack.c.bf16 %v1413, %v1412
    %v1421 = vpack.c.bf16 %v1415, %v1414
    %v1422 = vld [vmem:[%s9] sm:$0xf]
    %v1423 = vld [vmem:[%s9 + $0x4] sm:$0xf]
    %v1424 = vld [vmem:[%s9 + $0x8] sm:$0xf]
    %v1425 = vld [vmem:[%s9 + $0xc] sm:$0xf]
    %v1426 = vld [vmem:[%s9 + $0x10] sm:$0xf]
    %v1427 = vld [vmem:[%s9 + $0x14] sm:$0xf]
    %v1428 = vld [vmem:[%s9 + $0x18] sm:$0xf]
    %v1429 = vld [vmem:[%s9 + $0x1c] sm:$0xf]
    %v1430 = vld [vmem:[%s10] sm:$0x1]
    %v1432 = vlaneseq
    %v1433 = vshrl.u32 %v1432, 7
    %v1434 = vsub.s32 0, %v1433
    %v1435 = vrot.slane %v1430, %v1434
    %v1445 = vunpack.c.l.b16 %v1422
    %v1446 = vunpack.c.l.b16 %v1423
    %v1447 = vunpack.c.l.b16 %v1424
    %v1448 = vunpack.c.l.b16 %v1425
    %v1449 = vunpack.c.l.b16 %v1426
    %v1450 = vunpack.c.l.b16 %v1427
    %v1451 = vunpack.c.l.b16 %v1428
    %v1452 = vunpack.c.l.b16 %v1429
    %v1453 = vpack.c.b16 %v1446, %v1445
    %v1454 = vpack.c.b16 %v1448, %v1447
    %v1455 = vpack.c.b16 %v1450, %v1449
    %v1456 = vpack.c.b16 %v1452, %v1451
    %v1462 = vsel %vm993, %v1420, 0
    %v1465 = vsel %vm993, %v1421, 0
    %1467 = vmatprep.subr.bf16.mxu0 0
    %1468 = vmatpush1.bf16.msra.mxu0 %v1453
    %1469 = vmatprep.subr.bf16.mxu0 0
    %1470 = vmatpush1.bf16.msra.mxu0 %v1454
    %1471 = vmatprep.subr.bf16.mxu0 0
    %1472 = vmatpush1.bf16.msra.mxu0 %v1455
    %1473 = vmatprep.subr.bf16.mxu0 0
    %1474 = vmatpush1.bf16.msra.mxu0 %v1456
    %1475 = vmatprep.subr.bf16.mxu0 0
    %1476 = vmatpush1.bf16.msra.mxu0 0
    %1477 = vmatprep.subr.bf16.mxu0 0
    %1478 = vmatpush1.bf16.msra.mxu0 0
    %1479 = vmatprep.subr.bf16.mxu0 0
    %1480 = vmatpush1.bf16.msra.mxu0 0
    %1481 = vmatprep.subr.bf16.mxu0 0
    %1482 = vmatpush1.bf16.msra.mxu0 0
    %1483 = vmatprep.subr.bf16.mxu0 0
    %1484 = vmatpush1.bf16.msra.mxu0 0
    %1485 = vmatprep.subr.bf16.mxu0 0
    %1486 = vmatpush1.bf16.msra.mxu0 0
    %1487 = vmatprep.subr.bf16.mxu0 0
    %1488 = vmatpush1.bf16.msra.mxu0 0
    %1489 = vmatprep.subr.bf16.mxu0 0
    %1490 = vmatpush1.bf16.msra.mxu0 0
    %1491 = vmatprep.subr.bf16.mxu0 0
    %1492 = vmatpush1.bf16.msra.mxu0 0
    %1493 = vmatprep.subr.bf16.mxu0 0
    %1494 = vmatpush1.bf16.msra.mxu0 0
    %1495 = vmatprep.subr.bf16.mxu0 0
    %1496 = vmatpush1.bf16.msra.mxu0 0
    %1497 = vmatprep.subr.bf16.mxu0 0
    %1498 = vmatpush1.bf16.msra.mxu0 0
    %1499 = vmatprep.mubr.bf16.mxu0 0
    %1500 = vmatmul.mubr.bf16.gmra.mrb[0].mxu0 %v1462
    %v1501 = vpop.f32.mrb[0].mxu0
    %v1502 = vadd.f32 %v1435, %v1501
    %v1503 = vpop.f32.mrb[0].mxu0
    %v1504 = vpop.f32.mrb[0].mxu0
    %v1505 = vadd.f32 %v1435, %v1504
    %v1506 = vpop.f32.mrb[0].mxu0
    %1507 = vmatprep.mubr.bf16.mxu0 0
    %1508 = vmatmul.mubr.bf16.gmra.mrb[0].mxu0 %v1465
    %v1509 = vpop.f32.mrb[0].mxu0
    %v1510 = vadd.f32 %v1435, %v1509
    %v1511 = vpop.f32.mrb[0].mxu0
    %v1512 = vpop.f32.mrb[0].mxu0
    %v1513 = vadd.f32 %v1435, %v1512
    %v1514 = vpop.f32.mrb[0].mxu0
    %1515 = vdwg.mxu0
    %v1516 = vmax.f32 %v1502, 0.0
    %v1517 = vmax.f32 %v1505, 0.0
    %v1518 = vmax.f32 %v1510, 0.0
    %v1519 = vmax.f32 %v1513, 0.0
    %1520 = vst [vmem:[#allocation2] sm:$0x3f] 0.0
    %1521 = vst [vmem:[#allocation2 + $0x10] sm:$0x3f] 0.0
    %1522 = vst [vmem:[#allocation2 + $0x20] sm:$0x3f] 0.0
    %1523 = vst [vmem:[#allocation2 + $0x30] sm:$0x3f] 0.0
    %1524 = vst [vmem:[#allocation2 + $0x40] sm:$0x3f] 0.0
    %1525 = vst [vmem:[#allocation2 + $0x50] sm:$0x3f] 0.0
    %1526 = vst [vmem:[#allocation2 + $0xa0] sm:$0x3f] 0.0
    %1527 = vst [vmem:[#allocation2 + $0xb0] sm:$0x3f] 0.0
    %1528 = vst [vmem:[#allocation2 + $0xc0] sm:$0x3f] 0.0
    %1529 = vst [vmem:[#allocation2 + $0xd0] sm:$0x3f] 0.0
    %1530 = vst [vmem:[#allocation2 + $0xe0] sm:$0x3f] 0.0
    %1531 = vst [vmem:[#allocation2 + $0xf0] sm:$0x3f] 0.0
    %v1536 = vcombine.high %v1516, %v1516
    %v1537 = vcombine.high %v1517, %v1517
    %v1538 = vcombine.high %v1518, %v1518
    %v1539 = vcombine.high %v1519, %v1519
    %1544 = vst [vmem:[%s291 + $0x1] sm:$0xf] %v1516
    %1545 = vst [vmem:[%s291 + $0x11] sm:$0xf] %v1536
    %1546 = vst [vmem:[%s291 + $0x21] sm:$0xf] %v1517
    %1547 = vst [vmem:[%s291 + $0x31] sm:$0xf] %v1537
    %1548 = vst [vmem:[%s291 + $0xa1] sm:$0xf] %v1518
    %1549 = vst [vmem:[%s291 + $0xb1] sm:$0xf] %v1538
    %1550 = vst [vmem:[%s291 + $0xc1] sm:$0xf] %v1519
    %1551 = vst [vmem:[%s291 + $0xd1] sm:$0xf] %v1539
    %v1552 = vld [vmem:[#allocation2] ss:$2 sm:$0x3]
    %v1553 = vld [vmem:[%s1052] ss:$2 sm:$0x3]
    %v1554 = vld [vmem:[%s1058] ss:$2 sm:$0x3]
    %v1555 = vld [vmem:[%s1060] ss:$2 sm:$0x3]
    %v1556 = vld [vmem:[%s11] sm:$0x1]
    %v1557 = vlaneseq
    %v1558 = vshrl.u32 %v1557, 7
    %v1559 = vsub.s32 0, %v1558
    %v1560 = vrot.slane %v1556, %v1559
    %v1561 = vmul.f32 %v1552, %v1560
    %v1562 = vmul.f32 %v1553, %v1560
    %v1563 = vmul.f32 %v1554, %v1560
    %v1564 = vmul.f32 %v1555, %v1560
    %v1565 = vadd.f32 %v1561, 0.0
    %v1566 = vadd.f32 %v1562, 0.0
    %v1567 = vadd.f32 %v1563, 0.0
    %v1568 = vadd.f32 %v1564, 0.0
    %v1569 = vld [vmem:[%s1087] ss:$2 sm:$0x3]
    %v1570 = vld [vmem:[%s1089] ss:$2 sm:$0x3]
    %v1571 = vld [vmem:[%s1095] ss:$2 sm:$0x3]
    %v1572 = vld [vmem:[%s1097] ss:$2 sm:$0x3]
    %v1573 = vld [vmem:[%s11 + $0x1] sm:$0x1]
    %v1574 = vlaneseq
    %v1575 = vshrl.u32 %v1574, 7
    %v1576 = vsub.s32 0, %v1575
    %v1577 = vrot.slane %v1573, %v1576
    %v1578 = vmul.f32 %v1569, %v1577
    %v1579 = vmul.f32 %v1570, %v1577
    %v1580 = vmul.f32 %v1571, %v1577
    %v1581 = vmul.f32 %v1572, %v1577
    %v1582 = vadd.f32 %v1565, %v1578
    %v1583 = vadd.f32 %v1566, %v1579
    %v1584 = vadd.f32 %v1567, %v1580
    %v1585 = vadd.f32 %v1568, %v1581
    %v1586 = vld [vmem:[%s1124] ss:$2 sm:$0x3]
    %v1587 = vld [vmem:[%s1126] ss:$2 sm:$0x3]
    %v1588 = vld [vmem:[%s1132] ss:$2 sm:$0x3]
    %v1589 = vld [vmem:[%s1134] ss:$2 sm:$0x3]
    %v1590 = vld [vmem:[%s11 + $0x2] sm:$0x1]
    %v1591 = vlaneseq
    %v1592 = vshrl.u32 %v1591, 7
    %v1593 = vsub.s32 0, %v1592
    %v1594 = vrot.slane %v1590, %v1593
    %v1595 = vmul.f32 %v1586, %v1594
    %v1596 = vmul.f32 %v1587, %v1594
    %v1597 = vmul.f32 %v1588, %v1594
    %v1598 = vmul.f32 %v1589, %v1594
    %v1599 = vadd.f32 %v1582, %v1595
    %v1600 = vadd.f32 %v1583, %v1596
    %v1601 = vadd.f32 %v1584, %v1597
    %v1602 = vadd.f32 %v1585, %v1598
    %v1603 = vld [vmem:[%s291] ss:$2 sm:$0x3]
    %v1604 = vld [vmem:[%s1162] ss:$2 sm:$0x3]
    %v1605 = vld [vmem:[%s1168] ss:$2 sm:$0x3]
    %v1606 = vld [vmem:[%s1170] ss:$2 sm:$0x3]
    %v1607 = vld [vmem:[%s11 + $0x3] sm:$0x1]
    %v1608 = vlaneseq
    %v1609 = vshrl.u32 %v1608, 7
    %v1610 = vsub.s32 0, %v1609
    %v1611 = vrot.slane %v1607, %v1610
    %v1612 = vmul.f32 %v1603, %v1611
    %v1613 = vmul.f32 %v1604, %v1611
    %v1614 = vmul.f32 %v1605, %v1611
    %v1615 = vmul.f32 %v1606, %v1611
    %v1616 = vadd.f32 %v1599, %v1612
    %v1617 = vadd.f32 %v1600, %v1613
    %v1618 = vadd.f32 %v1601, %v1614
    %v1619 = vadd.f32 %v1602, %v1615
    %v1620 = vld [vmem:[%s1197] ss:$2 sm:$0x3]
    %v1621 = vld [vmem:[%s1199] ss:$2 sm:$0x3]
    %v1622 = vld [vmem:[%s1205] ss:$2 sm:$0x3]
    %v1623 = vld [vmem:[%s1207] ss:$2 sm:$0x3]
    %v1624 = vld [vmem:[%s11 + $0x4] sm:$0x1]
    %v1625 = vlaneseq
    %v1626 = vshrl.u32 %v1625, 7
    %v1627 = vsub.s32 0, %v1626
    %v1628 = vrot.slane %v1624, %v1627
    %v1629 = vmul.f32 %v1620, %v1628
    %v1630 = vmul.f32 %v1621, %v1628
    %v1631 = vmul.f32 %v1622, %v1628
    %v1632 = vmul.f32 %v1623, %v1628
    %v1633 = vadd.f32 %v1616, %v1629
    %v1634 = vadd.f32 %v1617, %v1630
    %v1635 = vadd.f32 %v1618, %v1631
    %v1636 = vadd.f32 %v1619, %v1632
    %v1637 = vld [vmem:[%s1234] ss:$2 sm:$0x3]
    %v1638 = vld [vmem:[%s1236] ss:$2 sm:$0x3]
    %v1639 = vld [vmem:[%s1242] ss:$2 sm:$0x3]
    %v1640 = vld [vmem:[%s1244] ss:$2 sm:$0x3]
    %v1641 = vld [vmem:[%s11 + $0x5] sm:$0x1]
    %v1642 = vlaneseq
    %v1643 = vshrl.u32 %v1642, 7
    %v1644 = vsub.s32 0, %v1643
    %v1645 = vrot.slane %v1641, %v1644
    %v1646 = vmul.f32 %v1637, %v1645
    %v1647 = vmul.f32 %v1638, %v1645
    %v1648 = vmul.f32 %v1639, %v1645
    %v1649 = vmul.f32 %v1640, %v1645
    %v1650 = vadd.f32 %v1633, %v1646
    %v1651 = vadd.f32 %v1634, %v1647
    %v1652 = vadd.f32 %v1635, %v1648
    %v1653 = vadd.f32 %v1636, %v1649
    %v1654 = vld [vmem:[%s626] ss:$2 sm:$0x3]
    %v1655 = vld [vmem:[%s1272] ss:$2 sm:$0x3]
    %v1656 = vld [vmem:[%s1278] ss:$2 sm:$0x3]
    %v1657 = vld [vmem:[%s1280] ss:$2 sm:$0x3]
    %v1658 = vld [vmem:[%s11 + $0x6] sm:$0x1]
    %v1659 = vlaneseq
    %v1660 = vshrl.u32 %v1659, 7
    %v1661 = vsub.s32 0, %v1660
    %v1662 = vrot.slane %v1658, %v1661
    %v1663 = vmul.f32 %v1654, %v1662
    %v1664 = vmul.f32 %v1655, %v1662
    %v1665 = vmul.f32 %v1656, %v1662
    %v1666 = vmul.f32 %v1657, %v1662
    %v1667 = vadd.f32 %v1650, %v1663
    %v1668 = vadd.f32 %v1651, %v1664
    %v1669 = vadd.f32 %v1652, %v1665
    %v1670 = vadd.f32 %v1653, %v1666
    %v1671 = vld [vmem:[%s1307] ss:$2 sm:$0x3]
    %v1672 = vld [vmem:[%s1309] ss:$2 sm:$0x3]
    %v1673 = vld [vmem:[%s1315] ss:$2 sm:$0x3]
    %v1674 = vld [vmem:[%s1317] ss:$2 sm:$0x3]
    %v1675 = vld [vmem:[%s11 + $0x7] sm:$0x1]
    %v1676 = vlaneseq
    %v1677 = vshrl.u32 %v1676, 7
    %v1678 = vsub.s32 0, %v1677
    %v1679 = vrot.slane %v1675, %v1678
    %v1680 = vmul.f32 %v1671, %v1679
    %v1681 = vmul.f32 %v1672, %v1679
    %v1682 = vmul.f32 %v1673, %v1679
    %v1683 = vmul.f32 %v1674, %v1679
    %v1684 = vadd.f32 %v1667, %v1680
    %v1685 = vadd.f32 %v1668, %v1681
    %v1686 = vadd.f32 %v1669, %v1682
    %v1687 = vadd.f32 %v1670, %v1683
    %v1688 = vld [vmem:[%s1344] ss:$2 sm:$0x3]
    %v1689 = vld [vmem:[%s1346] ss:$2 sm:$0x3]
    %v1690 = vld [vmem:[%s1352] ss:$2 sm:$0x3]
    %v1691 = vld [vmem:[%s1354] ss:$2 sm:$0x3]
    %v1692 = vld [vmem:[%s11 + $0x8] sm:$0x1]
    %v1693 = vlaneseq
    %v1694 = vshrl.u32 %v1693, 7
    %v1695 = vsub.s32 0, %v1694
    %v1696 = vrot.slane %v1692, %v1695
    %v1697 = vmul.f32 %v1688, %v1696
    %v1698 = vmul.f32 %v1689, %v1696
    %v1699 = vmul.f32 %v1690, %v1696
    %v1700 = vmul.f32 %v1691, %v1696
    %v1701 = vadd.f32 %v1684, %v1697
    %v1702 = vadd.f32 %v1685, %v1698
    %v1703 = vadd.f32 %v1686, %v1699
    %v1704 = vadd.f32 %v1687, %v1700
    %v1705 = vld [vmem:[%s12] sm:$0x1]
    %v1707 = vlaneseq
    %v1708 = vshrl.u32 %v1707, 7
    %v1709 = vsub.s32 0, %v1708
    %v1710 = vrot.slane %v1705, %v1709
    %v1712 = vadd.f32 %v1701, %v1710
    %v1713 = vadd.f32 %v1702, %v1710
    %v1714 = vadd.f32 %v1703, %v1710
    %v1715 = vadd.f32 %v1704, %v1710
    %v1716 = vmax.f32 %v1712, 0.0
    %v1717 = vmax.f32 %v1713, 0.0
    %v1718 = vmax.f32 %v1714, 0.0
    %v1719 = vmax.f32 %v1715, 0.0
    %v1724 = vcombine.low %v1716, %v1717
    %v1725 = vcombine.low %v1718, %v1719
    %v1727 = vunpack.c.l.s4 1983009808
    %v1728 = vunpack.c.0.s8 %v1727
    %v1729 = vlaneseq
    %v1730 = vshrl.u32 %v1729, 7
    %v1731 = vsub.s32 %v1728, %v1730
    %v1732 = vrot.slane %v1724, %v1731
    %v1734 = vunpack.c.l.s4 1983009808
    %v1735 = vunpack.c.0.s8 %v1734
    %v1736 = vlaneseq
    %v1737 = vshrl.u32 %v1736, 7
    %v1738 = vsub.s32 %v1735, %v1737
    %v1739 = vrot.slane %v1725, %v1738
    %v1740 = vcombine.low %v1732, %v1739
    %v1742 = vpack.c.bf16 %v1740, %v1740
    %v1743 = vld [vmem:[%s13] sm:$0xff]
    %v1744 = vld [vmem:[%s13 + $0x8] sm:$0xff]
    %v1745 = vld [vmem:[%s13 + $0x10] sm:$0xff]
    %v1746 = vld [vmem:[%s13 + $0x18] sm:$0xff]
    %v1747 = vld [vmem:[%s13 + $0x20] sm:$0xff]
    %v1748 = vld [vmem:[%s13 + $0x28] sm:$0xff]
    %v1749 = vld [vmem:[%s13 + $0x30] sm:$0xff]
    %v1750 = vld [vmem:[%s13 + $0x38] sm:$0xff]
    %v1751 = vld [vmem:[%s13 + $0x40] sm:$0xff]
    %v1752 = vld [vmem:[%s13 + $0x48] sm:$0xff]
    %v1753 = vld [vmem:[%s13 + $0x50] sm:$0xff]
    %v1754 = vld [vmem:[%s13 + $0x58] sm:$0xff]
    %v1755 = vld [vmem:[%s13 + $0x60] sm:$0xff]
    %v1756 = vld [vmem:[%s13 + $0x68] sm:$0xff]
    %v1757 = vld [vmem:[%s13 + $0x70] sm:$0xff]
    %v1758 = vld [vmem:[%s13 + $0x78] sm:$0xff]
    %v1759 = vld [vmem:[%s13 + $0x80] sm:$0xff]
    %v1760 = vld [vmem:[%s13 + $0x88] sm:$0xff]
    %v1761 = vld [vmem:[%s13 + $0x90] sm:$0xff]
    %v1762 = vld [vmem:[%s13 + $0x98] sm:$0xff]
    %v1763 = vld [vmem:[%s13 + $0xa0] sm:$0xff]
    %v1764 = vld [vmem:[%s13 + $0xa8] sm:$0xff]
    %v1765 = vld [vmem:[%s13 + $0xb0] sm:$0xff]
    %v1766 = vld [vmem:[%s13 + $0xb8] sm:$0xff]
    %v1767 = vld [vmem:[%s13 + $0xc0] sm:$0xff]
    %v1768 = vld [vmem:[%s13 + $0xc8] sm:$0xff]
    %v1769 = vld [vmem:[%s13 + $0xd0] sm:$0xff]
    %v1770 = vld [vmem:[%s13 + $0xd8] sm:$0xff]
    %v1771 = vld [vmem:[%s13 + $0xe0] sm:$0xff]
    %v1772 = vld [vmem:[%s13 + $0xe8] sm:$0xff]
    %v1773 = vld [vmem:[%s13 + $0xf0] sm:$0xff]
    %v1774 = vld [vmem:[%s13 + $0xf8] sm:$0xff]
    %v1775 = vld [vmem:[%s13 + $0x100] sm:$0xff]
    %v1776 = vld [vmem:[%s13 + $0x108] sm:$0xff]
    %v1777 = vld [vmem:[%s13 + $0x110] sm:$0xff]
    %v1778 = vld [vmem:[%s13 + $0x118] sm:$0xff]
    %v1779 = vld [vmem:[%s13 + $0x120] sm:$0xff]
    %v1780 = vld [vmem:[%s13 + $0x128] sm:$0xff]
    %v1781 = vld [vmem:[%s13 + $0x130] sm:$0xff]
    %v1782 = vld [vmem:[%s13 + $0x138] sm:$0xff]
    %v1783 = vld [vmem:[%s13 + $0x140] sm:$0xff]
    %v1784 = vld [vmem:[%s13 + $0x148] sm:$0xff]
    %v1785 = vld [vmem:[%s13 + $0x150] sm:$0xff]
    %v1786 = vld [vmem:[%s13 + $0x158] sm:$0xff]
    %v1787 = vld [vmem:[%s13 + $0x160] sm:$0xff]
    %v1788 = vld [vmem:[%s13 + $0x168] sm:$0xff]
    %v1789 = vld [vmem:[%s13 + $0x170] sm:$0xff]
    %v1790 = vld [vmem:[%s13 + $0x178] sm:$0xff]
    %v1791 = vld [vmem:[%s13 + $0x180] sm:$0xff]
    %v1792 = vld [vmem:[%s13 + $0x188] sm:$0xff]
    %v1793 = vld [vmem:[%s13 + $0x190] sm:$0xff]
    %v1794 = vld [vmem:[%s13 + $0x198] sm:$0xff]
    %v1795 = vld [vmem:[%s13 + $0x1a0] sm:$0xff]
    %v1796 = vld [vmem:[%s13 + $0x1a8] sm:$0xff]
    %v1797 = vld [vmem:[%s13 + $0x1b0] sm:$0xff]
    %v1798 = vld [vmem:[%s13 + $0x1b8] sm:$0xff]
    %v1799 = vld [vmem:[%s13 + $0x1c0] sm:$0xff]
    %v1800 = vld [vmem:[%s13 + $0x1c8] sm:$0xff]
    %v1801 = vld [vmem:[%s13 + $0x1d0] sm:$0xff]
    %v1802 = vld [vmem:[%s13 + $0x1d8] sm:$0xff]
    %v1803 = vld [vmem:[%s13 + $0x1e0] sm:$0xff]
    %v1804 = vld [vmem:[%s13 + $0x1e8] sm:$0xff]
    %v1805 = vld [vmem:[%s13 + $0x1f0] sm:$0xff]
    %v1806 = vld [vmem:[%s13 + $0x1f8] sm:$0xff]
    %v1807 = vld [vmem:[%s14] sm:$0xff]
    %v1809 = vlaneseq
    %v1810 = vshrl.u32 %v1809, 7
    %v1811 = vsub.s32 0, %v1810
    %v1812 = vrot.slane %v1807, %v1811
    %v1813 = vlaneseq
    %v1814 = vshrl.u32 %v1813, 7
    %v1815 = vsub.s32 1, %v1814
    %v1816 = vrot.slane %v1807, %v1815
    %v1817 = vlaneseq
    %v1818 = vshrl.u32 %v1817, 7
    %v1819 = vsub.s32 2, %v1818
    %v1820 = vrot.slane %v1807, %v1819
    %v1821 = vlaneseq
    %v1822 = vshrl.u32 %v1821, 7
    %v1823 = vsub.s32 3, %v1822
    %v1824 = vrot.slane %v1807, %v1823
    %v1825 = vlaneseq
    %v1826 = vshrl.u32 %v1825, 7
    %v1827 = vsub.s32 4, %v1826
    %v1828 = vrot.slane %v1807, %v1827
    %v1829 = vlaneseq
    %v1830 = vshrl.u32 %v1829, 7
    %v1831 = vsub.s32 5, %v1830
    %v1832 = vrot.slane %v1807, %v1831
    %v1833 = vlaneseq
    %v1834 = vshrl.u32 %v1833, 7
    %v1835 = vsub.s32 6, %v1834
    %v1836 = vrot.slane %v1807, %v1835
    %v1837 = vlaneseq
    %v1838 = vshrl.u32 %v1837, 7
    %v1839 = vsub.s32 7, %v1838
    %v1840 = vrot.slane %v1807, %v1839
    %v1913 = vunpack.c.l.b16 %v1743
    %v1914 = vunpack.c.h.b16 %v1743
    %v1915 = vunpack.c.l.b16 %v1744
    %v1916 = vunpack.c.h.b16 %v1744
    %v1917 = vunpack.c.l.b16 %v1745
    %v1918 = vunpack.c.h.b16 %v1745
    %v1919 = vunpack.c.l.b16 %v1746
    %v1920 = vunpack.c.h.b16 %v1746
    %v1921 = vunpack.c.l.b16 %v1747
    %v1922 = vunpack.c.h.b16 %v1747
    %v1923 = vunpack.c.l.b16 %v1748
    %v1924 = vunpack.c.h.b16 %v1748
    %v1925 = vunpack.c.l.b16 %v1749
    %v1926 = vunpack.c.h.b16 %v1749
    %v1927 = vunpack.c.l.b16 %v1750
    %v1928 = vunpack.c.h.b16 %v1750
    %v1929 = vunpack.c.l.b16 %v1751
    %v1930 = vunpack.c.h.b16 %v1751
    %v1931 = vunpack.c.l.b16 %v1752
    %v1932 = vunpack.c.h.b16 %v1752
    %v1933 = vunpack.c.l.b16 %v1753
    %v1934 = vunpack.c.h.b16 %v1753
    %v1935 = vunpack.c.l.b16 %v1754
    %v1936 = vunpack.c.h.b16 %v1754
    %v1937 = vunpack.c.l.b16 %v1755
    %v1938 = vunpack.c.h.b16 %v1755
    %v1939 = vunpack.c.l.b16 %v1756
    %v1940 = vunpack.c.h.b16 %v1756
    %v1941 = vunpack.c.l.b16 %v1757
    %v1942 = vunpack.c.h.b16 %v1757
    %v1943 = vunpack.c.l.b16 %v1758
    %v1944 = vunpack.c.h.b16 %v1758
    %v1945 = vunpack.c.l.b16 %v1759
    %v1946 = vunpack.c.h.b16 %v1759
    %v1947 = vunpack.c.l.b16 %v1760
    %v1948 = vunpack.c.h.b16 %v1760
    %v1949 = vunpack.c.l.b16 %v1761
    %v1950 = vunpack.c.h.b16 %v1761
    %v1951 = vunpack.c.l.b16 %v1762
    %v1952 = vunpack.c.h.b16 %v1762
    %v1953 = vunpack.c.l.b16 %v1763
    %v1954 = vunpack.c.h.b16 %v1763
    %v1955 = vunpack.c.l.b16 %v1764
    %v1956 = vunpack.c.h.b16 %v1764
    %v1957 = vunpack.c.l.b16 %v1765
    %v1958 = vunpack.c.h.b16 %v1765
    %v1959 = vunpack.c.l.b16 %v1766
    %v1960 = vunpack.c.h.b16 %v1766
    %v1961 = vunpack.c.l.b16 %v1767
    %v1962 = vunpack.c.h.b16 %v1767
    %v1963 = vunpack.c.l.b16 %v1768
    %v1964 = vunpack.c.h.b16 %v1768
    %v1965 = vunpack.c.l.b16 %v1769
    %v1966 = vunpack.c.h.b16 %v1769
    %v1967 = vunpack.c.l.b16 %v1770
    %v1968 = vunpack.c.h.b16 %v1770
    %v1969 = vunpack.c.l.b16 %v1771
    %v1970 = vunpack.c.h.b16 %v1771
    %v1971 = vunpack.c.l.b16 %v1772
    %v1972 = vunpack.c.h.b16 %v1772
    %v1973 = vunpack.c.l.b16 %v1773
    %v1974 = vunpack.c.h.b16 %v1773
    %v1975 = vunpack.c.l.b16 %v1774
    %v1976 = vunpack.c.h.b16 %v1774
    %v1977 = vunpack.c.l.b16 %v1775
    %v1978 = vunpack.c.h.b16 %v1775
    %v1979 = vunpack.c.l.b16 %v1776
    %v1980 = vunpack.c.h.b16 %v1776
    %v1981 = vunpack.c.l.b16 %v1777
    %v1982 = vunpack.c.h.b16 %v1777
    %v1983 = vunpack.c.l.b16 %v1778
    %v1984 = vunpack.c.h.b16 %v1778
    %v1985 = vunpack.c.l.b16 %v1779
    %v1986 = vunpack.c.h.b16 %v1779
    %v1987 = vunpack.c.l.b16 %v1780
    %v1988 = vunpack.c.h.b16 %v1780
    %v1989 = vunpack.c.l.b16 %v1781
    %v1990 = vunpack.c.h.b16 %v1781
    %v1991 = vunpack.c.l.b16 %v1782
    %v1992 = vunpack.c.h.b16 %v1782
    %v1993 = vunpack.c.l.b16 %v1783
    %v1994 = vunpack.c.h.b16 %v1783
    %v1995 = vunpack.c.l.b16 %v1784
    %v1996 = vunpack.c.h.b16 %v1784
    %v1997 = vunpack.c.l.b16 %v1785
    %v1998 = vunpack.c.h.b16 %v1785
    %v1999 = vunpack.c.l.b16 %v1786
    %v2000 = vunpack.c.h.b16 %v1786
    %v2001 = vunpack.c.l.b16 %v1787
    %v2002 = vunpack.c.h.b16 %v1787
    %v2003 = vunpack.c.l.b16 %v1788
    %v2004 = vunpack.c.h.b16 %v1788
    %v2005 = vunpack.c.l.b16 %v1789
    %v2006 = vunpack.c.h.b16 %v1789
    %v2007 = vunpack.c.l.b16 %v1790
    %v2008 = vunpack.c.h.b16 %v1790
    %v2009 = vunpack.c.l.b16 %v1791
    %v2010 = vunpack.c.h.b16 %v1791
    %v2011 = vunpack.c.l.b16 %v1792
    %v2012 = vunpack.c.h.b16 %v1792
    %v2013 = vunpack.c.l.b16 %v1793
    %v2014 = vunpack.c.h.b16 %v1793
    %v2015 = vunpack.c.l.b16 %v1794
    %v2016 = vunpack.c.h.b16 %v1794
    %v2017 = vunpack.c.l.b16 %v1795
    %v2018 = vunpack.c.h.b16 %v1795
    %v2019 = vunpack.c.l.b16 %v1796
    %v2020 = vunpack.c.h.b16 %v1796
    %v2021 = vunpack.c.l.b16 %v1797
    %v2022 = vunpack.c.h.b16 %v1797
    %v2023 = vunpack.c.l.b16 %v1798
    %v2024 = vunpack.c.h.b16 %v1798
    %v2025 = vunpack.c.l.b16 %v1799
    %v2026 = vunpack.c.h.b16 %v1799
    %v2027 = vunpack.c.l.b16 %v1800
    %v2028 = vunpack.c.h.b16 %v1800
    %v2029 = vunpack.c.l.b16 %v1801
    %v2030 = vunpack.c.h.b16 %v1801
    %v2031 = vunpack.c.l.b16 %v1802
    %v2032 = vunpack.c.h.b16 %v1802
    %v2033 = vunpack.c.l.b16 %v1803
    %v2034 = vunpack.c.h.b16 %v1803
    %v2035 = vunpack.c.l.b16 %v1804
    %v2036 = vunpack.c.h.b16 %v1804
    %v2037 = vunpack.c.l.b16 %v1805
    %v2038 = vunpack.c.h.b16 %v1805
    %v2039 = vunpack.c.l.b16 %v1806
    %v2040 = vunpack.c.h.b16 %v1806
    %v2041 = vpack.c.b16 %v1921, %v1913
    %v2042 = vpack.c.b16 %v1922, %v1914
    %v2043 = vpack.c.b16 %v1923, %v1915
    %v2044 = vpack.c.b16 %v1924, %v1916
    %v2045 = vpack.c.b16 %v1925, %v1917
    %v2046 = vpack.c.b16 %v1926, %v1918
    %v2047 = vpack.c.b16 %v1927, %v1919
    %v2048 = vpack.c.b16 %v1928, %v1920
    %v2049 = vpack.c.b16 %v1937, %v1929
    %v2050 = vpack.c.b16 %v1938, %v1930
    %v2051 = vpack.c.b16 %v1939, %v1931
    %v2052 = vpack.c.b16 %v1940, %v1932
    %v2053 = vpack.c.b16 %v1941, %v1933
    %v2054 = vpack.c.b16 %v1942, %v1934
    %v2055 = vpack.c.b16 %v1943, %v1935
    %v2056 = vpack.c.b16 %v1944, %v1936
    %v2057 = vpack.c.b16 %v1953, %v1945
    %v2058 = vpack.c.b16 %v1954, %v1946
    %v2059 = vpack.c.b16 %v1955, %v1947
    %v2060 = vpack.c.b16 %v1956, %v1948
    %v2061 = vpack.c.b16 %v1957, %v1949
    %v2062 = vpack.c.b16 %v1958, %v1950
    %v2063 = vpack.c.b16 %v1959, %v1951
    %v2064 = vpack.c.b16 %v1960, %v1952
    %v2065 = vpack.c.b16 %v1969, %v1961
    %v2066 = vpack.c.b16 %v1970, %v1962
    %v2067 = vpack.c.b16 %v1971, %v1963
    %v2068 = vpack.c.b16 %v1972, %v1964
    %v2069 = vpack.c.b16 %v1973, %v1965
    %v2070 = vpack.c.b16 %v1974, %v1966
    %v2071 = vpack.c.b16 %v1975, %v1967
    %v2072 = vpack.c.b16 %v1976, %v1968
    %v2073 = vpack.c.b16 %v1985, %v1977
    %v2074 = vpack.c.b16 %v1986, %v1978
    %v2075 = vpack.c.b16 %v1987, %v1979
    %v2076 = vpack.c.b16 %v1988, %v1980
    %v2077 = vpack.c.b16 %v1989, %v1981
    %v2078 = vpack.c.b16 %v1990, %v1982
    %v2079 = vpack.c.b16 %v1991, %v1983
    %v2080 = vpack.c.b16 %v1992, %v1984
    %v2081 = vpack.c.b16 %v2001, %v1993
    %v2082 = vpack.c.b16 %v2002, %v1994
    %v2083 = vpack.c.b16 %v2003, %v1995
    %v2084 = vpack.c.b16 %v2004, %v1996
    %v2085 = vpack.c.b16 %v2005, %v1997
    %v2086 = vpack.c.b16 %v2006, %v1998
    %v2087 = vpack.c.b16 %v2007, %v1999
    %v2088 = vpack.c.b16 %v2008, %v2000
    %v2089 = vpack.c.b16 %v2017, %v2009
    %v2090 = vpack.c.b16 %v2018, %v2010
    %v2091 = vpack.c.b16 %v2019, %v2011
    %v2092 = vpack.c.b16 %v2020, %v2012
    %v2093 = vpack.c.b16 %v2021, %v2013
    %v2094 = vpack.c.b16 %v2022, %v2014
    %v2095 = vpack.c.b16 %v2023, %v2015
    %v2096 = vpack.c.b16 %v2024, %v2016
    %v2097 = vpack.c.b16 %v2033, %v2025
    %v2098 = vpack.c.b16 %v2034, %v2026
    %v2099 = vpack.c.b16 %v2035, %v2027
    %v2100 = vpack.c.b16 %v2036, %v2028
    %v2101 = vpack.c.b16 %v2037, %v2029
    %v2102 = vpack.c.b16 %v2038, %v2030
    %v2103 = vpack.c.b16 %v2039, %v2031
    %v2104 = vpack.c.b16 %v2040, %v2032
    %2169 = vmatprep.subr.bf16.mxu0 %v2042
    %2170 = vmatpush1.bf16.msra.mxu0 %v2041
    %2171 = vmatprep.subr.bf16.mxu0 %v2050
    %2172 = vmatpush1.bf16.msra.mxu0 %v2049
    %2173 = vmatprep.subr.bf16.mxu0 %v2058
    %2174 = vmatpush1.bf16.msra.mxu0 %v2057
    %2175 = vmatprep.subr.bf16.mxu0 %v2066
    %2176 = vmatpush1.bf16.msra.mxu0 %v2065
    %2177 = vmatprep.subr.bf16.mxu0 %v2074
    %2178 = vmatpush1.bf16.msra.mxu0 %v2073
    %2179 = vmatprep.subr.bf16.mxu0 %v2082
    %2180 = vmatpush1.bf16.msra.mxu0 %v2081
    %2181 = vmatprep.subr.bf16.mxu0 %v2090
    %2182 = vmatpush1.bf16.msra.mxu0 %v2089
    %2183 = vmatprep.subr.bf16.mxu0 %v2098
    %2184 = vmatpush1.bf16.msra.mxu0 %v2097
    %2185 = vmatprep.subr.bf16.mxu0 0
    %2186 = vmatpush1.bf16.msra.mxu0 0
    %2187 = vmatprep.subr.bf16.mxu0 0
    %2188 = vmatpush1.bf16.msra.mxu0 0
    %2189 = vmatprep.subr.bf16.mxu0 0
    %2190 = vmatpush1.bf16.msra.mxu0 0
    %2191 = vmatprep.subr.bf16.mxu0 0
    %2192 = vmatpush1.bf16.msra.mxu0 0
    %2193 = vmatprep.subr.bf16.mxu0 0
    %2194 = vmatpush1.bf16.msra.mxu0 0
    %2195 = vmatprep.subr.bf16.mxu0 0
    %2196 = vmatpush1.bf16.msra.mxu0 0
    %2197 = vmatprep.subr.bf16.mxu0 0
    %2198 = vmatpush1.bf16.msra.mxu0 0
    %2199 = vmatprep.subr.bf16.mxu0 0
    %2200 = vmatpush1.bf16.msra.mxu0 0
    %2201 = vmatprep.mubr.bf16.mxu0 0
    %2202 = vmatmul.mubr.bf16.gmra.mrb[0].mxu0 %v1742
    %v2203 = vpop.f32.mrb[0].mxu0
    %v2204 = vadd.f32 %v1812, %v2203
    %v2205 = vpop.f32.mrb[0].mxu0
    %v2206 = vadd.f32 %v1816, %v2205
    %v2207 = vpop.f32.mrb[0].mxu0
    %v2208 = vpop.f32.mrb[0].mxu0
    %2209 = vdwg.mxu0
    %2210 = vmatprep.subr.bf16.mxu0 %v2044
    %2211 = vmatpush1.bf16.msra.mxu0 %v2043
    %2212 = vmatprep.subr.bf16.mxu0 %v2052
    %2213 = vmatpush1.bf16.msra.mxu0 %v2051
    %2214 = vmatprep.subr.bf16.mxu0 %v2060
    %2215 = vmatpush1.bf16.msra.mxu0 %v2059
    %2216 = vmatprep.subr.bf16.mxu0 %v2068
    %2217 = vmatpush1.bf16.msra.mxu0 %v2067
    %2218 = vmatprep.subr.bf16.mxu0 %v2076
    %2219 = vmatpush1.bf16.msra.mxu0 %v2075
    %2220 = vmatprep.subr.bf16.mxu0 %v2084
    %2221 = vmatpush1.bf16.msra.mxu0 %v2083
    %2222 = vmatprep.subr.bf16.mxu0 %v2092
    %2223 = vmatpush1.bf16.msra.mxu0 %v2091
    %2224 = vmatprep.subr.bf16.mxu0 %v2100
    %2225 = vmatpush1.bf16.msra.mxu0 %v2099
    %2226 = vmatprep.subr.bf16.mxu0 0
    %2227 = vmatpush1.bf16.msra.mxu0 0
    %2228 = vmatprep.subr.bf16.mxu0 0
    %2229 = vmatpush1.bf16.msra.mxu0 0
    %2230 = vmatprep.subr.bf16.mxu0 0
    %2231 = vmatpush1.bf16.msra.mxu0 0
    %2232 = vmatprep.subr.bf16.mxu0 0
    %2233 = vmatpush1.bf16.msra.mxu0 0
    %2234 = vmatprep.subr.bf16.mxu0 0
    %2235 = vmatpush1.bf16.msra.mxu0 0
    %2236 = vmatprep.subr.bf16.mxu0 0
    %2237 = vmatpush1.bf16.msra.mxu0 0
    %2238 = vmatprep.subr.bf16.mxu0 0
    %2239 = vmatpush1.bf16.msra.mxu0 0
    %2240 = vmatprep.subr.bf16.mxu0 0
    %2241 = vmatpush1.bf16.msra.mxu0 0
    %2242 = vmatprep.mubr.bf16.mxu0 0
    %2243 = vmatmul.mubr.bf16.gmra.mrb[0].mxu0 %v1742
    %v2244 = vpop.f32.mrb[0].mxu0
    %v2245 = vadd.f32 %v1820, %v2244
    %v2246 = vpop.f32.mrb[0].mxu0
    %v2247 = vadd.f32 %v1824, %v2246
    %v2248 = vpop.f32.mrb[0].mxu0
    %v2249 = vpop.f32.mrb[0].mxu0
    %2250 = vdwg.mxu0
    %2251 = vmatprep.subr.bf16.mxu0 %v2046
    %2252 = vmatpush1.bf16.msra.mxu0 %v2045
    %2253 = vmatprep.subr.bf16.mxu0 %v2054
    %2254 = vmatpush1.bf16.msra.mxu0 %v2053
    %2255 = vmatprep.subr.bf16.mxu0 %v2062
    %2256 = vmatpush1.bf16.msra.mxu0 %v2061
    %2257 = vmatprep.subr.bf16.mxu0 %v2070
    %2258 = vmatpush1.bf16.msra.mxu0 %v2069
    %2259 = vmatprep.subr.bf16.mxu0 %v2078
    %2260 = vmatpush1.bf16.msra.mxu0 %v2077
    %2261 = vmatprep.subr.bf16.mxu0 %v2086
    %2262 = vmatpush1.bf16.msra.mxu0 %v2085
    %2263 = vmatprep.subr.bf16.mxu0 %v2094
    %2264 = vmatpush1.bf16.msra.mxu0 %v2093
    %2265 = vmatprep.subr.bf16.mxu0 %v2102
    %2266 = vmatpush1.bf16.msra.mxu0 %v2101
    %2267 = vmatprep.subr.bf16.mxu0 0
    %2268 = vmatpush1.bf16.msra.mxu0 0
    %2269 = vmatprep.subr.bf16.mxu0 0
    %2270 = vmatpush1.bf16.msra.mxu0 0
    %2271 = vmatprep.subr.bf16.mxu0 0
    %2272 = vmatpush1.bf16.msra.mxu0 0
    %2273 = vmatprep.subr.bf16.mxu0 0
    %2274 = vmatpush1.bf16.msra.mxu0 0
    %2275 = vmatprep.subr.bf16.mxu0 0
    %2276 = vmatpush1.bf16.msra.mxu0 0
    %2277 = vmatprep.subr.bf16.mxu0 0
    %2278 = vmatpush1.bf16.msra.mxu0 0
    %2279 = vmatprep.subr.bf16.mxu0 0
    %2280 = vmatpush1.bf16.msra.mxu0 0
    %2281 = vmatprep.subr.bf16.mxu0 0
    %2282 = vmatpush1.bf16.msra.mxu0 0
    %2283 = vmatprep.mubr.bf16.mxu0 0
    %2284 = vmatmul.mubr.bf16.gmra.mrb[0].mxu0 %v1742
    %v2285 = vpop.f32.mrb[0].mxu0
    %v2286 = vadd.f32 %v1828, %v2285
    %v2287 = vpop.f32.mrb[0].mxu0
    %v2288 = vadd.f32 %v1832, %v2287
    %v2289 = vpop.f32.mrb[0].mxu0
    %v2290 = vpop.f32.mrb[0].mxu0
    %2291 = vdwg.mxu0
    %2292 = vmatprep.subr.bf16.mxu0 %v2048
    %2293 = vmatpush1.bf16.msra.mxu0 %v2047
    %2294 = vmatprep.subr.bf16.mxu0 %v2056
    %2295 = vmatpush1.bf16.msra.mxu0 %v2055
    %2296 = vmatprep.subr.bf16.mxu0 %v2064
    %2297 = vmatpush1.bf16.msra.mxu0 %v2063
    %2298 = vmatprep.subr.bf16.mxu0 %v2072
    %2299 = vmatpush1.bf16.msra.mxu0 %v2071
    %2300 = vmatprep.subr.bf16.mxu0 %v2080
    %2301 = vmatpush1.bf16.msra.mxu0 %v2079
    %2302 = vmatprep.subr.bf16.mxu0 %v2088
    %2303 = vmatpush1.bf16.msra.mxu0 %v2087
    %2304 = vmatprep.subr.bf16.mxu0 %v2096
    %2305 = vmatpush1.bf16.msra.mxu0 %v2095
    %2306 = vmatprep.subr.bf16.mxu0 %v2104
    %2307 = vmatpush1.bf16.msra.mxu0 %v2103
    %2308 = vmatprep.subr.bf16.mxu0 0
    %2309 = vmatpush1.bf16.msra.mxu0 0
    %2310 = vmatprep.subr.bf16.mxu0 0
    %2311 = vmatpush1.bf16.msra.mxu0 0
    %2312 = vmatprep.subr.bf16.mxu0 0
    %2313 = vmatpush1.bf16.msra.mxu0 0
    %2314 = vmatprep.subr.bf16.mxu0 0
    %2315 = vmatpush1.bf16.msra.mxu0 0
    %2316 = vmatprep.subr.bf16.mxu0 0
    %2317 = vmatpush1.bf16.msra.mxu0 0
    %2318 = vmatprep.subr.bf16.mxu0 0
    %2319 = vmatpush1.bf16.msra.mxu0 0
    %2320 = vmatprep.subr.bf16.mxu0 0
    %2321 = vmatpush1.bf16.msra.mxu0 0
    %2322 = vmatprep.subr.bf16.mxu0 0
    %2323 = vmatpush1.bf16.msra.mxu0 0
    %2324 = vmatprep.mubr.bf16.mxu0 0
    %2325 = vmatmul.mubr.bf16.gmra.mrb[0].mxu0 %v1742
    %v2326 = vpop.f32.mrb[0].mxu0
    %v2327 = vadd.f32 %v1836, %v2326
    %v2328 = vpop.f32.mrb[0].mxu0
    %v2329 = vadd.f32 %v1840, %v2328
    %v2330 = vpop.f32.mrb[0].mxu0
    %v2331 = vpop.f32.mrb[0].mxu0
    %2332 = vdwg.mxu0
    %v2333 = vmax.f32 %v2204, 0.0
    %v2334 = vmax.f32 %v2206, 0.0
    %v2335 = vmax.f32 %v2245, 0.0
    %v2336 = vmax.f32 %v2247, 0.0
    %v2337 = vmax.f32 %v2286, 0.0
    %v2338 = vmax.f32 %v2288, 0.0
    %v2339 = vmax.f32 %v2327, 0.0
    %v2340 = vmax.f32 %v2329, 0.0
    %v2349 = vcombine.low %v2333, %v2334
    %v2350 = vcombine.high %v2333, %v2334
    %v2351 = vcombine.low %v2335, %v2336
    %v2352 = vcombine.high %v2335, %v2336
    %v2353 = vcombine.low %v2337, %v2338
    %v2354 = vcombine.high %v2337, %v2338
    %v2355 = vcombine.low %v2339, %v2340
    %v2356 = vcombine.high %v2339, %v2340
    %v2365 = vcombine.high %v2349, %v2349
    %v2366 = vcombine.high %v2351, %v2351
    %v2367 = vcombine.high %v2353, %v2353
    %v2368 = vcombine.high %v2355, %v2355
    %v2369 = vcombine.high %v2350, %v2350
    %v2370 = vcombine.high %v2352, %v2352
    %v2371 = vcombine.high %v2354, %v2354
    %v2372 = vcombine.high %v2356, %v2356
    %vm2381 = vcmask 1043456
    %v2382 = vsel %vm2381, %v2349, 0.0
    %v2383 = vrot.slane %v2382, 4
    %v2384 = vadd.f32 %v2382, %v2383
    %v2385 = vrot.slane %v2384, 2
    %v2386 = vadd.f32 %v2384, %v2385
    %v2387 = vrot.slane %v2386, 1
    %v2388 = vadd.f32 %v2386, %v2387
    %v2389 = vsel %vm2381, %v2365, 0.0
    %v2390 = vrot.slane %v2389, 4
    %v2391 = vadd.f32 %v2389, %v2390
    %v2392 = vrot.slane %v2391, 2
    %v2393 = vadd.f32 %v2391, %v2392
    %v2394 = vrot.slane %v2393, 1
    %v2395 = vadd.f32 %v2393, %v2394
    %v2396 = vsel %vm2381, %v2351, 0.0
    %v2397 = vrot.slane %v2396, 4
    %v2398 = vadd.f32 %v2396, %v2397
    %v2399 = vrot.slane %v2398, 2
    %v2400 = vadd.f32 %v2398, %v2399
    %v2401 = vrot.slane %v2400, 1
    %v2402 = vadd.f32 %v2400, %v2401
    %v2403 = vsel %vm2381, %v2366, 0.0
    %v2404 = vrot.slane %v2403, 4
    %v2405 = vadd.f32 %v2403, %v2404
    %v2406 = vrot.slane %v2405, 2
    %v2407 = vadd.f32 %v2405, %v2406
    %v2408 = vrot.slane %v2407, 1
    %v2409 = vadd.f32 %v2407, %v2408
    %v2410 = vsel %vm2381, %v2353, 0.0
    %v2411 = vrot.slane %v2410, 4
    %v2412 = vadd.f32 %v2410, %v2411
    %v2413 = vrot.slane %v2412, 2
    %v2414 = vadd.f32 %v2412, %v2413
    %v2415 = vrot.slane %v2414, 1
    %v2416 = vadd.f32 %v2414, %v2415
    %v2417 = vsel %vm2381, %v2367, 0.0
    %v2418 = vrot.slane %v2417, 4
    %v2419 = vadd.f32 %v2417, %v2418
    %v2420 = vrot.slane %v2419, 2
    %v2421 = vadd.f32 %v2419, %v2420
    %v2422 = vrot.slane %v2421, 1
    %v2423 = vadd.f32 %v2421, %v2422
    %v2424 = vsel %vm2381, %v2355, 0.0
    %v2425 = vrot.slane %v2424, 4
    %v2426 = vadd.f32 %v2424, %v2425
    %v2427 = vrot.slane %v2426, 2
    %v2428 = vadd.f32 %v2426, %v2427
    %v2429 = vrot.slane %v2428, 1
    %v2430 = vadd.f32 %v2428, %v2429
    %v2431 = vsel %vm2381, %v2368, 0.0
    %v2432 = vrot.slane %v2431, 4
    %v2433 = vadd.f32 %v2431, %v2432
    %v2434 = vrot.slane %v2433, 2
    %v2435 = vadd.f32 %v2433, %v2434
    %v2436 = vrot.slane %v2435, 1
    %v2437 = vadd.f32 %v2435, %v2436
    %v2438 = vsel %vm2381, %v2350, 0.0
    %v2439 = vrot.slane %v2438, 4
    %v2440 = vadd.f32 %v2438, %v2439
    %v2441 = vrot.slane %v2440, 2
    %v2442 = vadd.f32 %v2440, %v2441
    %v2443 = vrot.slane %v2442, 1
    %v2444 = vadd.f32 %v2442, %v2443
    %v2445 = vsel %vm2381, %v2369, 0.0
    %v2446 = vrot.slane %v2445, 4
    %v2447 = vadd.f32 %v2445, %v2446
    %v2448 = vrot.slane %v2447, 2
    %v2449 = vadd.f32 %v2447, %v2448
    %v2450 = vrot.slane %v2449, 1
    %v2451 = vadd.f32 %v2449, %v2450
    %v2452 = vsel %vm2381, %v2352, 0.0
    %v2453 = vrot.slane %v2452, 4
    %v2454 = vadd.f32 %v2452, %v2453
    %v2455 = vrot.slane %v2454, 2
    %v2456 = vadd.f32 %v2454, %v2455
    %v2457 = vrot.slane %v2456, 1
    %v2458 = vadd.f32 %v2456, %v2457
    %v2459 = vsel %vm2381, %v2370, 0.0
    %v2460 = vrot.slane %v2459, 4
    %v2461 = vadd.f32 %v2459, %v2460
    %v2462 = vrot.slane %v2461, 2
    %v2463 = vadd.f32 %v2461, %v2462
    %v2464 = vrot.slane %v2463, 1
    %v2465 = vadd.f32 %v2463, %v2464
    %v2466 = vsel %vm2381, %v2354, 0.0
    %v2467 = vrot.slane %v2466, 4
    %v2468 = vadd.f32 %v2466, %v2467
    %v2469 = vrot.slane %v2468, 2
    %v2470 = vadd.f32 %v2468, %v2469
    %v2471 = vrot.slane %v2470, 1
    %v2472 = vadd.f32 %v2470, %v2471
    %v2473 = vsel %vm2381, %v2371, 0.0
    %v2474 = vrot.slane %v2473, 4
    %v2475 = vadd.f32 %v2473, %v2474
    %v2476 = vrot.slane %v2475, 2
    %v2477 = vadd.f32 %v2475, %v2476
    %v2478 = vrot.slane %v2477, 1
    %v2479 = vadd.f32 %v2477, %v2478
    %v2480 = vsel %vm2381, %v2356, 0.0
    %v2481 = vrot.slane %v2480, 4
    %v2482 = vadd.f32 %v2480, %v2481
    %v2483 = vrot.slane %v2482, 2
    %v2484 = vadd.f32 %v2482, %v2483
    %v2485 = vrot.slane %v2484, 1
    %v2486 = vadd.f32 %v2484, %v2485
    %v2487 = vsel %vm2381, %v2372, 0.0
    %v2488 = vrot.slane %v2487, 4
    %v2489 = vadd.f32 %v2487, %v2488
    %v2490 = vrot.slane %v2489, 2
    %v2491 = vadd.f32 %v2489, %v2490
    %v2492 = vrot.slane %v2491, 1
    %v2493 = vadd.f32 %v2491, %v2492
    %v2494 = vpack.c.bf16 %v2388, %v2388
    %v2495 = vpack.c.bf16 %v2395, %v2395
    %v2496 = vpack.c.bf16 %v2402, %v2402
    %v2497 = vpack.c.bf16 %v2409, %v2409
    %v2498 = vpack.c.bf16 %v2416, %v2416
    %v2499 = vpack.c.bf16 %v2423, %v2423
    %v2500 = vpack.c.bf16 %v2430, %v2430
    %v2501 = vpack.c.bf16 %v2437, %v2437
    %v2502 = vpack.c.bf16 %v2444, %v2444
    %v2503 = vpack.c.bf16 %v2451, %v2451
    %v2504 = vpack.c.bf16 %v2458, %v2458
    %v2505 = vpack.c.bf16 %v2465, %v2465
    %v2506 = vpack.c.bf16 %v2472, %v2472
    %v2507 = vpack.c.bf16 %v2479, %v2479
    %v2508 = vpack.c.bf16 %v2486, %v2486
    %v2509 = vpack.c.bf16 %v2493, %v2493
    %v2510 = vld [vmem:[%s15] sm:$0xf]
    %v2511 = vld [vmem:[%s15 + $0x4] sm:$0xf]
    %v2512 = vld [vmem:[%s15 + $0x8] sm:$0xf]
    %v2513 = vld [vmem:[%s15 + $0xc] sm:$0xf]
    %v2514 = vld [vmem:[%s15 + $0x10] sm:$0xf]
    %v2515 = vld [vmem:[%s15 + $0x14] sm:$0xf]
    %v2516 = vld [vmem:[%s15 + $0x18] sm:$0xf]
    %v2517 = vld [vmem:[%s15 + $0x1c] sm:$0xf]
    %v2518 = vld [vmem:[%s15 + $0x20] sm:$0xf]
    %v2519 = vld [vmem:[%s15 + $0x24] sm:$0xf]
    %v2520 = vld [vmem:[%s15 + $0x28] sm:$0xf]
    %v2521 = vld [vmem:[%s15 + $0x2c] sm:$0xf]
    %v2522 = vld [vmem:[%s15 + $0x30] sm:$0xf]
    %v2523 = vld [vmem:[%s15 + $0x34] sm:$0xf]
    %v2524 = vld [vmem:[%s15 + $0x38] sm:$0xf]
    %v2525 = vld [vmem:[%s15 + $0x3c] sm:$0xf]
    %v2526 = vld [vmem:[%s15 + $0x40] sm:$0xf]
    %v2527 = vld [vmem:[%s15 + $0x44] sm:$0xf]
    %v2528 = vld [vmem:[%s15 + $0x48] sm:$0xf]
    %v2529 = vld [vmem:[%s15 + $0x4c] sm:$0xf]
    %v2530 = vld [vmem:[%s15 + $0x50] sm:$0xf]
    %v2531 = vld [vmem:[%s15 + $0x54] sm:$0xf]
    %v2532 = vld [vmem:[%s15 + $0x58] sm:$0xf]
    %v2533 = vld [vmem:[%s15 + $0x5c] sm:$0xf]
    %v2534 = vld [vmem:[%s15 + $0x60] sm:$0xf]
    %v2535 = vld [vmem:[%s15 + $0x64] sm:$0xf]
    %v2536 = vld [vmem:[%s15 + $0x68] sm:$0xf]
    %v2537 = vld [vmem:[%s15 + $0x6c] sm:$0xf]
    %v2538 = vld [vmem:[%s15 + $0x70] sm:$0xf]
    %v2539 = vld [vmem:[%s15 + $0x74] sm:$0xf]
    %v2540 = vld [vmem:[%s15 + $0x78] sm:$0xf]
    %v2541 = vld [vmem:[%s15 + $0x7c] sm:$0xf]
    %v2542 = vld [vmem:[%s15 + $0x80] sm:$0xf]
    %v2543 = vld [vmem:[%s15 + $0x84] sm:$0xf]
    %v2544 = vld [vmem:[%s15 + $0x88] sm:$0xf]
    %v2545 = vld [vmem:[%s15 + $0x8c] sm:$0xf]
    %v2546 = vld [vmem:[%s15 + $0x90] sm:$0xf]
    %v2547 = vld [vmem:[%s15 + $0x94] sm:$0xf]
    %v2548 = vld [vmem:[%s15 + $0x98] sm:$0xf]
    %v2549 = vld [vmem:[%s15 + $0x9c] sm:$0xf]
    %v2550 = vld [vmem:[%s15 + $0xa0] sm:$0xf]
    %v2551 = vld [vmem:[%s15 + $0xa4] sm:$0xf]
    %v2552 = vld [vmem:[%s15 + $0xa8] sm:$0xf]
    %v2553 = vld [vmem:[%s15 + $0xac] sm:$0xf]
    %v2554 = vld [vmem:[%s15 + $0xb0] sm:$0xf]
    %v2555 = vld [vmem:[%s15 + $0xb4] sm:$0xf]
    %v2556 = vld [vmem:[%s15 + $0xb8] sm:$0xf]
    %v2557 = vld [vmem:[%s15 + $0xbc] sm:$0xf]
    %v2558 = vld [vmem:[%s15 + $0xc0] sm:$0xf]
    %v2559 = vld [vmem:[%s15 + $0xc4] sm:$0xf]
    %v2560 = vld [vmem:[%s15 + $0xc8] sm:$0xf]
    %v2561 = vld [vmem:[%s15 + $0xcc] sm:$0xf]
    %v2562 = vld [vmem:[%s15 + $0xd0] sm:$0xf]
    %v2563 = vld [vmem:[%s15 + $0xd4] sm:$0xf]
    %v2564 = vld [vmem:[%s15 + $0xd8] sm:$0xf]
    %v2565 = vld [vmem:[%s15 + $0xdc] sm:$0xf]
    %v2566 = vld [vmem:[%s15 + $0xe0] sm:$0xf]
    %v2567 = vld [vmem:[%s15 + $0xe4] sm:$0xf]
    %v2568 = vld [vmem:[%s15 + $0xe8] sm:$0xf]
    %v2569 = vld [vmem:[%s15 + $0xec] sm:$0xf]
    %v2570 = vld [vmem:[%s15 + $0xf0] sm:$0xf]
    %v2571 = vld [vmem:[%s15 + $0xf4] sm:$0xf]
    %v2572 = vld [vmem:[%s15 + $0xf8] sm:$0xf]
    %v2573 = vld [vmem:[%s15 + $0xfc] sm:$0xf]
    %v2574 = vld [vmem:[%s15 + $0x100] sm:$0xf]
    %v2575 = vld [vmem:[%s15 + $0x104] sm:$0xf]
    %v2576 = vld [vmem:[%s15 + $0x108] sm:$0xf]
    %v2577 = vld [vmem:[%s15 + $0x10c] sm:$0xf]
    %v2578 = vld [vmem:[%s15 + $0x110] sm:$0xf]
    %v2579 = vld [vmem:[%s15 + $0x114] sm:$0xf]
    %v2580 = vld [vmem:[%s15 + $0x118] sm:$0xf]
    %v2581 = vld [vmem:[%s15 + $0x11c] sm:$0xf]
    %v2582 = vld [vmem:[%s15 + $0x120] sm:$0xf]
    %v2583 = vld [vmem:[%s15 + $0x124] sm:$0xf]
    %v2584 = vld [vmem:[%s15 + $0x128] sm:$0xf]
    %v2585 = vld [vmem:[%s15 + $0x12c] sm:$0xf]
    %v2586 = vld [vmem:[%s15 + $0x130] sm:$0xf]
    %v2587 = vld [vmem:[%s15 + $0x134] sm:$0xf]
    %v2588 = vld [vmem:[%s15 + $0x138] sm:$0xf]
    %v2589 = vld [vmem:[%s15 + $0x13c] sm:$0xf]
    %v2590 = vld [vmem:[%s15 + $0x140] sm:$0xf]
    %v2591 = vld [vmem:[%s15 + $0x144] sm:$0xf]
    %v2592 = vld [vmem:[%s15 + $0x148] sm:$0xf]
    %v2593 = vld [vmem:[%s15 + $0x14c] sm:$0xf]
    %v2594 = vld [vmem:[%s15 + $0x150] sm:$0xf]
    %v2595 = vld [vmem:[%s15 + $0x154] sm:$0xf]
    %v2596 = vld [vmem:[%s15 + $0x158] sm:$0xf]
    %v2597 = vld [vmem:[%s15 + $0x15c] sm:$0xf]
    %v2598 = vld [vmem:[%s15 + $0x160] sm:$0xf]
    %v2599 = vld [vmem:[%s15 + $0x164] sm:$0xf]
    %v2600 = vld [vmem:[%s15 + $0x168] sm:$0xf]
    %v2601 = vld [vmem:[%s15 + $0x16c] sm:$0xf]
    %v2602 = vld [vmem:[%s15 + $0x170] sm:$0xf]
    %v2603 = vld [vmem:[%s15 + $0x174] sm:$0xf]
    %v2604 = vld [vmem:[%s15 + $0x178] sm:$0xf]
    %v2605 = vld [vmem:[%s15 + $0x17c] sm:$0xf]
    %v2606 = vld [vmem:[%s15 + $0x180] sm:$0xf]
    %v2607 = vld [vmem:[%s15 + $0x184] sm:$0xf]
    %v2608 = vld [vmem:[%s15 + $0x188] sm:$0xf]
    %v2609 = vld [vmem:[%s15 + $0x18c] sm:$0xf]
    %v2610 = vld [vmem:[%s15 + $0x190] sm:$0xf]
    %v2611 = vld [vmem:[%s15 + $0x194] sm:$0xf]
    %v2612 = vld [vmem:[%s15 + $0x198] sm:$0xf]
    %v2613 = vld [vmem:[%s15 + $0x19c] sm:$0xf]
    %v2614 = vld [vmem:[%s15 + $0x1a0] sm:$0xf]
    %v2615 = vld [vmem:[%s15 + $0x1a4] sm:$0xf]
    %v2616 = vld [vmem:[%s15 + $0x1a8] sm:$0xf]
    %v2617 = vld [vmem:[%s15 + $0x1ac] sm:$0xf]
    %v2618 = vld [vmem:[%s15 + $0x1b0] sm:$0xf]
    %v2619 = vld [vmem:[%s15 + $0x1b4] sm:$0xf]
    %v2620 = vld [vmem:[%s15 + $0x1b8] sm:$0xf]
    %v2621 = vld [vmem:[%s15 + $0x1bc] sm:$0xf]
    %v2622 = vld [vmem:[%s15 + $0x1c0] sm:$0xf]
    %v2623 = vld [vmem:[%s15 + $0x1c4] sm:$0xf]
    %v2624 = vld [vmem:[%s15 + $0x1c8] sm:$0xf]
    %v2625 = vld [vmem:[%s15 + $0x1cc] sm:$0xf]
    %v2626 = vld [vmem:[%s15 + $0x1d0] sm:$0xf]
    %v2627 = vld [vmem:[%s15 + $0x1d4] sm:$0xf]
    %v2628 = vld [vmem:[%s15 + $0x1d8] sm:$0xf]
    %v2629 = vld [vmem:[%s15 + $0x1dc] sm:$0xf]
    %v2630 = vld [vmem:[%s15 + $0x1e0] sm:$0xf]
    %v2631 = vld [vmem:[%s15 + $0x1e4] sm:$0xf]
    %v2632 = vld [vmem:[%s15 + $0x1e8] sm:$0xf]
    %v2633 = vld [vmem:[%s15 + $0x1ec] sm:$0xf]
    %v2634 = vld [vmem:[%s15 + $0x1f0] sm:$0xf]
    %v2635 = vld [vmem:[%s15 + $0x1f4] sm:$0xf]
    %v2636 = vld [vmem:[%s15 + $0x1f8] sm:$0xf]
    %v2637 = vld [vmem:[%s15 + $0x1fc] sm:$0xf]
    %v2638 = vld [vmem:[%s16] sm:$0x1]
    %v2640 = vlaneseq
    %v2641 = vshrl.u32 %v2640, 7
    %v2642 = vsub.s32 0, %v2641
    %v2643 = vrot.slane %v2638, %v2642
    %v2661 = vunpack.c.l.b16 %v2494
    %v2662 = vunpack.c.l.b16 %v2495
    %v2663 = vunpack.c.l.b16 %v2496
    %v2664 = vunpack.c.l.b16 %v2497
    %v2665 = vunpack.c.l.b16 %v2498
    %v2666 = vunpack.c.l.b16 %v2499
    %v2667 = vunpack.c.l.b16 %v2500
    %v2668 = vunpack.c.l.b16 %v2501
    %v2669 = vunpack.c.l.b16 %v2502
    %v2670 = vunpack.c.l.b16 %v2503
    %v2671 = vunpack.c.l.b16 %v2504
    %v2672 = vunpack.c.l.b16 %v2505
    %v2673 = vunpack.c.l.b16 %v2506
    %v2674 = vunpack.c.l.b16 %v2507
    %v2675 = vunpack.c.l.b16 %v2508
    %v2676 = vunpack.c.l.b16 %v2509
    %vm2677 = vcmask 1041409
    %v2678 = vsel %vm2677, %v2669, %v2661
    %v2679 = vsel %vm2677, %v2670, %v2662
    %v2680 = vsel %vm2677, %v2671, %v2663
    %v2681 = vsel %vm2677, %v2672, %v2664
    %v2682 = vsel %vm2677, %v2673, %v2665
    %v2683 = vsel %vm2677, %v2674, %v2666
    %v2684 = vsel %vm2677, %v2675, %v2667
    %v2685 = vsel %vm2677, %v2676, %v2668
    %v2686 = vpack.c.b16 %v2678, %v2678
    %v2687 = vpack.c.b16 %v2679, %v2679
    %v2688 = vpack.c.b16 %v2680, %v2680
    %v2689 = vpack.c.b16 %v2681, %v2681
    %v2690 = vpack.c.b16 %v2682, %v2682
    %v2691 = vpack.c.b16 %v2683, %v2683
    %v2692 = vpack.c.b16 %v2684, %v2684
    %v2693 = vpack.c.b16 %v2685, %v2685
    %v2830 = vunpack.c.l.b16 %v2510
    %v2831 = vunpack.c.l.b16 %v2511
    %v2832 = vunpack.c.l.b16 %v2512
    %v2833 = vunpack.c.l.b16 %v2513
    %v2834 = vunpack.c.l.b16 %v2514
    %v2835 = vunpack.c.l.b16 %v2515
    %v2836 = vunpack.c.l.b16 %v2516
    %v2837 = vunpack.c.l.b16 %v2517
    %v2838 = vunpack.c.l.b16 %v2518
    %v2839 = vunpack.c.l.b16 %v2519
    %v2840 = vunpack.c.l.b16 %v2520
    %v2841 = vunpack.c.l.b16 %v2521
    %v2842 = vunpack.c.l.b16 %v2522
    %v2843 = vunpack.c.l.b16 %v2523
    %v2844 = vunpack.c.l.b16 %v2524
    %v2845 = vunpack.c.l.b16 %v2525
    %v2846 = vunpack.c.l.b16 %v2526
    %v2847 = vunpack.c.l.b16 %v2527
    %v2848 = vunpack.c.l.b16 %v2528
    %v2849 = vunpack.c.l.b16 %v2529
    %v2850 = vunpack.c.l.b16 %v2530
    %v2851 = vunpack.c.l.b16 %v2531
    %v2852 = vunpack.c.l.b16 %v2532
    %v2853 = vunpack.c.l.b16 %v2533
    %v2854 = vunpack.c.l.b16 %v2534
    %v2855 = vunpack.c.l.b16 %v2535
    %v2856 = vunpack.c.l.b16 %v2536
    %v2857 = vunpack.c.l.b16 %v2537
    %v2858 = vunpack.c.l.b16 %v2538
    %v2859 = vunpack.c.l.b16 %v2539
    %v2860 = vunpack.c.l.b16 %v2540
    %v2861 = vunpack.c.l.b16 %v2541
    %v2862 = vunpack.c.l.b16 %v2542
    %v2863 = vunpack.c.l.b16 %v2543
    %v2864 = vunpack.c.l.b16 %v2544
    %v2865 = vunpack.c.l.b16 %v2545
    %v2866 = vunpack.c.l.b16 %v2546
    %v2867 = vunpack.c.l.b16 %v2547
    %v2868 = vunpack.c.l.b16 %v2548
    %v2869 = vunpack.c.l.b16 %v2549
    %v2870 = vunpack.c.l.b16 %v2550
    %v2871 = vunpack.c.l.b16 %v2551
    %v2872 = vunpack.c.l.b16 %v2552
    %v2873 = vunpack.c.l.b16 %v2553
    %v2874 = vunpack.c.l.b16 %v2554
    %v2875 = vunpack.c.l.b16 %v2555
    %v2876 = vunpack.c.l.b16 %v2556
    %v2877 = vunpack.c.l.b16 %v2557
    %v2878 = vunpack.c.l.b16 %v2558
    %v2879 = vunpack.c.l.b16 %v2559
    %v2880 = vunpack.c.l.b16 %v2560
    %v2881 = vunpack.c.l.b16 %v2561
    %v2882 = vunpack.c.l.b16 %v2562
    %v2883 = vunpack.c.l.b16 %v2563
    %v2884 = vunpack.c.l.b16 %v2564
    %v2885 = vunpack.c.l.b16 %v2565
    %v2886 = vunpack.c.l.b16 %v2566
    %v2887 = vunpack.c.l.b16 %v2567
    %v2888 = vunpack.c.l.b16 %v2568
    %v2889 = vunpack.c.l.b16 %v2569
    %v2890 = vunpack.c.l.b16 %v2570
    %v2891 = vunpack.c.l.b16 %v2571
    %v2892 = vunpack.c.l.b16 %v2572
    %v2893 = vunpack.c.l.b16 %v2573
    %v2894 = vunpack.c.l.b16 %v2574
    %v2895 = vunpack.c.l.b16 %v2575
    %v2896 = vunpack.c.l.b16 %v2576
    %v2897 = vunpack.c.l.b16 %v2577
    %v2898 = vunpack.c.l.b16 %v2578
    %v2899 = vunpack.c.l.b16 %v2579
    %v2900 = vunpack.c.l.b16 %v2580
    %v2901 = vunpack.c.l.b16 %v2581
    %v2902 = vunpack.c.l.b16 %v2582
    %v2903 = vunpack.c.l.b16 %v2583
    %v2904 = vunpack.c.l.b16 %v2584
    %v2905 = vunpack.c.l.b16 %v2585
    %v2906 = vunpack.c.l.b16 %v2586
    %v2907 = vunpack.c.l.b16 %v2587
    %v2908 = vunpack.c.l.b16 %v2588
    %v2909 = vunpack.c.l.b16 %v2589
    %v2910 = vunpack.c.l.b16 %v2590
    %v2911 = vunpack.c.l.b16 %v2591
    %v2912 = vunpack.c.l.b16 %v2592
    %v2913 = vunpack.c.l.b16 %v2593
    %v2914 = vunpack.c.l.b16 %v2594
    %v2915 = vunpack.c.l.b16 %v2595
    %v2916 = vunpack.c.l.b16 %v2596
    %v2917 = vunpack.c.l.b16 %v2597
    %v2918 = vunpack.c.l.b16 %v2598
    %v2919 = vunpack.c.l.b16 %v2599
    %v2920 = vunpack.c.l.b16 %v2600
    %v2921 = vunpack.c.l.b16 %v2601
    %v2922 = vunpack.c.l.b16 %v2602
    %v2923 = vunpack.c.l.b16 %v2603
    %v2924 = vunpack.c.l.b16 %v2604
    %v2925 = vunpack.c.l.b16 %v2605
    %v2926 = vunpack.c.l.b16 %v2606
    %v2927 = vunpack.c.l.b16 %v2607
    %v2928 = vunpack.c.l.b16 %v2608
    %v2929 = vunpack.c.l.b16 %v2609
    %v2930 = vunpack.c.l.b16 %v2610
    %v2931 = vunpack.c.l.b16 %v2611
    %v2932 = vunpack.c.l.b16 %v2612
    %v2933 = vunpack.c.l.b16 %v2613
    %v2934 = vunpack.c.l.b16 %v2614
    %v2935 = vunpack.c.l.b16 %v2615
    %v2936 = vunpack.c.l.b16 %v2616
    %v2937 = vunpack.c.l.b16 %v2617
    %v2938 = vunpack.c.l.b16 %v2618
    %v2939 = vunpack.c.l.b16 %v2619
    %v2940 = vunpack.c.l.b16 %v2620
    %v2941 = vunpack.c.l.b16 %v2621
    %v2942 = vunpack.c.l.b16 %v2622
    %v2943 = vunpack.c.l.b16 %v2623
    %v2944 = vunpack.c.l.b16 %v2624
    %v2945 = vunpack.c.l.b16 %v2625
    %v2946 = vunpack.c.l.b16 %v2626
    %v2947 = vunpack.c.l.b16 %v2627
    %v2948 = vunpack.c.l.b16 %v2628
    %v2949 = vunpack.c.l.b16 %v2629
    %v2950 = vunpack.c.l.b16 %v2630
    %v2951 = vunpack.c.l.b16 %v2631
    %v2952 = vunpack.c.l.b16 %v2632
    %v2953 = vunpack.c.l.b16 %v2633
    %v2954 = vunpack.c.l.b16 %v2634
    %v2955 = vunpack.c.l.b16 %v2635
    %v2956 = vunpack.c.l.b16 %v2636
    %v2957 = vunpack.c.l.b16 %v2637
    %v2958 = vpack.c.b16 %v2831, %v2830
    %v2959 = vpack.c.b16 %v2833, %v2832
    %v2960 = vpack.c.b16 %v2835, %v2834
    %v2961 = vpack.c.b16 %v2837, %v2836
    %v2962 = vpack.c.b16 %v2839, %v2838
    %v2963 = vpack.c.b16 %v2841, %v2840
    %v2964 = vpack.c.b16 %v2843, %v2842
    %v2965 = vpack.c.b16 %v2845, %v2844
    %v2966 = vpack.c.b16 %v2847, %v2846
    %v2967 = vpack.c.b16 %v2849, %v2848
    %v2968 = vpack.c.b16 %v2851, %v2850
    %v2969 = vpack.c.b16 %v2853, %v2852
    %v2970 = vpack.c.b16 %v2855, %v2854
    %v2971 = vpack.c.b16 %v2857, %v2856
    %v2972 = vpack.c.b16 %v2859, %v2858
    %v2973 = vpack.c.b16 %v2861, %v2860
    %v2974 = vpack.c.b16 %v2863, %v2862
    %v2975 = vpack.c.b16 %v2865, %v2864
    %v2976 = vpack.c.b16 %v2867, %v2866
    %v2977 = vpack.c.b16 %v2869, %v2868
    %v2978 = vpack.c.b16 %v2871, %v2870
    %v2979 = vpack.c.b16 %v2873, %v2872
    %v2980 = vpack.c.b16 %v2875, %v2874
    %v2981 = vpack.c.b16 %v2877, %v2876
    %v2982 = vpack.c.b16 %v2879, %v2878
    %v2983 = vpack.c.b16 %v2881, %v2880
    %v2984 = vpack.c.b16 %v2883, %v2882
    %v2985 = vpack.c.b16 %v2885, %v2884
    %v2986 = vpack.c.b16 %v2887, %v2886
    %v2987 = vpack.c.b16 %v2889, %v2888
    %v2988 = vpack.c.b16 %v2891, %v2890
    %v2989 = vpack.c.b16 %v2893, %v2892
    %v2990 = vpack.c.b16 %v2895, %v2894
    %v2991 = vpack.c.b16 %v2897, %v2896
    %v2992 = vpack.c.b16 %v2899, %v2898
    %v2993 = vpack.c.b16 %v2901, %v2900
    %v2994 = vpack.c.b16 %v2903, %v2902
    %v2995 = vpack.c.b16 %v2905, %v2904
    %v2996 = vpack.c.b16 %v2907, %v2906
    %v2997 = vpack.c.b16 %v2909, %v2908
    %v2998 = vpack.c.b16 %v2911, %v2910
    %v2999 = vpack.c.b16 %v2913, %v2912
    %v3000 = vpack.c.b16 %v2915, %v2914
    %v3001 = vpack.c.b16 %v2917, %v2916
    %v3002 = vpack.c.b16 %v2919, %v2918
    %v3003 = vpack.c.b16 %v2921, %v2920
    %v3004 = vpack.c.b16 %v2923, %v2922
    %v3005 = vpack.c.b16 %v2925, %v2924
    %v3006 = vpack.c.b16 %v2927, %v2926
    %v3007 = vpack.c.b16 %v2929, %v2928
    %v3008 = vpack.c.b16 %v2931, %v2930
    %v3009 = vpack.c.b16 %v2933, %v2932
    %v3010 = vpack.c.b16 %v2935, %v2934
    %v3011 = vpack.c.b16 %v2937, %v2936
    %v3012 = vpack.c.b16 %v2939, %v2938
    %v3013 = vpack.c.b16 %v2941, %v2940
    %v3014 = vpack.c.b16 %v2943, %v2942
    %v3015 = vpack.c.b16 %v2945, %v2944
    %v3016 = vpack.c.b16 %v2947, %v2946
    %v3017 = vpack.c.b16 %v2949, %v2948
    %v3018 = vpack.c.b16 %v2951, %v2950
    %v3019 = vpack.c.b16 %v2953, %v2952
    %v3020 = vpack.c.b16 %v2955, %v2954
    %v3021 = vpack.c.b16 %v2957, %v2956
    %3086 = vmatprep.subr.bf16.mxu0 0
    %3087 = vmatpush1.bf16.msra.mxu0 %v2958
    %3088 = vmatprep.subr.bf16.mxu0 0
    %3089 = vmatpush1.bf16.msra.mxu0 %v2959
    %3090 = vmatprep.subr.bf16.mxu0 0
    %3091 = vmatpush1.bf16.msra.mxu0 %v2960
    %3092 = vmatprep.subr.bf16.mxu0 0
    %3093 = vmatpush1.bf16.msra.mxu0 %v2961
    %3094 = vmatprep.subr.bf16.mxu0 0
    %3095 = vmatpush1.bf16.msra.mxu0 %v2962
    %3096 = vmatprep.subr.bf16.mxu0 0
    %3097 = vmatpush1.bf16.msra.mxu0 %v2963
    %3098 = vmatprep.subr.bf16.mxu0 0
    %3099 = vmatpush1.bf16.msra.mxu0 %v2964
    %3100 = vmatprep.subr.bf16.mxu0 0
    %3101 = vmatpush1.bf16.msra.mxu0 %v2965
    %3102 = vmatprep.subr.bf16.mxu0 0
    %3103 = vmatpush1.bf16.msra.mxu0 %v2966
    %3104 = vmatprep.subr.bf16.mxu0 0
    %3105 = vmatpush1.bf16.msra.mxu0 %v2967
    %3106 = vmatprep.subr.bf16.mxu0 0
    %3107 = vmatpush1.bf16.msra.mxu0 %v2968
    %3108 = vmatprep.subr.bf16.mxu0 0
    %3109 = vmatpush1.bf16.msra.mxu0 %v2969
    %3110 = vmatprep.subr.bf16.mxu0 0
    %3111 = vmatpush1.bf16.msra.mxu0 %v2970
    %3112 = vmatprep.subr.bf16.mxu0 0
    %3113 = vmatpush1.bf16.msra.mxu0 %v2971
    %3114 = vmatprep.subr.bf16.mxu0 0
    %3115 = vmatpush1.bf16.msra.mxu0 %v2972
    %3116 = vmatprep.subr.bf16.mxu0 0
    %3117 = vmatpush1.bf16.msra.mxu0 %v2973
    %3118 = vmatprep.mubr.bf16.mxu0 %v2687
    %3119 = vmatmul.mubr.bf16.gmra.mrb[0].mxu0 %v2686
    %v3120 = vpop.f32.mrb[0].mxu0
    %v3121 = vadd.f32 %v2643, %v3120
    %v3122 = vpop.f32.mrb[0].mxu0
    %v3123 = vpop.f32.mrb[0].mxu0
    %v3124 = vpop.f32.mrb[0].mxu0
    %3125 = vdwg.mxu0
    %3126 = vmatprep.subr.bf16.mxu0 0
    %3127 = vmatpush1.bf16.msra.mxu0 %v2974
    %3128 = vmatprep.subr.bf16.mxu0 0
    %3129 = vmatpush1.bf16.msra.mxu0 %v2975
    %3130 = vmatprep.subr.bf16.mxu0 0
    %3131 = vmatpush1.bf16.msra.mxu0 %v2976
    %3132 = vmatprep.subr.bf16.mxu0 0
    %3133 = vmatpush1.bf16.msra.mxu0 %v2977
    %3134 = vmatprep.subr.bf16.mxu0 0
    %3135 = vmatpush1.bf16.msra.mxu0 %v2978
    %3136 = vmatprep.subr.bf16.mxu0 0
    %3137 = vmatpush1.bf16.msra.mxu0 %v2979
    %3138 = vmatprep.subr.bf16.mxu0 0
    %3139 = vmatpush1.bf16.msra.mxu0 %v2980
    %3140 = vmatprep.subr.bf16.mxu0 0
    %3141 = vmatpush1.bf16.msra.mxu0 %v2981
    %3142 = vmatprep.subr.bf16.mxu0 0
    %3143 = vmatpush1.bf16.msra.mxu0 %v2982
    %3144 = vmatprep.subr.bf16.mxu0 0
    %3145 = vmatpush1.bf16.msra.mxu0 %v2983
    %3146 = vmatprep.subr.bf16.mxu0 0
    %3147 = vmatpush1.bf16.msra.mxu0 %v2984
    %3148 = vmatprep.subr.bf16.mxu0 0
    %3149 = vmatpush1.bf16.msra.mxu0 %v2985
    %3150 = vmatprep.subr.bf16.mxu0 0
    %3151 = vmatpush1.bf16.msra.mxu0 %v2986
    %3152 = vmatprep.subr.bf16.mxu0 0
    %3153 = vmatpush1.bf16.msra.mxu0 %v2987
    %3154 = vmatprep.subr.bf16.mxu0 0
    %3155 = vmatpush1.bf16.msra.mxu0 %v2988
    %3156 = vmatprep.subr.bf16.mxu0 0
    %3157 = vmatpush1.bf16.msra.mxu0 %v2989
    %3158 = vmatprep.mubr.bf16.mxu0 %v2689
    %3159 = vmatmul.mubr.bf16.gmra.mrb[0].mxu0 %v2688
    %v3160 = vpop.f32.mrb[0].mxu0
    %v3161 = vadd.f32 %v3121, %v3160
    %v3162 = vpop.f32.mrb[0].mxu0
    %v3163 = vpop.f32.mrb[0].mxu0
    %v3164 = vpop.f32.mrb[0].mxu0
    %3165 = vdwg.mxu0
    %3166 = vmatprep.subr.bf16.mxu0 0
    %3167 = vmatpush1.bf16.msra.mxu0 %v2990
    %3168 = vmatprep.subr.bf16.mxu0 0
    %3169 = vmatpush1.bf16.msra.mxu0 %v2991
    %3170 = vmatprep.subr.bf16.mxu0 0
    %3171 = vmatpush1.bf16.msra.mxu0 %v2992
    %3172 = vmatprep.subr.bf16.mxu0 0
    %3173 = vmatpush1.bf16.msra.mxu0 %v2993
    %3174 = vmatprep.subr.bf16.mxu0 0
    %3175 = vmatpush1.bf16.msra.mxu0 %v2994
    %3176 = vmatprep.subr.bf16.mxu0 0
    %3177 = vmatpush1.bf16.msra.mxu0 %v2995
    %3178 = vmatprep.subr.bf16.mxu0 0
    %3179 = vmatpush1.bf16.msra.mxu0 %v2996
    %3180 = vmatprep.subr.bf16.mxu0 0
    %3181 = vmatpush1.bf16.msra.mxu0 %v2997
    %3182 = vmatprep.subr.bf16.mxu0 0
    %3183 = vmatpush1.bf16.msra.mxu0 %v2998
    %3184 = vmatprep.subr.bf16.mxu0 0
    %3185 = vmatpush1.bf16.msra.mxu0 %v2999
    %3186 = vmatprep.subr.bf16.mxu0 0
    %3187 = vmatpush1.bf16.msra.mxu0 %v3000
    %3188 = vmatprep.subr.bf16.mxu0 0
    %3189 = vmatpush1.bf16.msra.mxu0 %v3001
    %3190 = vmatprep.subr.bf16.mxu0 0
    %3191 = vmatpush1.bf16.msra.mxu0 %v3002
    %3192 = vmatprep.subr.bf16.mxu0 0
    %3193 = vmatpush1.bf16.msra.mxu0 %v3003
    %3194 = vmatprep.subr.bf16.mxu0 0
    %3195 = vmatpush1.bf16.msra.mxu0 %v3004
    %3196 = vmatprep.subr.bf16.mxu0 0
    %3197 = vmatpush1.bf16.msra.mxu0 %v3005
    %3198 = vmatprep.mubr.bf16.mxu0 %v2691
    %3199 = vmatmul.mubr.bf16.gmra.mrb[0].mxu0 %v2690
    %v3200 = vpop.f32.mrb[0].mxu0
    %v3201 = vadd.f32 %v3161, %v3200
    %v3202 = vpop.f32.mrb[0].mxu0
    %v3203 = vpop.f32.mrb[0].mxu0
    %v3204 = vpop.f32.mrb[0].mxu0
    %3205 = vdwg.mxu0
    %3206 = vmatprep.subr.bf16.mxu0 0
    %3207 = vmatpush1.bf16.msra.mxu0 %v3006
    %3208 = vmatprep.subr.bf16.mxu0 0
    %3209 = vmatpush1.bf16.msra.mxu0 %v3007
    %3210 = vmatprep.subr.bf16.mxu0 0
    %3211 = vmatpush1.bf16.msra.mxu0 %v3008
    %3212 = vmatprep.subr.bf16.mxu0 0
    %3213 = vmatpush1.bf16.msra.mxu0 %v3009
    %3214 = vmatprep.subr.bf16.mxu0 0
    %3215 = vmatpush1.bf16.msra.mxu0 %v3010
    %3216 = vmatprep.subr.bf16.mxu0 0
    %3217 = vmatpush1.bf16.msra.mxu0 %v3011
    %3218 = vmatprep.subr.bf16.mxu0 0
    %3219 = vmatpush1.bf16.msra.mxu0 %v3012
    %3220 = vmatprep.subr.bf16.mxu0 0
    %3221 = vmatpush1.bf16.msra.mxu0 %v3013
    %3222 = vmatprep.subr.bf16.mxu0 0
    %3223 = vmatpush1.bf16.msra.mxu0 %v3014
    %3224 = vmatprep.subr.bf16.mxu0 0
    %3225 = vmatpush1.bf16.msra.mxu0 %v3015
    %3226 = vmatprep.subr.bf16.mxu0 0
    %3227 = vmatpush1.bf16.msra.mxu0 %v3016
    %3228 = vmatprep.subr.bf16.mxu0 0
    %3229 = vmatpush1.bf16.msra.mxu0 %v3017
    %3230 = vmatprep.subr.bf16.mxu0 0
    %3231 = vmatpush1.bf16.msra.mxu0 %v3018
    %3232 = vmatprep.subr.bf16.mxu0 0
    %3233 = vmatpush1.bf16.msra.mxu0 %v3019
    %3234 = vmatprep.subr.bf16.mxu0 0
    %3235 = vmatpush1.bf16.msra.mxu0 %v3020
    %3236 = vmatprep.subr.bf16.mxu0 0
    %3237 = vmatpush1.bf16.msra.mxu0 %v3021
    %3238 = vmatprep.mubr.bf16.mxu0 %v2693
    %3239 = vmatmul.mubr.bf16.gmra.mrb[0].mxu0 %v2692
    %v3240 = vpop.f32.mrb[0].mxu0
    %v3241 = vadd.f32 %v3201, %v3240
    %v3242 = vpop.f32.mrb[0].mxu0
    %v3243 = vpop.f32.mrb[0].mxu0
    %v3244 = vpop.f32.mrb[0].mxu0
    %3245 = vdwg.mxu0
    %v3248 = vunpack.c.l.s4 1966171168
    %v3249 = vunpack.c.0.s8 %v3248
    %v3250 = vlaneseq
    %v3251 = vshrl.u32 %v3250, 7
    %v3252 = vsub.s32 %v3249, %v3251
    %v3253 = vrot.slane %v3241, %v3252
    %v3254 = vcombine.high %v3253, %v3253
    %v3256 = vunpack.c.l.s4 1966171168
    %v3257 = vunpack.c.0.s8 %v3256
    %v3258 = vlaneseq
    %v3259 = vshrl.u32 %v3258, 7
    %v3260 = vsub.s32 %v3257, %v3259
    %v3261 = vrot.slane %v3253, %v3260
    %v3263 = vunpack.c.l.s4 1966171168
    %v3264 = vunpack.c.0.s8 %v3263
    %v3265 = vlaneseq
    %v3266 = vshrl.u32 %v3265, 7
    %v3267 = vsub.s32 %v3264, %v3266
    %v3268 = vrot.slane %v3254, %v3267
    %3271 = vst [vmem:[#allocation3] sm:$0x1] %v3261
    %3272 = vst [vmem:[#allocation3 + $0x1] sm:$0x1] %v3268
    // Predicated region
    $region70: #{mobilenet_forward.1} parent=1 // pred_check
      _
    $region71: #{mobilenet_forward.1} parent=1 // pred_check_branch
      %3274 = sbr.rel (0) target = $region73
    $region72: #{mobilenet_forward.1} parent=1 // pred_region
      %s3276 = ssub.s32 32, 32
      %3277 = vsyncadd [#allocation4], %s3276
      %s3278 = sshll.u32 [#allocation3], 4
      %s3279 = int_to_ptr.vmem [resolvable:$true] %s3278
      %3284 = dma.vmem_to_hbm [thread:$0]  %s3279, 32, %s17, [#allocation4], 16, 16, 1
    $region73: #{mobilenet_forward.1} parent=1 // pred_fallthru
      _
    // Predicated region
    $region74: #{mobilenet_forward.1} parent=1 // pred_check
      _
    $region75: #{mobilenet_forward.1} parent=1 // pred_check_branch
      %3286 = sbr.rel (0) target = $region77
    $region76: #{mobilenet_forward.1} parent=1 // pred_region
      %3287 = dma.done [#allocation4], 32
    $region77: #{mobilenet_forward.1} parent=1 // pred_fallthru
      _
    %3288 = vsyncpa [#allocation4], 1

</llo_original>
